<compile_context>
chip_gen: v7x
topology: tpu7x:2x2x1
jax: 0.10.0
libtpu: 0.0.40
codegen_flags: <defaults>
</compile_context>

<pallas_src>
import jax
import jax.numpy as jnp
import numpy as np
from jax import lax
from jax.experimental import pallas as pl
from jax.experimental.pallas import tpu as pltpu

_LANE = 128      # f32 lane tile
_SUBLANE = 8     # f32 sublane tile


def _round_up(x, m):
    return (x + m - 1) // m * m


# ----------------------------- Pallas kernel ------------------------------- #

def _make_fused_kernel(n_layers, T, Bp, H, Gp):
    """Fused forward: embedding gather + n_layers LSTM layers + FC.

    Ref order: idx (T*Bp,) SMEM, emb0 (Vr,Gp) [W_ih0^T rows + bias folded],
    then for l=1..L-1: [W_ih_l^T (H,Gp) bf16, b_l (1,Gp)], then
    W_hh_l^T (H,Gp) bf16 for l=0..L-1, then W_fc^T (H,Vp) bf16, b_fc (1,Vp),
    h0 (L,Bp,H), c0 (L,Bp,H).  Outputs: logits (T,Bp,Vp), h_n, c_n.
    Scratch: gx (T*Bp,Gp) x-projection buffer (overwritten layer by layer).
    Gate k (PyTorch order i,f,g,o) occupies packed columns [k*H, (k+1)*H).
    """

    def kernel(*refs):
        idx_ref = refs[0]                       # (T*Bp,) int32  SMEM
        emb0_ref = refs[1]                      # (Vr, Gp) f32
        p = 2
        wih_refs, b_refs = [], []
        for _ in range(n_layers - 1):
            wih_refs.append(refs[p]); b_refs.append(refs[p + 1]); p += 2
        whh_refs = list(refs[p:p + n_layers]); p += n_layers
        wfc_ref, bfc_ref, h0_ref, c0_ref = refs[p:p + 4]; p += 4
        out_ref, hN_ref, cN_ref, gx_sc = refs[p:p + 4]

        # ---- layer-0 input projection: one-hot matmul == row gather -------- #
        for t in range(T):
            for b in range(Bp):
                r = t * Bp + b
                gx_sc[pl.ds(r, 1), :] = emb0_ref[pl.ds(idx_ref[r], 1), :]

        # ---- recurrent layers, next consumer's matmul fused per step ------- #
        for l in range(n_layers):
            h = h0_ref[l]                                       # (Bp, H) f32
            c = c0_ref[l]
            # TODO(synk): switch to lax.fori_loop(..., unroll=4/8) if T grows.
            for t in range(T):                                  # static unroll
                g = gx_sc[pl.ds(t * Bp, Bp), :] + jnp.dot(
                    h.astype(jnp.bfloat16), whh_refs[l][...],
                    preferred_element_type=jnp.float32)         # (Bp, Gp)
                sig = jax.nn.sigmoid(g)        # one full-vreg EUP pass (i,f,o)
                th = jnp.tanh(g)               # one full-vreg EUP pass (g)
                i_g = sig[:, 0 * H:1 * H]
                f_g = sig[:, 1 * H:2 * H]
                g_g = th[:, 2 * H:3 * H]
                o_g = sig[:, 3 * H:4 * H]
                c = f_g * c + i_g * g_g
                h = o_g * jnp.tanh(c)
                hb = h.astype(jnp.bfloat16)
                if l + 1 < n_layers:
                    # inter-layer dropout: identity (inference mode)
                    gx_sc[pl.ds(t * Bp, Bp), :] = (
                        jnp.dot(hb, wih_refs[l][...],
                                preferred_element_type=jnp.float32)
                        + b_refs[l][...])
                else:
                    out_ref[t] = (jnp.dot(hb, wfc_ref[...],
                                          preferred_element_type=jnp.float32)
                                  + bfc_ref[...]).astype(out_ref.dtype)
            hN_ref[l] = h
            cN_ref[l] = c

    return kernel


# --------------------------- Param preprocessing ---------------------------- #

def prepare_params(params, vocab, n_hidden, n_layers):
    """Pre-transpose, fold biases, pack gates, cast matmul weights to bf16.

    Layer 0 becomes a gather table: row v = W_ih0^T[v] + (b_ih0 + b_hh0).
    Padded gate columns [4H, Gp) and padded vocab rows/cols are exactly zero
    (asserted) so unused lanes stay inert.
    """
    H = n_hidden
    G = 4 * H
    Gp = _round_up(G, _LANE)
    Vp = _round_up(vocab, _LANE)
    Vr = _round_up(vocab, _SUBLANE)

    w0t = np.asarray(params["w_ih_l0"], np.float32).T            # (V, 4H)
    b0 = (np.asarray(params["b_ih_l0"], np.float32)
          + np.asarray(params["b_hh_l0"], np.float32))           # (4H,)
    emb0 = np.zeros((Vr, Gp), np.float32)
    emb0[:vocab, :G] = w0t + b0[None, :]

    whh, wih, bias = [], [], []
    for l in range(n_layers):
        whh_p = np.zeros((H, Gp), np.float32)
        whh_p[:, :G] = np.asarray(params[f"w_hh_l{l}"], np.float32).T
        assert not whh_p[:, G:].any()
        whh.append(jnp.asarray(whh_p, jnp.bfloat16))
        if l >= 1:
            wih_p = np.zeros((H, Gp), np.float32)
            wih_p[:, :G] = np.asarray(params[f"w_ih_l{l}"], np.float32).T
            b_p = np.zeros((1, Gp), np.float32)
            b_p[0, :G] = (np.asarray(params[f"b_ih_l{l}"], np.float32)
                          + np.asarray(params[f"b_hh_l{l}"], np.float32))
            assert not wih_p[:, G:].any() and not b_p[:, G:].any()
            wih.append(jnp.asarray(wih_p, jnp.bfloat16))
            bias.append(jnp.asarray(b_p))

    wfc_p = np.zeros((H, Vp), np.float32)
    wfc_p[:H, :vocab] = np.asarray(params["w_fc"], np.float32).T
    bfc_p = np.zeros((1, Vp), np.float32)
    bfc_p[0, :vocab] = np.asarray(params["b_fc"], np.float32)
    assert not emb0[vocab:, :].any() and not wfc_p[:, vocab:].any()

    return {"emb0": jnp.asarray(emb0),
            "wih": wih, "bias": bias, "whh": whh,
            "w_fc": jnp.asarray(wfc_p, jnp.bfloat16),
            "b_fc": jnp.asarray(bfc_p)}


# ------------------------------- Forward ------------------------------------ #

@jax.jit
def text_rnn_forward(prep, x, hidden):
    """Pallas implementation of TextRnn.forward (inference mode).

    x:      (B, T, V) one-hot, batch-first  (CharRNN encoding)
    hidden: (h0, c0), each (n_layers, B, H)
    returns (out (B*T, V), (h_n, c_n))
    """
    h0, c0 = hidden
    n_layers, B, H = h0.shape
    _, T, V = x.shape
    Gp = prep["whh"][0].shape[1]
    Vp = prep["w_fc"].shape[1]
    Bp = _round_up(max(B, _SUBLANE), _SUBLANE)   # keep Bp a multiple of 8

    # Recover token ids from the one-hot input (the one-hot matmul == gather).
    idx = jnp.argmax(x, axis=-1).astype(jnp.int32)          # (B, T)
    idx_flat = jnp.pad(jnp.transpose(idx, (1, 0)),
                       ((0, 0), (0, Bp - B))).reshape(T * Bp)
    h0_pad = jnp.pad(h0, ((0, 0), (0, Bp - B), (0, 0)))
    c0_pad = jnp.pad(c0, ((0, 0), (0, Bp - B), (0, 0)))

    args = [idx_flat, prep["emb0"]]
    for l in range(n_layers - 1):
        args += [prep["wih"][l], prep["bias"][l]]
    args += list(prep["whh"])
    args += [prep["w_fc"], prep["b_fc"], h0_pad, c0_pad]

    vmem = pl.BlockSpec(memory_space=pltpu.MemorySpace.VMEM)
    smem = pl.BlockSpec(memory_space=pltpu.MemorySpace.SMEM)
    out_pad, hN, cN = pl.pallas_call(
        _make_fused_kernel(n_layers, T, Bp, H, Gp),
        out_shape=(
            jax.ShapeDtypeStruct((T, Bp, Vp), jnp.float32),
            jax.ShapeDtypeStruct((n_layers, Bp, H), jnp.float32),
            jax.ShapeDtypeStruct((n_layers, Bp, H), jnp.float32),
        ),
        in_specs=[smem] + [vmem] * (len(args) - 1),
        out_specs=(vmem, vmem, vmem),
        scratch_shapes=[pltpu.VMEM((T * Bp, Gp), jnp.float32)],
        compiler_params=pltpu.CompilerParams(vmem_limit_bytes=16 * 1024 * 1024),
    )(*args)

    # (T, B, V) -> (B, T, V) -> (B*T, V), matching .contiguous().view(-1, H)@fc
    out = jnp.transpose(out_pad[:, :B, :V], (1, 0, 2)).reshape(B * T, V)
    return out, (hN[:, :B, :], cN[:, :B, :])


# --------------------------- Pure-JAX reference ----------------------------- #

def _ref_forward(params, x, hidden, n_layers, n_hidden):
    h0, c0 = hidden
    inp = jnp.transpose(x, (1, 0, 2))               # (T, B, In)
    h_ns, c_ns = [], []
    for layer in range(n_layers):
        w_ih = params[f"w_ih_l{layer}"]
        w_hh = params[f"w_hh_l{layer}"]
        b = params[f"b_ih_l{layer}"] + params[f"b_hh_l{layer}"]
        H = n_hidden

        def cell(carry, x_t):
            h, c = carry
            gates = x_t @ w_ih.T + h @ w_hh.T + b
            i = jax.nn.sigmoid(gates[:, 0 * H:1 * H])
            f = jax.nn.sigmoid(gates[:, 1 * H:2 * H])
            g = jnp.tanh(gates[:, 2 * H:3 * H])
            o = jax.nn.sigmoid(gates[:, 3 * H:4 * H])
            c_new = f * c + i * g
            h_new = o * jnp.tanh(c_new)
            return (h_new, c_new), h_new

        (hT, cT), ys = lax.scan(cell, (h0[layer], c0[layer]), inp)
        inp = ys
        h_ns.append(hT)
        c_ns.append(cT)
    r_output = jnp.transpose(inp, (1, 0, 2)).reshape(-1, n_hidden)
    out = r_output @ params["w_fc"].T + params["b_fc"]
    return out, (jnp.stack(h_ns), jnp.stack(c_ns))


# --------------------------------- Main ------------------------------------- #

def _init_params(key, vocab, n_hidden, n_layers):
    """PyTorch-style uniform(-1/sqrt(H), 1/sqrt(H)) init, deterministic."""
    bound = 1.0 / np.sqrt(n_hidden)
    params = {}
    for layer in range(n_layers):
        in_dim = vocab if layer == 0 else n_hidden
        key, k1, k2, k3, k4 = jax.random.split(key, 5)
        params[f"w_ih_l{layer}"] = jax.random.uniform(
            k1, (4 * n_hidden, in_dim), jnp.float32, -bound, bound)
        params[f"w_hh_l{layer}"] = jax.random.uniform(
            k2, (4 * n_hidden, n_hidden), jnp.float32, -bound, bound)
        params[f"b_ih_l{layer}"] = jax.random.uniform(
            k3, (4 * n_hidden,), jnp.float32, -bound, bound)
        params[f"b_hh_l{layer}"] = jax.random.uniform(
            k4, (4 * n_hidden,), jnp.float32, -bound, bound)
    key, k1, k2 = jax.random.split(key, 3)
    params["w_fc"] = jax.random.uniform(
        k1, (vocab, n_hidden), jnp.float32, -bound, bound)
    params["b_fc"] = jax.random.uniform(
        k2, (vocab,), jnp.float32, -bound, bound)
    return params


if __name__ == "__main__":
    B, T = 2, 8
    vocab = 16          # len(tokens) -> one-hot input width and FC output width
    n_hidden = 32
    n_layers = 2

    key = jax.random.PRNGKey(0)
    key, kp, kx = jax.random.split(key, 3)
    params = _init_params(kp, vocab, n_hidden, n_layers)
    prep = prepare_params(params, vocab, n_hidden, n_layers)   # one-time prep

    # one-hot encoded character sequence, like the CharRNN training data
    idx = jax.random.randint(kx, (B, T), 0, vocab)
    x = jax.nn.one_hot(idx, vocab, dtype=jnp.float32)          # (B, T, V)
    hidden = (jnp.zeros((n_layers, B, n_hidden), jnp.float32),  # init_hidden
              jnp.zeros((n_layers, B, n_hidden), jnp.float32))

    out, (h_n, c_n) = text_rnn_forward(prep, x, hidden)
    jax.block_until_ready((out, h_n, c_n))

    # validate against a pure-JAX (f32) reference; bf16 MXU inputs in the
    # kernel require a deliberately relaxed tolerance.
    out_ref, (h_ref, c_ref) = _ref_forward(params, x, hidden, n_layers, n_hidden)
    assert out.shape == (B * T, vocab)
    assert h_n.shape == (n_layers, B, n_hidden)
    assert c_n.shape == (n_layers, B, n_hidden)
    np.testing.assert_allclose(np.asarray(out), np.asarray(out_ref),
                               rtol=3e-2, atol=3e-2)
    np.testing.assert_allclose(np.asarray(h_n), np.asarray(h_ref),
                               rtol=3e-2, atol=3e-2)
    np.testing.assert_allclose(np.asarray(c_n), np.asarray(c_ref),
                               rtol=3e-2, atol=3e-2)

    print("KERNEL_OK")
</pallas_src>

<mosaic_0001>
module attributes {stable_mosaic.version = 11 : i64} {
  func.func @kernel(%arg0: memref<64xi32, #tpu.memory_space<smem>>, %arg1: memref<16x128xf32, #tpu.memory_space<vmem>>, %arg2: memref<32x128xbf16, #tpu.memory_space<vmem>>, %arg3: memref<1x128xf32, #tpu.memory_space<vmem>>, %arg4: memref<32x128xbf16, #tpu.memory_space<vmem>>, %arg5: memref<32x128xbf16, #tpu.memory_space<vmem>>, %arg6: memref<32x128xbf16, #tpu.memory_space<vmem>>, %arg7: memref<1x128xf32, #tpu.memory_space<vmem>>, %arg8: memref<2x8x32xf32, #tpu.memory_space<vmem>>, %arg9: memref<2x8x32xf32, #tpu.memory_space<vmem>>, %arg10: memref<8x8x128xf32, #tpu.memory_space<vmem>>, %arg11: memref<2x8x32xf32, #tpu.memory_space<vmem>>, %arg12: memref<2x8x32xf32, #tpu.memory_space<vmem>>, %arg13: memref<64x128xf32, #tpu.memory_space<vmem>>) attributes {dimension_semantics = [], scalar_prefetch = 0 : i64, scratch_operands = 1 : i64, tpu.core_type = #tpu.core_type<tc>} {
    %c0 = arith.constant 0 : index
    %0 = memref.load %arg0[%c0] : memref<64xi32, #tpu.memory_space<smem>>
    %1 = arith.index_cast %0 : i32 to index
    %c0_0 = arith.constant 0 : index
    %2 = vector.load %arg1[%1, %c0_0] : memref<16x128xf32, #tpu.memory_space<vmem>>, vector<1x128xf32>
    %c0_1 = arith.constant 0 : index
    %c0_2 = arith.constant 0 : index
    %3 = vector.load %arg13[%c0_1, %c0_2] : memref<64x128xf32, #tpu.memory_space<vmem>>, vector<1x128xf32>
    tpu.vector_store %arg13[%c0_1, %c0_2], %2 {strides = array<i32>} : memref<64x128xf32, #tpu.memory_space<vmem>>, vector<1x128xf32>,
    %c1 = arith.constant 1 : index
    %4 = memref.load %arg0[%c1] : memref<64xi32, #tpu.memory_space<smem>>
    %5 = arith.index_cast %4 : i32 to index
    %c0_3 = arith.constant 0 : index
    %6 = vector.load %arg1[%5, %c0_3] : memref<16x128xf32, #tpu.memory_space<vmem>>, vector<1x128xf32>
    %c1_4 = arith.constant 1 : index
    %c0_5 = arith.constant 0 : index
    %7 = vector.load %arg13[%c1_4, %c0_5] : memref<64x128xf32, #tpu.memory_space<vmem>>, vector<1x128xf32>
    tpu.vector_store %arg13[%c1_4, %c0_5], %6 {strides = array<i32>} : memref<64x128xf32, #tpu.memory_space<vmem>>, vector<1x128xf32>,
    %c2 = arith.constant 2 : index
    %8 = memref.load %arg0[%c2] : memref<64xi32, #tpu.memory_space<smem>>
    %9 = arith.index_cast %8 : i32 to index
    %c0_6 = arith.constant 0 : index
    %10 = vector.load %arg1[%9, %c0_6] : memref<16x128xf32, #tpu.memory_space<vmem>>, vector<1x128xf32>
    %c2_7 = arith.constant 2 : index
    %c0_8 = arith.constant 0 : index
    %11 = vector.load %arg13[%c2_7, %c0_8] : memref<64x128xf32, #tpu.memory_space<vmem>>, vector<1x128xf32>
    tpu.vector_store %arg13[%c2_7, %c0_8], %10 {strides = array<i32>} : memref<64x128xf32, #tpu.memory_space<vmem>>, vector<1x128xf32>,
    %c3 = arith.constant 3 : index
    %12 = memref.load %arg0[%c3] : memref<64xi32, #tpu.memory_space<smem>>
    %13 = arith.index_cast %12 : i32 to index
    %c0_9 = arith.constant 0 : index
    %14 = vector.load %arg1[%13, %c0_9] : memref<16x128xf32, #tpu.memory_space<vmem>>, vector<1x128xf32>
    %c3_10 = arith.constant 3 : index
    %c0_11 = arith.constant 0 : index
    %15 = vector.load %arg13[%c3_10, %c0_11] : memref<64x128xf32, #tpu.memory_space<vmem>>, vector<1x128xf32>
    tpu.vector_store %arg13[%c3_10, %c0_11], %14 {strides = array<i32>} : memref<64x128xf32, #tpu.memory_space<vmem>>, vector<1x128xf32>,
    %c4 = arith.constant 4 : index
    %16 = memref.load %arg0[%c4] : memref<64xi32, #tpu.memory_space<smem>>
    %17 = arith.index_cast %16 : i32 to index
    %c0_12 = arith.constant 0 : index
    %18 = vector.load %arg1[%17, %c0_12] : memref<16x128xf32, #tpu.memory_space<vmem>>, vector<1x128xf32>
    %c4_13 = arith.constant 4 : index
    %c0_14 = arith.constant 0 : index
    %19 = vector.load %arg13[%c4_13, %c0_14] : memref<64x128xf32, #tpu.memory_space<vmem>>, vector<1x128xf32>
    tpu.vector_store %arg13[%c4_13, %c0_14], %18 {strides = array<i32>} : memref<64x128xf32, #tpu.memory_space<vmem>>, vector<1x128xf32>,
    %c5 = arith.constant 5 : index
    %20 = memref.load %arg0[%c5] : memref<64xi32, #tpu.memory_space<smem>>
    %21 = arith.index_cast %20 : i32 to index
    %c0_15 = arith.constant 0 : index
    %22 = vector.load %arg1[%21, %c0_15] : memref<16x128xf32, #tpu.memory_space<vmem>>, vector<1x128xf32>
    %c5_16 = arith.constant 5 : index
    %c0_17 = arith.constant 0 : index
    %23 = vector.load %arg13[%c5_16, %c0_17] : memref<64x128xf32, #tpu.memory_space<vmem>>, vector<1x128xf32>
    tpu.vector_store %arg13[%c5_16, %c0_17], %22 {strides = array<i32>} : memref<64x128xf32, #tpu.memory_space<vmem>>, vector<1x128xf32>,
    %c6 = arith.constant 6 : index
    %24 = memref.load %arg0[%c6] : memref<64xi32, #tpu.memory_space<smem>>
    %25 = arith.index_cast %24 : i32 to index
    %c0_18 = arith.constant 0 : index
    %26 = vector.load %arg1[%25, %c0_18] : memref<16x128xf32, #tpu.memory_space<vmem>>, vector<1x128xf32>
    %c6_19 = arith.constant 6 : index
    %c0_20 = arith.constant 0 : index
    %27 = vector.load %arg13[%c6_19, %c0_20] : memref<64x128xf32, #tpu.memory_space<vmem>>, vector<1x128xf32>
    tpu.vector_store %arg13[%c6_19, %c0_20], %26 {strides = array<i32>} : memref<64x128xf32, #tpu.memory_space<vmem>>, vector<1x128xf32>,
    %c7 = arith.constant 7 : index
    %28 = memref.load %arg0[%c7] : memref<64xi32, #tpu.memory_space<smem>>
    %29 = arith.index_cast %28 : i32 to index
    %c0_21 = arith.constant 0 : index
    %30 = vector.load %arg1[%29, %c0_21] : memref<16x128xf32, #tpu.memory_space<vmem>>, vector<1x128xf32>
    %c7_22 = arith.constant 7 : index
    %c0_23 = arith.constant 0 : index
    %31 = vector.load %arg13[%c7_22, %c0_23] : memref<64x128xf32, #tpu.memory_space<vmem>>, vector<1x128xf32>
    tpu.vector_store %arg13[%c7_22, %c0_23], %30 {strides = array<i32>} : memref<64x128xf32, #tpu.memory_space<vmem>>, vector<1x128xf32>,
    %c8 = arith.constant 8 : index
    %32 = memref.load %arg0[%c8] : memref<64xi32, #tpu.memory_space<smem>>
    %33 = arith.index_cast %32 : i32 to index
    %c0_24 = arith.constant 0 : index
    %34 = vector.load %arg1[%33, %c0_24] : memref<16x128xf32, #tpu.memory_space<vmem>>, vector<1x128xf32>
    %c8_25 = arith.constant 8 : index
    %c0_26 = arith.constant 0 : index
    %35 = vector.load %arg13[%c8_25, %c0_26] : memref<64x128xf32, #tpu.memory_space<vmem>>, vector<1x128xf32>
    tpu.vector_store %arg13[%c8_25, %c0_26], %34 {strides = array<i32>} : memref<64x128xf32, #tpu.memory_space<vmem>>, vector<1x128xf32>,
    %c9 = arith.constant 9 : index
    %36 = memref.load %arg0[%c9] : memref<64xi32, #tpu.memory_space<smem>>
    %37 = arith.index_cast %36 : i32 to index
    %c0_27 = arith.constant 0 : index
    %38 = vector.load %arg1[%37, %c0_27] : memref<16x128xf32, #tpu.memory_space<vmem>>, vector<1x128xf32>
    %c9_28 = arith.constant 9 : index
    %c0_29 = arith.constant 0 : index
    %39 = vector.load %arg13[%c9_28, %c0_29] : memref<64x128xf32, #tpu.memory_space<vmem>>, vector<1x128xf32>
    tpu.vector_store %arg13[%c9_28, %c0_29], %38 {strides = array<i32>} : memref<64x128xf32, #tpu.memory_space<vmem>>, vector<1x128xf32>,
    %c10 = arith.constant 10 : index
    %40 = memref.load %arg0[%c10] : memref<64xi32, #tpu.memory_space<smem>>
    %41 = arith.index_cast %40 : i32 to index
    %c0_30 = arith.constant 0 : index
    %42 = vector.load %arg1[%41, %c0_30] : memref<16x128xf32, #tpu.memory_space<vmem>>, vector<1x128xf32>
    %c10_31 = arith.constant 10 : index
    %c0_32 = arith.constant 0 : index
    %43 = vector.load %arg13[%c10_31, %c0_32] : memref<64x128xf32, #tpu.memory_space<vmem>>, vector<1x128xf32>
    tpu.vector_store %arg13[%c10_31, %c0_32], %42 {strides = array<i32>} : memref<64x128xf32, #tpu.memory_space<vmem>>, vector<1x128xf32>,
    %c11 = arith.constant 11 : index
    %44 = memref.load %arg0[%c11] : memref<64xi32, #tpu.memory_space<smem>>
    %45 = arith.index_cast %44 : i32 to index
    %c0_33 = arith.constant 0 : index
    %46 = vector.load %arg1[%45, %c0_33] : memref<16x128xf32, #tpu.memory_space<vmem>>, vector<1x128xf32>
    %c11_34 = arith.constant 11 : index
    %c0_35 = arith.constant 0 : index
    %47 = vector.load %arg13[%c11_34, %c0_35] : memref<64x128xf32, #tpu.memory_space<vmem>>, vector<1x128xf32>
    tpu.vector_store %arg13[%c11_34, %c0_35], %46 {strides = array<i32>} : memref<64x128xf32, #tpu.memory_space<vmem>>, vector<1x128xf32>,
    %c12 = arith.constant 12 : index
    %48 = memref.load %arg0[%c12] : memref<64xi32, #tpu.memory_space<smem>>
    %49 = arith.index_cast %48 : i32 to index
    %c0_36 = arith.constant 0 : index
    %50 = vector.load %arg1[%49, %c0_36] : memref<16x128xf32, #tpu.memory_space<vmem>>, vector<1x128xf32>
    %c12_37 = arith.constant 12 : index
    %c0_38 = arith.constant 0 : index
    %51 = vector.load %arg13[%c12_37, %c0_38] : memref<64x128xf32, #tpu.memory_space<vmem>>, vector<1x128xf32>
    tpu.vector_store %arg13[%c12_37, %c0_38], %50 {strides = array<i32>} : memref<64x128xf32, #tpu.memory_space<vmem>>, vector<1x128xf32>,
    %c13 = arith.constant 13 : index
    %52 = memref.load %arg0[%c13] : memref<64xi32, #tpu.memory_space<smem>>
    %53 = arith.index_cast %52 : i32 to index
    %c0_39 = arith.constant 0 : index
    %54 = vector.load %arg1[%53, %c0_39] : memref<16x128xf32, #tpu.memory_space<vmem>>, vector<1x128xf32>
    %c13_40 = arith.constant 13 : index
    %c0_41 = arith.constant 0 : index
    %55 = vector.load %arg13[%c13_40, %c0_41] : memref<64x128xf32, #tpu.memory_space<vmem>>, vector<1x128xf32>
    tpu.vector_store %arg13[%c13_40, %c0_41], %54 {strides = array<i32>} : memref<64x128xf32, #tpu.memory_space<vmem>>, vector<1x128xf32>,
    %c14 = arith.constant 14 : index
    %56 = memref.load %arg0[%c14] : memref<64xi32, #tpu.memory_space<smem>>
    %57 = arith.index_cast %56 : i32 to index
    %c0_42 = arith.constant 0 : index
    %58 = vector.load %arg1[%57, %c0_42] : memref<16x128xf32, #tpu.memory_space<vmem>>, vector<1x128xf32>
    %c14_43 = arith.constant 14 : index
    %c0_44 = arith.constant 0 : index
    %59 = vector.load %arg13[%c14_43, %c0_44] : memref<64x128xf32, #tpu.memory_space<vmem>>, vector<1x128xf32>
    tpu.vector_store %arg13[%c14_43, %c0_44], %58 {strides = array<i32>} : memref<64x128xf32, #tpu.memory_space<vmem>>, vector<1x128xf32>,
    %c15 = arith.constant 15 : index
    %60 = memref.load %arg0[%c15] : memref<64xi32, #tpu.memory_space<smem>>
    %61 = arith.index_cast %60 : i32 to index
    %c0_45 = arith.constant 0 : index
    %62 = vector.load %arg1[%61, %c0_45] : memref<16x128xf32, #tpu.memory_space<vmem>>, vector<1x128xf32>
    %c15_46 = arith.constant 15 : index
    %c0_47 = arith.constant 0 : index
    %63 = vector.load %arg13[%c15_46, %c0_47] : memref<64x128xf32, #tpu.memory_space<vmem>>, vector<1x128xf32>
    tpu.vector_store %arg13[%c15_46, %c0_47], %62 {strides = array<i32>} : memref<64x128xf32, #tpu.memory_space<vmem>>, vector<1x128xf32>,
    %c16 = arith.constant 16 : index
    %64 = memref.load %arg0[%c16] : memref<64xi32, #tpu.memory_space<smem>>
    %65 = arith.index_cast %64 : i32 to index
    %c0_48 = arith.constant 0 : index
    %66 = vector.load %arg1[%65, %c0_48] : memref<16x128xf32, #tpu.memory_space<vmem>>, vector<1x128xf32>
    %c16_49 = arith.constant 16 : index
    %c0_50 = arith.constant 0 : index
    %67 = vector.load %arg13[%c16_49, %c0_50] : memref<64x128xf32, #tpu.memory_space<vmem>>, vector<1x128xf32>
    tpu.vector_store %arg13[%c16_49, %c0_50], %66 {strides = array<i32>} : memref<64x128xf32, #tpu.memory_space<vmem>>, vector<1x128xf32>,
    %c17 = arith.constant 17 : index
    %68 = memref.load %arg0[%c17] : memref<64xi32, #tpu.memory_space<smem>>
    %69 = arith.index_cast %68 : i32 to index
    %c0_51 = arith.constant 0 : index
    %70 = vector.load %arg1[%69, %c0_51] : memref<16x128xf32, #tpu.memory_space<vmem>>, vector<1x128xf32>
    %c17_52 = arith.constant 17 : index
    %c0_53 = arith.constant 0 : index
    %71 = vector.load %arg13[%c17_52, %c0_53] : memref<64x128xf32, #tpu.memory_space<vmem>>, vector<1x128xf32>
    tpu.vector_store %arg13[%c17_52, %c0_53], %70 {strides = array<i32>} : memref<64x128xf32, #tpu.memory_space<vmem>>, vector<1x128xf32>,
    %c18 = arith.constant 18 : index
    %72 = memref.load %arg0[%c18] : memref<64xi32, #tpu.memory_space<smem>>
    %73 = arith.index_cast %72 : i32 to index
    %c0_54 = arith.constant 0 : index
    %74 = vector.load %arg1[%73, %c0_54] : memref<16x128xf32, #tpu.memory_space<vmem>>, vector<1x128xf32>
    %c18_55 = arith.constant 18 : index
    %c0_56 = arith.constant 0 : index
    %75 = vector.load %arg13[%c18_55, %c0_56] : memref<64x128xf32, #tpu.memory_space<vmem>>, vector<1x128xf32>
    tpu.vector_store %arg13[%c18_55, %c0_56], %74 {strides = array<i32>} : memref<64x128xf32, #tpu.memory_space<vmem>>, vector<1x128xf32>,
    %c19 = arith.constant 19 : index
    %76 = memref.load %arg0[%c19] : memref<64xi32, #tpu.memory_space<smem>>
    %77 = arith.index_cast %76 : i32 to index
    %c0_57 = arith.constant 0 : index
    %78 = vector.load %arg1[%77, %c0_57] : memref<16x128xf32, #tpu.memory_space<vmem>>, vector<1x128xf32>
    %c19_58 = arith.constant 19 : index
    %c0_59 = arith.constant 0 : index
    %79 = vector.load %arg13[%c19_58, %c0_59] : memref<64x128xf32, #tpu.memory_space<vmem>>, vector<1x128xf32>
    tpu.vector_store %arg13[%c19_58, %c0_59], %78 {strides = array<i32>} : memref<64x128xf32, #tpu.memory_space<vmem>>, vector<1x128xf32>,
    %c20 = arith.constant 20 : index
    %80 = memref.load %arg0[%c20] : memref<64xi32, #tpu.memory_space<smem>>
    %81 = arith.index_cast %80 : i32 to index
    %c0_60 = arith.constant 0 : index
    %82 = vector.load %arg1[%81, %c0_60] : memref<16x128xf32, #tpu.memory_space<vmem>>, vector<1x128xf32>
    %c20_61 = arith.constant 20 : index
    %c0_62 = arith.constant 0 : index
    %83 = vector.load %arg13[%c20_61, %c0_62] : memref<64x128xf32, #tpu.memory_space<vmem>>, vector<1x128xf32>
    tpu.vector_store %arg13[%c20_61, %c0_62], %82 {strides = array<i32>} : memref<64x128xf32, #tpu.memory_space<vmem>>, vector<1x128xf32>,
    %c21 = arith.constant 21 : index
    %84 = memref.load %arg0[%c21] : memref<64xi32, #tpu.memory_space<smem>>
    %85 = arith.index_cast %84 : i32 to index
    %c0_63 = arith.constant 0 : index
    %86 = vector.load %arg1[%85, %c0_63] : memref<16x128xf32, #tpu.memory_space<vmem>>, vector<1x128xf32>
    %c21_64 = arith.constant 21 : index
    %c0_65 = arith.constant 0 : index
    %87 = vector.load %arg13[%c21_64, %c0_65] : memref<64x128xf32, #tpu.memory_space<vmem>>, vector<1x128xf32>
    tpu.vector_store %arg13[%c21_64, %c0_65], %86 {strides = array<i32>} : memref<64x128xf32, #tpu.memory_space<vmem>>, vector<1x128xf32>,
    %c22 = arith.constant 22 : index
    %88 = memref.load %arg0[%c22] : memref<64xi32, #tpu.memory_space<smem>>
    %89 = arith.index_cast %88 : i32 to index
    %c0_66 = arith.constant 0 : index
    %90 = vector.load %arg1[%89, %c0_66] : memref<16x128xf32, #tpu.memory_space<vmem>>, vector<1x128xf32>
    %c22_67 = arith.constant 22 : index
    %c0_68 = arith.constant 0 : index
    %91 = vector.load %arg13[%c22_67, %c0_68] : memref<64x128xf32, #tpu.memory_space<vmem>>, vector<1x128xf32>
    tpu.vector_store %arg13[%c22_67, %c0_68], %90 {strides = array<i32>} : memref<64x128xf32, #tpu.memory_space<vmem>>, vector<1x128xf32>,
    %c23 = arith.constant 23 : index
    %92 = memref.load %arg0[%c23] : memref<64xi32, #tpu.memory_space<smem>>
    %93 = arith.index_cast %92 : i32 to index
    %c0_69 = arith.constant 0 : index
    %94 = vector.load %arg1[%93, %c0_69] : memref<16x128xf32, #tpu.memory_space<vmem>>, vector<1x128xf32>
    %c23_70 = arith.constant 23 : index
    %c0_71 = arith.constant 0 : index
    %95 = vector.load %arg13[%c23_70, %c0_71] : memref<64x128xf32, #tpu.memory_space<vmem>>, vector<1x128xf32>
    tpu.vector_store %arg13[%c23_70, %c0_71], %94 {strides = array<i32>} : memref<64x128xf32, #tpu.memory_space<vmem>>, vector<1x128xf32>,
    %c24 = arith.constant 24 : index
    %96 = memref.load %arg0[%c24] : memref<64xi32, #tpu.memory_space<smem>>
    %97 = arith.index_cast %96 : i32 to index
    %c0_72 = arith.constant 0 : index
    %98 = vector.load %arg1[%97, %c0_72] : memref<16x128xf32, #tpu.memory_space<vmem>>, vector<1x128xf32>
    %c24_73 = arith.constant 24 : index
    %c0_74 = arith.constant 0 : index
    %99 = vector.load %arg13[%c24_73, %c0_74] : memref<64x128xf32, #tpu.memory_space<vmem>>, vector<1x128xf32>
    tpu.vector_store %arg13[%c24_73, %c0_74], %98 {strides = array<i32>} : memref<64x128xf32, #tpu.memory_space<vmem>>, vector<1x128xf32>,
    %c25 = arith.constant 25 : index
    %100 = memref.load %arg0[%c25] : memref<64xi32, #tpu.memory_space<smem>>
    %101 = arith.index_cast %100 : i32 to index
    %c0_75 = arith.constant 0 : index
    %102 = vector.load %arg1[%101, %c0_75] : memref<16x128xf32, #tpu.memory_space<vmem>>, vector<1x128xf32>
    %c25_76 = arith.constant 25 : index
    %c0_77 = arith.constant 0 : index
    %103 = vector.load %arg13[%c25_76, %c0_77] : memref<64x128xf32, #tpu.memory_space<vmem>>, vector<1x128xf32>
    tpu.vector_store %arg13[%c25_76, %c0_77], %102 {strides = array<i32>} : memref<64x128xf32, #tpu.memory_space<vmem>>, vector<1x128xf32>,
    %c26 = arith.constant 26 : index
    %104 = memref.load %arg0[%c26] : memref<64xi32, #tpu.memory_space<smem>>
    %105 = arith.index_cast %104 : i32 to index
    %c0_78 = arith.constant 0 : index
    %106 = vector.load %arg1[%105, %c0_78] : memref<16x128xf32, #tpu.memory_space<vmem>>, vector<1x128xf32>
    %c26_79 = arith.constant 26 : index
    %c0_80 = arith.constant 0 : index
    %107 = vector.load %arg13[%c26_79, %c0_80] : memref<64x128xf32, #tpu.memory_space<vmem>>, vector<1x128xf32>
    tpu.vector_store %arg13[%c26_79, %c0_80], %106 {strides = array<i32>} : memref<64x128xf32, #tpu.memory_space<vmem>>, vector<1x128xf32>,
    %c27 = arith.constant 27 : index
    %108 = memref.load %arg0[%c27] : memref<64xi32, #tpu.memory_space<smem>>
    %109 = arith.index_cast %108 : i32 to index
    %c0_81 = arith.constant 0 : index
    %110 = vector.load %arg1[%109, %c0_81] : memref<16x128xf32, #tpu.memory_space<vmem>>, vector<1x128xf32>
    %c27_82 = arith.constant 27 : index
    %c0_83 = arith.constant 0 : index
    %111 = vector.load %arg13[%c27_82, %c0_83] : memref<64x128xf32, #tpu.memory_space<vmem>>, vector<1x128xf32>
    tpu.vector_store %arg13[%c27_82, %c0_83], %110 {strides = array<i32>} : memref<64x128xf32, #tpu.memory_space<vmem>>, vector<1x128xf32>,
    %c28 = arith.constant 28 : index
    %112 = memref.load %arg0[%c28] : memref<64xi32, #tpu.memory_space<smem>>
    %113 = arith.index_cast %112 : i32 to index
    %c0_84 = arith.constant 0 : index
    %114 = vector.load %arg1[%113, %c0_84] : memref<16x128xf32, #tpu.memory_space<vmem>>, vector<1x128xf32>
    %c28_85 = arith.constant 28 : index
    %c0_86 = arith.constant 0 : index
    %115 = vector.load %arg13[%c28_85, %c0_86] : memref<64x128xf32, #tpu.memory_space<vmem>>, vector<1x128xf32>
    tpu.vector_store %arg13[%c28_85, %c0_86], %114 {strides = array<i32>} : memref<64x128xf32, #tpu.memory_space<vmem>>, vector<1x128xf32>,
    %c29 = arith.constant 29 : index
    %116 = memref.load %arg0[%c29] : memref<64xi32, #tpu.memory_space<smem>>
    %117 = arith.index_cast %116 : i32 to index
    %c0_87 = arith.constant 0 : index
    %118 = vector.load %arg1[%117, %c0_87] : memref<16x128xf32, #tpu.memory_space<vmem>>, vector<1x128xf32>
    %c29_88 = arith.constant 29 : index
    %c0_89 = arith.constant 0 : index
    %119 = vector.load %arg13[%c29_88, %c0_89] : memref<64x128xf32, #tpu.memory_space<vmem>>, vector<1x128xf32>
    tpu.vector_store %arg13[%c29_88, %c0_89], %118 {strides = array<i32>} : memref<64x128xf32, #tpu.memory_space<vmem>>, vector<1x128xf32>,
    %c30 = arith.constant 30 : index
    %120 = memref.load %arg0[%c30] : memref<64xi32, #tpu.memory_space<smem>>
    %121 = arith.index_cast %120 : i32 to index
    %c0_90 = arith.constant 0 : index
    %122 = vector.load %arg1[%121, %c0_90] : memref<16x128xf32, #tpu.memory_space<vmem>>, vector<1x128xf32>
    %c30_91 = arith.constant 30 : index
    %c0_92 = arith.constant 0 : index
    %123 = vector.load %arg13[%c30_91, %c0_92] : memref<64x128xf32, #tpu.memory_space<vmem>>, vector<1x128xf32>
    tpu.vector_store %arg13[%c30_91, %c0_92], %122 {strides = array<i32>} : memref<64x128xf32, #tpu.memory_space<vmem>>, vector<1x128xf32>,
    %c31 = arith.constant 31 : index
    %124 = memref.load %arg0[%c31] : memref<64xi32, #tpu.memory_space<smem>>
    %125 = arith.index_cast %124 : i32 to index
    %c0_93 = arith.constant 0 : index
    %126 = vector.load %arg1[%125, %c0_93] : memref<16x128xf32, #tpu.memory_space<vmem>>, vector<1x128xf32>
    %c31_94 = arith.constant 31 : index
    %c0_95 = arith.constant 0 : index
    %127 = vector.load %arg13[%c31_94, %c0_95] : memref<64x128xf32, #tpu.memory_space<vmem>>, vector<1x128xf32>
    tpu.vector_store %arg13[%c31_94, %c0_95], %126 {strides = array<i32>} : memref<64x128xf32, #tpu.memory_space<vmem>>, vector<1x128xf32>,
    %c32 = arith.constant 32 : index
    %128 = memref.load %arg0[%c32] : memref<64xi32, #tpu.memory_space<smem>>
    %129 = arith.index_cast %128 : i32 to index
    %c0_96 = arith.constant 0 : index
    %130 = vector.load %arg1[%129, %c0_96] : memref<16x128xf32, #tpu.memory_space<vmem>>, vector<1x128xf32>
    %c32_97 = arith.constant 32 : index
    %c0_98 = arith.constant 0 : index
    %131 = vector.load %arg13[%c32_97, %c0_98] : memref<64x128xf32, #tpu.memory_space<vmem>>, vector<1x128xf32>
    tpu.vector_store %arg13[%c32_97, %c0_98], %130 {strides = array<i32>} : memref<64x128xf32, #tpu.memory_space<vmem>>, vector<1x128xf32>,
    %c33 = arith.constant 33 : index
    %132 = memref.load %arg0[%c33] : memref<64xi32, #tpu.memory_space<smem>>
    %133 = arith.index_cast %132 : i32 to index
    %c0_99 = arith.constant 0 : index
    %134 = vector.load %arg1[%133, %c0_99] : memref<16x128xf32, #tpu.memory_space<vmem>>, vector<1x128xf32>
    %c33_100 = arith.constant 33 : index
    %c0_101 = arith.constant 0 : index
    %135 = vector.load %arg13[%c33_100, %c0_101] : memref<64x128xf32, #tpu.memory_space<vmem>>, vector<1x128xf32>
    tpu.vector_store %arg13[%c33_100, %c0_101], %134 {strides = array<i32>} : memref<64x128xf32, #tpu.memory_space<vmem>>, vector<1x128xf32>,
    %c34 = arith.constant 34 : index
    %136 = memref.load %arg0[%c34] : memref<64xi32, #tpu.memory_space<smem>>
    %137 = arith.index_cast %136 : i32 to index
    %c0_102 = arith.constant 0 : index
    %138 = vector.load %arg1[%137, %c0_102] : memref<16x128xf32, #tpu.memory_space<vmem>>, vector<1x128xf32>
    %c34_103 = arith.constant 34 : index
    %c0_104 = arith.constant 0 : index
    %139 = vector.load %arg13[%c34_103, %c0_104] : memref<64x128xf32, #tpu.memory_space<vmem>>, vector<1x128xf32>
    tpu.vector_store %arg13[%c34_103, %c0_104], %138 {strides = array<i32>} : memref<64x128xf32, #tpu.memory_space<vmem>>, vector<1x128xf32>,
    %c35 = arith.constant 35 : index
    %140 = memref.load %arg0[%c35] : memref<64xi32, #tpu.memory_space<smem>>
    %141 = arith.index_cast %140 : i32 to index
    %c0_105 = arith.constant 0 : index
    %142 = vector.load %arg1[%141, %c0_105] : memref<16x128xf32, #tpu.memory_space<vmem>>, vector<1x128xf32>
    %c35_106 = arith.constant 35 : index
    %c0_107 = arith.constant 0 : index
    %143 = vector.load %arg13[%c35_106, %c0_107] : memref<64x128xf32, #tpu.memory_space<vmem>>, vector<1x128xf32>
    tpu.vector_store %arg13[%c35_106, %c0_107], %142 {strides = array<i32>} : memref<64x128xf32, #tpu.memory_space<vmem>>, vector<1x128xf32>,
    %c36 = arith.constant 36 : index
    %144 = memref.load %arg0[%c36] : memref<64xi32, #tpu.memory_space<smem>>
    %145 = arith.index_cast %144 : i32 to index
    %c0_108 = arith.constant 0 : index
    %146 = vector.load %arg1[%145, %c0_108] : memref<16x128xf32, #tpu.memory_space<vmem>>, vector<1x128xf32>
    %c36_109 = arith.constant 36 : index
    %c0_110 = arith.constant 0 : index
    %147 = vector.load %arg13[%c36_109, %c0_110] : memref<64x128xf32, #tpu.memory_space<vmem>>, vector<1x128xf32>
    tpu.vector_store %arg13[%c36_109, %c0_110], %146 {strides = array<i32>} : memref<64x128xf32, #tpu.memory_space<vmem>>, vector<1x128xf32>,
    %c37 = arith.constant 37 : index
    %148 = memref.load %arg0[%c37] : memref<64xi32, #tpu.memory_space<smem>>
    %149 = arith.index_cast %148 : i32 to index
    %c0_111 = arith.constant 0 : index
    %150 = vector.load %arg1[%149, %c0_111] : memref<16x128xf32, #tpu.memory_space<vmem>>, vector<1x128xf32>
    %c37_112 = arith.constant 37 : index
    %c0_113 = arith.constant 0 : index
    %151 = vector.load %arg13[%c37_112, %c0_113] : memref<64x128xf32, #tpu.memory_space<vmem>>, vector<1x128xf32>
    tpu.vector_store %arg13[%c37_112, %c0_113], %150 {strides = array<i32>} : memref<64x128xf32, #tpu.memory_space<vmem>>, vector<1x128xf32>,
    %c38 = arith.constant 38 : index
    %152 = memref.load %arg0[%c38] : memref<64xi32, #tpu.memory_space<smem>>
    %153 = arith.index_cast %152 : i32 to index
    %c0_114 = arith.constant 0 : index
    %154 = vector.load %arg1[%153, %c0_114] : memref<16x128xf32, #tpu.memory_space<vmem>>, vector<1x128xf32>
    %c38_115 = arith.constant 38 : index
    %c0_116 = arith.constant 0 : index
    %155 = vector.load %arg13[%c38_115, %c0_116] : memref<64x128xf32, #tpu.memory_space<vmem>>, vector<1x128xf32>
    tpu.vector_store %arg13[%c38_115, %c0_116], %154 {strides = array<i32>} : memref<64x128xf32, #tpu.memory_space<vmem>>, vector<1x128xf32>,
    %c39 = arith.constant 39 : index
    %156 = memref.load %arg0[%c39] : memref<64xi32, #tpu.memory_space<smem>>
    %157 = arith.index_cast %156 : i32 to index
    %c0_117 = arith.constant 0 : index
    %158 = vector.load %arg1[%157, %c0_117] : memref<16x128xf32, #tpu.memory_space<vmem>>, vector<1x128xf32>
    %c39_118 = arith.constant 39 : index
    %c0_119 = arith.constant 0 : index
    %159 = vector.load %arg13[%c39_118, %c0_119] : memref<64x128xf32, #tpu.memory_space<vmem>>, vector<1x128xf32>
    tpu.vector_store %arg13[%c39_118, %c0_119], %158 {strides = array<i32>} : memref<64x128xf32, #tpu.memory_space<vmem>>, vector<1x128xf32>,
    %c40 = arith.constant 40 : index
    %160 = memref.load %arg0[%c40] : memref<64xi32, #tpu.memory_space<smem>>
    %161 = arith.index_cast %160 : i32 to index
    %c0_120 = arith.constant 0 : index
    %162 = vector.load %arg1[%161, %c0_120] : memref<16x128xf32, #tpu.memory_space<vmem>>, vector<1x128xf32>
    %c40_121 = arith.constant 40 : index
    %c0_122 = arith.constant 0 : index
    %163 = vector.load %arg13[%c40_121, %c0_122] : memref<64x128xf32, #tpu.memory_space<vmem>>, vector<1x128xf32>
    tpu.vector_store %arg13[%c40_121, %c0_122], %162 {strides = array<i32>} : memref<64x128xf32, #tpu.memory_space<vmem>>, vector<1x128xf32>,
    %c41 = arith.constant 41 : index
    %164 = memref.load %arg0[%c41] : memref<64xi32, #tpu.memory_space<smem>>
    %165 = arith.index_cast %164 : i32 to index
    %c0_123 = arith.constant 0 : index
    %166 = vector.load %arg1[%165, %c0_123] : memref<16x128xf32, #tpu.memory_space<vmem>>, vector<1x128xf32>
    %c41_124 = arith.constant 41 : index
    %c0_125 = arith.constant 0 : index
    %167 = vector.load %arg13[%c41_124, %c0_125] : memref<64x128xf32, #tpu.memory_space<vmem>>, vector<1x128xf32>
    tpu.vector_store %arg13[%c41_124, %c0_125], %166 {strides = array<i32>} : memref<64x128xf32, #tpu.memory_space<vmem>>, vector<1x128xf32>,
    %c42 = arith.constant 42 : index
    %168 = memref.load %arg0[%c42] : memref<64xi32, #tpu.memory_space<smem>>
    %169 = arith.index_cast %168 : i32 to index
    %c0_126 = arith.constant 0 : index
    %170 = vector.load %arg1[%169, %c0_126] : memref<16x128xf32, #tpu.memory_space<vmem>>, vector<1x128xf32>
    %c42_127 = arith.constant 42 : index
    %c0_128 = arith.constant 0 : index
    %171 = vector.load %arg13[%c42_127, %c0_128] : memref<64x128xf32, #tpu.memory_space<vmem>>, vector<1x128xf32>
    tpu.vector_store %arg13[%c42_127, %c0_128], %170 {strides = array<i32>} : memref<64x128xf32, #tpu.memory_space<vmem>>, vector<1x128xf32>,
    %c43 = arith.constant 43 : index
    %172 = memref.load %arg0[%c43] : memref<64xi32, #tpu.memory_space<smem>>
    %173 = arith.index_cast %172 : i32 to index
    %c0_129 = arith.constant 0 : index
    %174 = vector.load %arg1[%173, %c0_129] : memref<16x128xf32, #tpu.memory_space<vmem>>, vector<1x128xf32>
    %c43_130 = arith.constant 43 : index
    %c0_131 = arith.constant 0 : index
    %175 = vector.load %arg13[%c43_130, %c0_131] : memref<64x128xf32, #tpu.memory_space<vmem>>, vector<1x128xf32>
    tpu.vector_store %arg13[%c43_130, %c0_131], %174 {strides = array<i32>} : memref<64x128xf32, #tpu.memory_space<vmem>>, vector<1x128xf32>,
    %c44 = arith.constant 44 : index
    %176 = memref.load %arg0[%c44] : memref<64xi32, #tpu.memory_space<smem>>
    %177 = arith.index_cast %176 : i32 to index
    %c0_132 = arith.constant 0 : index
    %178 = vector.load %arg1[%177, %c0_132] : memref<16x128xf32, #tpu.memory_space<vmem>>, vector<1x128xf32>
    %c44_133 = arith.constant 44 : index
    %c0_134 = arith.constant 0 : index
    %179 = vector.load %arg13[%c44_133, %c0_134] : memref<64x128xf32, #tpu.memory_space<vmem>>, vector<1x128xf32>
    tpu.vector_store %arg13[%c44_133, %c0_134], %178 {strides = array<i32>} : memref<64x128xf32, #tpu.memory_space<vmem>>, vector<1x128xf32>,
    %c45 = arith.constant 45 : index
    %180 = memref.load %arg0[%c45] : memref<64xi32, #tpu.memory_space<smem>>
    %181 = arith.index_cast %180 : i32 to index
    %c0_135 = arith.constant 0 : index
    %182 = vector.load %arg1[%181, %c0_135] : memref<16x128xf32, #tpu.memory_space<vmem>>, vector<1x128xf32>
    %c45_136 = arith.constant 45 : index
    %c0_137 = arith.constant 0 : index
    %183 = vector.load %arg13[%c45_136, %c0_137] : memref<64x128xf32, #tpu.memory_space<vmem>>, vector<1x128xf32>
    tpu.vector_store %arg13[%c45_136, %c0_137], %182 {strides = array<i32>} : memref<64x128xf32, #tpu.memory_space<vmem>>, vector<1x128xf32>,
    %c46 = arith.constant 46 : index
    %184 = memref.load %arg0[%c46] : memref<64xi32, #tpu.memory_space<smem>>
    %185 = arith.index_cast %184 : i32 to index
    %c0_138 = arith.constant 0 : index
    %186 = vector.load %arg1[%185, %c0_138] : memref<16x128xf32, #tpu.memory_space<vmem>>, vector<1x128xf32>
    %c46_139 = arith.constant 46 : index
    %c0_140 = arith.constant 0 : index
    %187 = vector.load %arg13[%c46_139, %c0_140] : memref<64x128xf32, #tpu.memory_space<vmem>>, vector<1x128xf32>
    tpu.vector_store %arg13[%c46_139, %c0_140], %186 {strides = array<i32>} : memref<64x128xf32, #tpu.memory_space<vmem>>, vector<1x128xf32>,
    %c47 = arith.constant 47 : index
    %188 = memref.load %arg0[%c47] : memref<64xi32, #tpu.memory_space<smem>>
    %189 = arith.index_cast %188 : i32 to index
    %c0_141 = arith.constant 0 : index
    %190 = vector.load %arg1[%189, %c0_141] : memref<16x128xf32, #tpu.memory_space<vmem>>, vector<1x128xf32>
    %c47_142 = arith.constant 47 : index
    %c0_143 = arith.constant 0 : index
    %191 = vector.load %arg13[%c47_142, %c0_143] : memref<64x128xf32, #tpu.memory_space<vmem>>, vector<1x128xf32>
    tpu.vector_store %arg13[%c47_142, %c0_143], %190 {strides = array<i32>} : memref<64x128xf32, #tpu.memory_space<vmem>>, vector<1x128xf32>,
    %c48 = arith.constant 48 : index
    %192 = memref.load %arg0[%c48] : memref<64xi32, #tpu.memory_space<smem>>
    %193 = arith.index_cast %192 : i32 to index
    %c0_144 = arith.constant 0 : index
    %194 = vector.load %arg1[%193, %c0_144] : memref<16x128xf32, #tpu.memory_space<vmem>>, vector<1x128xf32>
    %c48_145 = arith.constant 48 : index
    %c0_146 = arith.constant 0 : index
    %195 = vector.load %arg13[%c48_145, %c0_146] : memref<64x128xf32, #tpu.memory_space<vmem>>, vector<1x128xf32>
    tpu.vector_store %arg13[%c48_145, %c0_146], %194 {strides = array<i32>} : memref<64x128xf32, #tpu.memory_space<vmem>>, vector<1x128xf32>,
    %c49 = arith.constant 49 : index
    %196 = memref.load %arg0[%c49] : memref<64xi32, #tpu.memory_space<smem>>
    %197 = arith.index_cast %196 : i32 to index
    %c0_147 = arith.constant 0 : index
    %198 = vector.load %arg1[%197, %c0_147] : memref<16x128xf32, #tpu.memory_space<vmem>>, vector<1x128xf32>
    %c49_148 = arith.constant 49 : index
    %c0_149 = arith.constant 0 : index
    %199 = vector.load %arg13[%c49_148, %c0_149] : memref<64x128xf32, #tpu.memory_space<vmem>>, vector<1x128xf32>
    tpu.vector_store %arg13[%c49_148, %c0_149], %198 {strides = array<i32>} : memref<64x128xf32, #tpu.memory_space<vmem>>, vector<1x128xf32>,
    %c50 = arith.constant 50 : index
    %200 = memref.load %arg0[%c50] : memref<64xi32, #tpu.memory_space<smem>>
    %201 = arith.index_cast %200 : i32 to index
    %c0_150 = arith.constant 0 : index
    %202 = vector.load %arg1[%201, %c0_150] : memref<16x128xf32, #tpu.memory_space<vmem>>, vector<1x128xf32>
    %c50_151 = arith.constant 50 : index
    %c0_152 = arith.constant 0 : index
    %203 = vector.load %arg13[%c50_151, %c0_152] : memref<64x128xf32, #tpu.memory_space<vmem>>, vector<1x128xf32>
    tpu.vector_store %arg13[%c50_151, %c0_152], %202 {strides = array<i32>} : memref<64x128xf32, #tpu.memory_space<vmem>>, vector<1x128xf32>,
    %c51 = arith.constant 51 : index
    %204 = memref.load %arg0[%c51] : memref<64xi32, #tpu.memory_space<smem>>
    %205 = arith.index_cast %204 : i32 to index
    %c0_153 = arith.constant 0 : index
    %206 = vector.load %arg1[%205, %c0_153] : memref<16x128xf32, #tpu.memory_space<vmem>>, vector<1x128xf32>
    %c51_154 = arith.constant 51 : index
    %c0_155 = arith.constant 0 : index
    %207 = vector.load %arg13[%c51_154, %c0_155] : memref<64x128xf32, #tpu.memory_space<vmem>>, vector<1x128xf32>
    tpu.vector_store %arg13[%c51_154, %c0_155], %206 {strides = array<i32>} : memref<64x128xf32, #tpu.memory_space<vmem>>, vector<1x128xf32>,
    %c52 = arith.constant 52 : index
    %208 = memref.load %arg0[%c52] : memref<64xi32, #tpu.memory_space<smem>>
    %209 = arith.index_cast %208 : i32 to index
    %c0_156 = arith.constant 0 : index
    %210 = vector.load %arg1[%209, %c0_156] : memref<16x128xf32, #tpu.memory_space<vmem>>, vector<1x128xf32>
    %c52_157 = arith.constant 52 : index
    %c0_158 = arith.constant 0 : index
    %211 = vector.load %arg13[%c52_157, %c0_158] : memref<64x128xf32, #tpu.memory_space<vmem>>, vector<1x128xf32>
    tpu.vector_store %arg13[%c52_157, %c0_158], %210 {strides = array<i32>} : memref<64x128xf32, #tpu.memory_space<vmem>>, vector<1x128xf32>,
    %c53 = arith.constant 53 : index
    %212 = memref.load %arg0[%c53] : memref<64xi32, #tpu.memory_space<smem>>
    %213 = arith.index_cast %212 : i32 to index
    %c0_159 = arith.constant 0 : index
    %214 = vector.load %arg1[%213, %c0_159] : memref<16x128xf32, #tpu.memory_space<vmem>>, vector<1x128xf32>
    %c53_160 = arith.constant 53 : index
    %c0_161 = arith.constant 0 : index
    %215 = vector.load %arg13[%c53_160, %c0_161] : memref<64x128xf32, #tpu.memory_space<vmem>>, vector<1x128xf32>
    tpu.vector_store %arg13[%c53_160, %c0_161], %214 {strides = array<i32>} : memref<64x128xf32, #tpu.memory_space<vmem>>, vector<1x128xf32>,
    %c54 = arith.constant 54 : index
    %216 = memref.load %arg0[%c54] : memref<64xi32, #tpu.memory_space<smem>>
    %217 = arith.index_cast %216 : i32 to index
    %c0_162 = arith.constant 0 : index
    %218 = vector.load %arg1[%217, %c0_162] : memref<16x128xf32, #tpu.memory_space<vmem>>, vector<1x128xf32>
    %c54_163 = arith.constant 54 : index
    %c0_164 = arith.constant 0 : index
    %219 = vector.load %arg13[%c54_163, %c0_164] : memref<64x128xf32, #tpu.memory_space<vmem>>, vector<1x128xf32>
    tpu.vector_store %arg13[%c54_163, %c0_164], %218 {strides = array<i32>} : memref<64x128xf32, #tpu.memory_space<vmem>>, vector<1x128xf32>,
    %c55 = arith.constant 55 : index
    %220 = memref.load %arg0[%c55] : memref<64xi32, #tpu.memory_space<smem>>
    %221 = arith.index_cast %220 : i32 to index
    %c0_165 = arith.constant 0 : index
    %222 = vector.load %arg1[%221, %c0_165] : memref<16x128xf32, #tpu.memory_space<vmem>>, vector<1x128xf32>
    %c55_166 = arith.constant 55 : index
    %c0_167 = arith.constant 0 : index
    %223 = vector.load %arg13[%c55_166, %c0_167] : memref<64x128xf32, #tpu.memory_space<vmem>>, vector<1x128xf32>
    tpu.vector_store %arg13[%c55_166, %c0_167], %222 {strides = array<i32>} : memref<64x128xf32, #tpu.memory_space<vmem>>, vector<1x128xf32>,
    %c56 = arith.constant 56 : index
    %224 = memref.load %arg0[%c56] : memref<64xi32, #tpu.memory_space<smem>>
    %225 = arith.index_cast %224 : i32 to index
    %c0_168 = arith.constant 0 : index
    %226 = vector.load %arg1[%225, %c0_168] : memref<16x128xf32, #tpu.memory_space<vmem>>, vector<1x128xf32>
    %c56_169 = arith.constant 56 : index
    %c0_170 = arith.constant 0 : index
    %227 = vector.load %arg13[%c56_169, %c0_170] : memref<64x128xf32, #tpu.memory_space<vmem>>, vector<1x128xf32>
    tpu.vector_store %arg13[%c56_169, %c0_170], %226 {strides = array<i32>} : memref<64x128xf32, #tpu.memory_space<vmem>>, vector<1x128xf32>,
    %c57 = arith.constant 57 : index
    %228 = memref.load %arg0[%c57] : memref<64xi32, #tpu.memory_space<smem>>
    %229 = arith.index_cast %228 : i32 to index
    %c0_171 = arith.constant 0 : index
    %230 = vector.load %arg1[%229, %c0_171] : memref<16x128xf32, #tpu.memory_space<vmem>>, vector<1x128xf32>
    %c57_172 = arith.constant 57 : index
    %c0_173 = arith.constant 0 : index
    %231 = vector.load %arg13[%c57_172, %c0_173] : memref<64x128xf32, #tpu.memory_space<vmem>>, vector<1x128xf32>
    tpu.vector_store %arg13[%c57_172, %c0_173], %230 {strides = array<i32>} : memref<64x128xf32, #tpu.memory_space<vmem>>, vector<1x128xf32>,
    %c58 = arith.constant 58 : index
    %232 = memref.load %arg0[%c58] : memref<64xi32, #tpu.memory_space<smem>>
    %233 = arith.index_cast %232 : i32 to index
    %c0_174 = arith.constant 0 : index
    %234 = vector.load %arg1[%233, %c0_174] : memref<16x128xf32, #tpu.memory_space<vmem>>, vector<1x128xf32>
    %c58_175 = arith.constant 58 : index
    %c0_176 = arith.constant 0 : index
    %235 = vector.load %arg13[%c58_175, %c0_176] : memref<64x128xf32, #tpu.memory_space<vmem>>, vector<1x128xf32>
    tpu.vector_store %arg13[%c58_175, %c0_176], %234 {strides = array<i32>} : memref<64x128xf32, #tpu.memory_space<vmem>>, vector<1x128xf32>,
    %c59 = arith.constant 59 : index
    %236 = memref.load %arg0[%c59] : memref<64xi32, #tpu.memory_space<smem>>
    %237 = arith.index_cast %236 : i32 to index
    %c0_177 = arith.constant 0 : index
    %238 = vector.load %arg1[%237, %c0_177] : memref<16x128xf32, #tpu.memory_space<vmem>>, vector<1x128xf32>
    %c59_178 = arith.constant 59 : index
    %c0_179 = arith.constant 0 : index
    %239 = vector.load %arg13[%c59_178, %c0_179] : memref<64x128xf32, #tpu.memory_space<vmem>>, vector<1x128xf32>
    tpu.vector_store %arg13[%c59_178, %c0_179], %238 {strides = array<i32>} : memref<64x128xf32, #tpu.memory_space<vmem>>, vector<1x128xf32>,
    %c60 = arith.constant 60 : index
    %240 = memref.load %arg0[%c60] : memref<64xi32, #tpu.memory_space<smem>>
    %241 = arith.index_cast %240 : i32 to index
    %c0_180 = arith.constant 0 : index
    %242 = vector.load %arg1[%241, %c0_180] : memref<16x128xf32, #tpu.memory_space<vmem>>, vector<1x128xf32>
    %c60_181 = arith.constant 60 : index
    %c0_182 = arith.constant 0 : index
    %243 = vector.load %arg13[%c60_181, %c0_182] : memref<64x128xf32, #tpu.memory_space<vmem>>, vector<1x128xf32>
    tpu.vector_store %arg13[%c60_181, %c0_182], %242 {strides = array<i32>} : memref<64x128xf32, #tpu.memory_space<vmem>>, vector<1x128xf32>,
    %c61 = arith.constant 61 : index
    %244 = memref.load %arg0[%c61] : memref<64xi32, #tpu.memory_space<smem>>
    %245 = arith.index_cast %244 : i32 to index
    %c0_183 = arith.constant 0 : index
    %246 = vector.load %arg1[%245, %c0_183] : memref<16x128xf32, #tpu.memory_space<vmem>>, vector<1x128xf32>
    %c61_184 = arith.constant 61 : index
    %c0_185 = arith.constant 0 : index
    %247 = vector.load %arg13[%c61_184, %c0_185] : memref<64x128xf32, #tpu.memory_space<vmem>>, vector<1x128xf32>
    tpu.vector_store %arg13[%c61_184, %c0_185], %246 {strides = array<i32>} : memref<64x128xf32, #tpu.memory_space<vmem>>, vector<1x128xf32>,
    %c62 = arith.constant 62 : index
    %248 = memref.load %arg0[%c62] : memref<64xi32, #tpu.memory_space<smem>>
    %249 = arith.index_cast %248 : i32 to index
    %c0_186 = arith.constant 0 : index
    %250 = vector.load %arg1[%249, %c0_186] : memref<16x128xf32, #tpu.memory_space<vmem>>, vector<1x128xf32>
    %c62_187 = arith.constant 62 : index
    %c0_188 = arith.constant 0 : index
    %251 = vector.load %arg13[%c62_187, %c0_188] : memref<64x128xf32, #tpu.memory_space<vmem>>, vector<1x128xf32>
    tpu.vector_store %arg13[%c62_187, %c0_188], %250 {strides = array<i32>} : memref<64x128xf32, #tpu.memory_space<vmem>>, vector<1x128xf32>,
    %c63 = arith.constant 63 : index
    %252 = memref.load %arg0[%c63] : memref<64xi32, #tpu.memory_space<smem>>
    %253 = arith.index_cast %252 : i32 to index
    %c0_189 = arith.constant 0 : index
    %254 = vector.load %arg1[%253, %c0_189] : memref<16x128xf32, #tpu.memory_space<vmem>>, vector<1x128xf32>
    %c63_190 = arith.constant 63 : index
    %c0_191 = arith.constant 0 : index
    %255 = vector.load %arg13[%c63_190, %c0_191] : memref<64x128xf32, #tpu.memory_space<vmem>>, vector<1x128xf32>
    tpu.vector_store %arg13[%c63_190, %c0_191], %254 {strides = array<i32>} : memref<64x128xf32, #tpu.memory_space<vmem>>, vector<1x128xf32>,
    %c0_192 = arith.constant 0 : index
    %c0_193 = arith.constant 0 : index
    %c0_194 = arith.constant 0 : index
    %256 = vector.load %arg8[%c0_192, %c0_193, %c0_194] : memref<2x8x32xf32, #tpu.memory_space<vmem>>, vector<1x8x32xf32>
    %257 = vector.shape_cast %256 : vector<1x8x32xf32> to vector<8x32xf32>
    %c0_195 = arith.constant 0 : index
    %c0_196 = arith.constant 0 : index
    %c0_197 = arith.constant 0 : index
    %258 = vector.load %arg9[%c0_195, %c0_196, %c0_197] : memref<2x8x32xf32, #tpu.memory_space<vmem>>, vector<1x8x32xf32>
    %259 = vector.shape_cast %258 : vector<1x8x32xf32> to vector<8x32xf32>
    %c0_198 = arith.constant 0 : index
    %c0_199 = arith.constant 0 : index
    %260 = vector.load %arg13[%c0_198, %c0_199] : memref<64x128xf32, #tpu.memory_space<vmem>>, vector<8x128xf32>
    %261 = arith.truncf %257 : vector<8x32xf32> to vector<8x32xbf16>
    %c0_200 = arith.constant 0 : index
    %c0_201 = arith.constant 0 : index
    %262 = vector.load %arg4[%c0_200, %c0_201] : memref<32x128xbf16, #tpu.memory_space<vmem>>, vector<32x128xbf16>
    %cst = arith.constant dense<0.000000e+00> : vector<8x128xf32>
    %263 = tpu.matmul %261, %262, %cst {dimension_numbers = #tpu.dot_dimension_numbers<[1], [0], [0], [1], [0, 0, 1, 1], [], []>} : vector<8x32xbf16>, vector<32x128xbf16>, vector<8x128xf32> -> vector<8x128xf32>
    %264 = arith.addf %260, %263 : vector<8x128xf32>
    %265 = arith.negf %264 : vector<8x128xf32>
    %266 = math.exp %265 : vector<8x128xf32>
    %cst_202 = arith.constant 1.000000e+00 : f32
    %267 = vector.broadcast %cst_202 : f32 to vector<8x128xf32>
    %268 = arith.addf %267, %266 : vector<8x128xf32>
    %269 = arith.divf %267, %268 : vector<8x128xf32>
    %270 = math.tanh %264 : vector<8x128xf32>
    %271 = vector.extract_strided_slice %269 {offsets = [0, 0], sizes = [8, 32], strides = [1, 1]} : vector<8x128xf32> to vector<8x32xf32>
    %272 = vector.extract_strided_slice %269 {offsets = [0, 32], sizes = [8, 32], strides = [1, 1]} : vector<8x128xf32> to vector<8x32xf32>
    %273 = vector.extract_strided_slice %270 {offsets = [0, 64], sizes = [8, 32], strides = [1, 1]} : vector<8x128xf32> to vector<8x32xf32>
    %274 = vector.extract_strided_slice %269 {offsets = [0, 96], sizes = [8, 32], strides = [1, 1]} : vector<8x128xf32> to vector<8x32xf32>
    %275 = arith.mulf %272, %259 : vector<8x32xf32>
    %276 = arith.mulf %271, %273 : vector<8x32xf32>
    %277 = arith.addf %275, %276 : vector<8x32xf32>
    %278 = math.tanh %277 : vector<8x32xf32>
    %279 = arith.mulf %274, %278 : vector<8x32xf32>
    %280 = arith.truncf %279 : vector<8x32xf32> to vector<8x32xbf16>
    %c0_203 = arith.constant 0 : index
    %c0_204 = arith.constant 0 : index
    %281 = vector.load %arg2[%c0_203, %c0_204] : memref<32x128xbf16, #tpu.memory_space<vmem>>, vector<32x128xbf16>
    %cst_205 = arith.constant dense<0.000000e+00> : vector<8x128xf32>
    %282 = tpu.matmul %280, %281, %cst_205 {dimension_numbers = #tpu.dot_dimension_numbers<[1], [0], [0], [1], [0, 0, 1, 1], [], []>} : vector<8x32xbf16>, vector<32x128xbf16>, vector<8x128xf32> -> vector<8x128xf32>
    %c0_206 = arith.constant 0 : index
    %c0_207 = arith.constant 0 : index
    %283 = vector.load %arg3[%c0_206, %c0_207] : memref<1x128xf32, #tpu.memory_space<vmem>>, vector<1x128xf32>
    %284 = vector.broadcast %283 : vector<1x128xf32> to vector<8x128xf32>
    %285 = arith.addf %282, %284 : vector<8x128xf32>
    %c0_208 = arith.constant 0 : index
    %c0_209 = arith.constant 0 : index
    %286 = vector.load %arg13[%c0_208, %c0_209] : memref<64x128xf32, #tpu.memory_space<vmem>>, vector<8x128xf32>
    tpu.vector_store %arg13[%c0_208, %c0_209], %285 {strides = array<i32>} : memref<64x128xf32, #tpu.memory_space<vmem>>, vector<8x128xf32>,
    %c8_210 = arith.constant 8 : index
    %c0_211 = arith.constant 0 : index
    %287 = vector.load %arg13[%c8_210, %c0_211] : memref<64x128xf32, #tpu.memory_space<vmem>>, vector<8x128xf32>
    %288 = arith.truncf %279 : vector<8x32xf32> to vector<8x32xbf16>
    %c0_212 = arith.constant 0 : index
    %c0_213 = arith.constant 0 : index
    %289 = vector.load %arg4[%c0_212, %c0_213] : memref<32x128xbf16, #tpu.memory_space<vmem>>, vector<32x128xbf16>
    %cst_214 = arith.constant dense<0.000000e+00> : vector<8x128xf32>
    %290 = tpu.matmul %288, %289, %cst_214 {dimension_numbers = #tpu.dot_dimension_numbers<[1], [0], [0], [1], [0, 0, 1, 1], [], []>} : vector<8x32xbf16>, vector<32x128xbf16>, vector<8x128xf32> -> vector<8x128xf32>
    %291 = arith.addf %287, %290 : vector<8x128xf32>
    %292 = arith.negf %291 : vector<8x128xf32>
    %293 = math.exp %292 : vector<8x128xf32>
    %cst_215 = arith.constant 1.000000e+00 : f32
    %294 = vector.broadcast %cst_215 : f32 to vector<8x128xf32>
    %295 = arith.addf %294, %293 : vector<8x128xf32>
    %296 = arith.divf %294, %295 : vector<8x128xf32>
    %297 = math.tanh %291 : vector<8x128xf32>
    %298 = vector.extract_strided_slice %296 {offsets = [0, 0], sizes = [8, 32], strides = [1, 1]} : vector<8x128xf32> to vector<8x32xf32>
    %299 = vector.extract_strided_slice %296 {offsets = [0, 32], sizes = [8, 32], strides = [1, 1]} : vector<8x128xf32> to vector<8x32xf32>
    %300 = vector.extract_strided_slice %297 {offsets = [0, 64], sizes = [8, 32], strides = [1, 1]} : vector<8x128xf32> to vector<8x32xf32>
    %301 = vector.extract_strided_slice %296 {offsets = [0, 96], sizes = [8, 32], strides = [1, 1]} : vector<8x128xf32> to vector<8x32xf32>
    %302 = arith.mulf %299, %277 : vector<8x32xf32>
    %303 = arith.mulf %298, %300 : vector<8x32xf32>
    %304 = arith.addf %302, %303 : vector<8x32xf32>
    %305 = math.tanh %304 : vector<8x32xf32>
    %306 = arith.mulf %301, %305 : vector<8x32xf32>
    %307 = arith.truncf %306 : vector<8x32xf32> to vector<8x32xbf16>
    %c0_216 = arith.constant 0 : index
    %c0_217 = arith.constant 0 : index
    %308 = vector.load %arg2[%c0_216, %c0_217] : memref<32x128xbf16, #tpu.memory_space<vmem>>, vector<32x128xbf16>
    %cst_218 = arith.constant dense<0.000000e+00> : vector<8x128xf32>
    %309 = tpu.matmul %307, %308, %cst_218 {dimension_numbers = #tpu.dot_dimension_numbers<[1], [0], [0], [1], [0, 0, 1, 1], [], []>} : vector<8x32xbf16>, vector<32x128xbf16>, vector<8x128xf32> -> vector<8x128xf32>
    %c0_219 = arith.constant 0 : index
    %c0_220 = arith.constant 0 : index
    %310 = vector.load %arg3[%c0_219, %c0_220] : memref<1x128xf32, #tpu.memory_space<vmem>>, vector<1x128xf32>
    %311 = vector.broadcast %310 : vector<1x128xf32> to vector<8x128xf32>
    %312 = arith.addf %309, %311 : vector<8x128xf32>
    %c8_221 = arith.constant 8 : index
    %c0_222 = arith.constant 0 : index
    %313 = vector.load %arg13[%c8_221, %c0_222] : memref<64x128xf32, #tpu.memory_space<vmem>>, vector<8x128xf32>
    tpu.vector_store %arg13[%c8_221, %c0_222], %312 {strides = array<i32>} : memref<64x128xf32, #tpu.memory_space<vmem>>, vector<8x128xf32>,
    %c16_223 = arith.constant 16 : index
    %c0_224 = arith.constant 0 : index
    %314 = vector.load %arg13[%c16_223, %c0_224] : memref<64x128xf32, #tpu.memory_space<vmem>>, vector<8x128xf32>
    %315 = arith.truncf %306 : vector<8x32xf32> to vector<8x32xbf16>
    %c0_225 = arith.constant 0 : index
    %c0_226 = arith.constant 0 : index
    %316 = vector.load %arg4[%c0_225, %c0_226] : memref<32x128xbf16, #tpu.memory_space<vmem>>, vector<32x128xbf16>
    %cst_227 = arith.constant dense<0.000000e+00> : vector<8x128xf32>
    %317 = tpu.matmul %315, %316, %cst_227 {dimension_numbers = #tpu.dot_dimension_numbers<[1], [0], [0], [1], [0, 0, 1, 1], [], []>} : vector<8x32xbf16>, vector<32x128xbf16>, vector<8x128xf32> -> vector<8x128xf32>
    %318 = arith.addf %314, %317 : vector<8x128xf32>
    %319 = arith.negf %318 : vector<8x128xf32>
    %320 = math.exp %319 : vector<8x128xf32>
    %cst_228 = arith.constant 1.000000e+00 : f32
    %321 = vector.broadcast %cst_228 : f32 to vector<8x128xf32>
    %322 = arith.addf %321, %320 : vector<8x128xf32>
    %323 = arith.divf %321, %322 : vector<8x128xf32>
    %324 = math.tanh %318 : vector<8x128xf32>
    %325 = vector.extract_strided_slice %323 {offsets = [0, 0], sizes = [8, 32], strides = [1, 1]} : vector<8x128xf32> to vector<8x32xf32>
    %326 = vector.extract_strided_slice %323 {offsets = [0, 32], sizes = [8, 32], strides = [1, 1]} : vector<8x128xf32> to vector<8x32xf32>
    %327 = vector.extract_strided_slice %324 {offsets = [0, 64], sizes = [8, 32], strides = [1, 1]} : vector<8x128xf32> to vector<8x32xf32>
    %328 = vector.extract_strided_slice %323 {offsets = [0, 96], sizes = [8, 32], strides = [1, 1]} : vector<8x128xf32> to vector<8x32xf32>
    %329 = arith.mulf %326, %304 : vector<8x32xf32>
    %330 = arith.mulf %325, %327 : vector<8x32xf32>
    %331 = arith.addf %329, %330 : vector<8x32xf32>
    %332 = math.tanh %331 : vector<8x32xf32>
    %333 = arith.mulf %328, %332 : vector<8x32xf32>
    %334 = arith.truncf %333 : vector<8x32xf32> to vector<8x32xbf16>
    %c0_229 = arith.constant 0 : index
    %c0_230 = arith.constant 0 : index
    %335 = vector.load %arg2[%c0_229, %c0_230] : memref<32x128xbf16, #tpu.memory_space<vmem>>, vector<32x128xbf16>
    %cst_231 = arith.constant dense<0.000000e+00> : vector<8x128xf32>
    %336 = tpu.matmul %334, %335, %cst_231 {dimension_numbers = #tpu.dot_dimension_numbers<[1], [0], [0], [1], [0, 0, 1, 1], [], []>} : vector<8x32xbf16>, vector<32x128xbf16>, vector<8x128xf32> -> vector<8x128xf32>
    %c0_232 = arith.constant 0 : index
    %c0_233 = arith.constant 0 : index
    %337 = vector.load %arg3[%c0_232, %c0_233] : memref<1x128xf32, #tpu.memory_space<vmem>>, vector<1x128xf32>
    %338 = vector.broadcast %337 : vector<1x128xf32> to vector<8x128xf32>
    %339 = arith.addf %336, %338 : vector<8x128xf32>
    %c16_234 = arith.constant 16 : index
    %c0_235 = arith.constant 0 : index
    %340 = vector.load %arg13[%c16_234, %c0_235] : memref<64x128xf32, #tpu.memory_space<vmem>>, vector<8x128xf32>
    tpu.vector_store %arg13[%c16_234, %c0_235], %339 {strides = array<i32>} : memref<64x128xf32, #tpu.memory_space<vmem>>, vector<8x128xf32>,
    %c24_236 = arith.constant 24 : index
    %c0_237 = arith.constant 0 : index
    %341 = vector.load %arg13[%c24_236, %c0_237] : memref<64x128xf32, #tpu.memory_space<vmem>>, vector<8x128xf32>
    %342 = arith.truncf %333 : vector<8x32xf32> to vector<8x32xbf16>
    %c0_238 = arith.constant 0 : index
    %c0_239 = arith.constant 0 : index
    %343 = vector.load %arg4[%c0_238, %c0_239] : memref<32x128xbf16, #tpu.memory_space<vmem>>, vector<32x128xbf16>
    %cst_240 = arith.constant dense<0.000000e+00> : vector<8x128xf32>
    %344 = tpu.matmul %342, %343, %cst_240 {dimension_numbers = #tpu.dot_dimension_numbers<[1], [0], [0], [1], [0, 0, 1, 1], [], []>} : vector<8x32xbf16>, vector<32x128xbf16>, vector<8x128xf32> -> vector<8x128xf32>
    %345 = arith.addf %341, %344 : vector<8x128xf32>
    %346 = arith.negf %345 : vector<8x128xf32>
    %347 = math.exp %346 : vector<8x128xf32>
    %cst_241 = arith.constant 1.000000e+00 : f32
    %348 = vector.broadcast %cst_241 : f32 to vector<8x128xf32>
    %349 = arith.addf %348, %347 : vector<8x128xf32>
    %350 = arith.divf %348, %349 : vector<8x128xf32>
    %351 = math.tanh %345 : vector<8x128xf32>
    %352 = vector.extract_strided_slice %350 {offsets = [0, 0], sizes = [8, 32], strides = [1, 1]} : vector<8x128xf32> to vector<8x32xf32>
    %353 = vector.extract_strided_slice %350 {offsets = [0, 32], sizes = [8, 32], strides = [1, 1]} : vector<8x128xf32> to vector<8x32xf32>
    %354 = vector.extract_strided_slice %351 {offsets = [0, 64], sizes = [8, 32], strides = [1, 1]} : vector<8x128xf32> to vector<8x32xf32>
    %355 = vector.extract_strided_slice %350 {offsets = [0, 96], sizes = [8, 32], strides = [1, 1]} : vector<8x128xf32> to vector<8x32xf32>
    %356 = arith.mulf %353, %331 : vector<8x32xf32>
    %357 = arith.mulf %352, %354 : vector<8x32xf32>
    %358 = arith.addf %356, %357 : vector<8x32xf32>
    %359 = math.tanh %358 : vector<8x32xf32>
    %360 = arith.mulf %355, %359 : vector<8x32xf32>
    %361 = arith.truncf %360 : vector<8x32xf32> to vector<8x32xbf16>
    %c0_242 = arith.constant 0 : index
    %c0_243 = arith.constant 0 : index
    %362 = vector.load %arg2[%c0_242, %c0_243] : memref<32x128xbf16, #tpu.memory_space<vmem>>, vector<32x128xbf16>
    %cst_244 = arith.constant dense<0.000000e+00> : vector<8x128xf32>
    %363 = tpu.matmul %361, %362, %cst_244 {dimension_numbers = #tpu.dot_dimension_numbers<[1], [0], [0], [1], [0, 0, 1, 1], [], []>} : vector<8x32xbf16>, vector<32x128xbf16>, vector<8x128xf32> -> vector<8x128xf32>
    %c0_245 = arith.constant 0 : index
    %c0_246 = arith.constant 0 : index
    %364 = vector.load %arg3[%c0_245, %c0_246] : memref<1x128xf32, #tpu.memory_space<vmem>>, vector<1x128xf32>
    %365 = vector.broadcast %364 : vector<1x128xf32> to vector<8x128xf32>
    %366 = arith.addf %363, %365 : vector<8x128xf32>
    %c24_247 = arith.constant 24 : index
    %c0_248 = arith.constant 0 : index
    %367 = vector.load %arg13[%c24_247, %c0_248] : memref<64x128xf32, #tpu.memory_space<vmem>>, vector<8x128xf32>
    tpu.vector_store %arg13[%c24_247, %c0_248], %366 {strides = array<i32>} : memref<64x128xf32, #tpu.memory_space<vmem>>, vector<8x128xf32>,
    %c32_249 = arith.constant 32 : index
    %c0_250 = arith.constant 0 : index
    %368 = vector.load %arg13[%c32_249, %c0_250] : memref<64x128xf32, #tpu.memory_space<vmem>>, vector<8x128xf32>
    %369 = arith.truncf %360 : vector<8x32xf32> to vector<8x32xbf16>
    %c0_251 = arith.constant 0 : index
    %c0_252 = arith.constant 0 : index
    %370 = vector.load %arg4[%c0_251, %c0_252] : memref<32x128xbf16, #tpu.memory_space<vmem>>, vector<32x128xbf16>
    %cst_253 = arith.constant dense<0.000000e+00> : vector<8x128xf32>
    %371 = tpu.matmul %369, %370, %cst_253 {dimension_numbers = #tpu.dot_dimension_numbers<[1], [0], [0], [1], [0, 0, 1, 1], [], []>} : vector<8x32xbf16>, vector<32x128xbf16>, vector<8x128xf32> -> vector<8x128xf32>
    %372 = arith.addf %368, %371 : vector<8x128xf32>
    %373 = arith.negf %372 : vector<8x128xf32>
    %374 = math.exp %373 : vector<8x128xf32>
    %cst_254 = arith.constant 1.000000e+00 : f32
    %375 = vector.broadcast %cst_254 : f32 to vector<8x128xf32>
    %376 = arith.addf %375, %374 : vector<8x128xf32>
    %377 = arith.divf %375, %376 : vector<8x128xf32>
    %378 = math.tanh %372 : vector<8x128xf32>
    %379 = vector.extract_strided_slice %377 {offsets = [0, 0], sizes = [8, 32], strides = [1, 1]} : vector<8x128xf32> to vector<8x32xf32>
    %380 = vector.extract_strided_slice %377 {offsets = [0, 32], sizes = [8, 32], strides = [1, 1]} : vector<8x128xf32> to vector<8x32xf32>
    %381 = vector.extract_strided_slice %378 {offsets = [0, 64], sizes = [8, 32], strides = [1, 1]} : vector<8x128xf32> to vector<8x32xf32>
    %382 = vector.extract_strided_slice %377 {offsets = [0, 96], sizes = [8, 32], strides = [1, 1]} : vector<8x128xf32> to vector<8x32xf32>
    %383 = arith.mulf %380, %358 : vector<8x32xf32>
    %384 = arith.mulf %379, %381 : vector<8x32xf32>
    %385 = arith.addf %383, %384 : vector<8x32xf32>
    %386 = math.tanh %385 : vector<8x32xf32>
    %387 = arith.mulf %382, %386 : vector<8x32xf32>
    %388 = arith.truncf %387 : vector<8x32xf32> to vector<8x32xbf16>
    %c0_255 = arith.constant 0 : index
    %c0_256 = arith.constant 0 : index
    %389 = vector.load %arg2[%c0_255, %c0_256] : memref<32x128xbf16, #tpu.memory_space<vmem>>, vector<32x128xbf16>
    %cst_257 = arith.constant dense<0.000000e+00> : vector<8x128xf32>
    %390 = tpu.matmul %388, %389, %cst_257 {dimension_numbers = #tpu.dot_dimension_numbers<[1], [0], [0], [1], [0, 0, 1, 1], [], []>} : vector<8x32xbf16>, vector<32x128xbf16>, vector<8x128xf32> -> vector<8x128xf32>
    %c0_258 = arith.constant 0 : index
    %c0_259 = arith.constant 0 : index
    %391 = vector.load %arg3[%c0_258, %c0_259] : memref<1x128xf32, #tpu.memory_space<vmem>>, vector<1x128xf32>
    %392 = vector.broadcast %391 : vector<1x128xf32> to vector<8x128xf32>
    %393 = arith.addf %390, %392 : vector<8x128xf32>
    %c32_260 = arith.constant 32 : index
    %c0_261 = arith.constant 0 : index
    %394 = vector.load %arg13[%c32_260, %c0_261] : memref<64x128xf32, #tpu.memory_space<vmem>>, vector<8x128xf32>
    tpu.vector_store %arg13[%c32_260, %c0_261], %393 {strides = array<i32>} : memref<64x128xf32, #tpu.memory_space<vmem>>, vector<8x128xf32>,
    %c40_262 = arith.constant 40 : index
    %c0_263 = arith.constant 0 : index
    %395 = vector.load %arg13[%c40_262, %c0_263] : memref<64x128xf32, #tpu.memory_space<vmem>>, vector<8x128xf32>
    %396 = arith.truncf %387 : vector<8x32xf32> to vector<8x32xbf16>
    %c0_264 = arith.constant 0 : index
    %c0_265 = arith.constant 0 : index
    %397 = vector.load %arg4[%c0_264, %c0_265] : memref<32x128xbf16, #tpu.memory_space<vmem>>, vector<32x128xbf16>
    %cst_266 = arith.constant dense<0.000000e+00> : vector<8x128xf32>
    %398 = tpu.matmul %396, %397, %cst_266 {dimension_numbers = #tpu.dot_dimension_numbers<[1], [0], [0], [1], [0, 0, 1, 1], [], []>} : vector<8x32xbf16>, vector<32x128xbf16>, vector<8x128xf32> -> vector<8x128xf32>
    %399 = arith.addf %395, %398 : vector<8x128xf32>
    %400 = arith.negf %399 : vector<8x128xf32>
    %401 = math.exp %400 : vector<8x128xf32>
    %cst_267 = arith.constant 1.000000e+00 : f32
    %402 = vector.broadcast %cst_267 : f32 to vector<8x128xf32>
    %403 = arith.addf %402, %401 : vector<8x128xf32>
    %404 = arith.divf %402, %403 : vector<8x128xf32>
    %405 = math.tanh %399 : vector<8x128xf32>
    %406 = vector.extract_strided_slice %404 {offsets = [0, 0], sizes = [8, 32], strides = [1, 1]} : vector<8x128xf32> to vector<8x32xf32>
    %407 = vector.extract_strided_slice %404 {offsets = [0, 32], sizes = [8, 32], strides = [1, 1]} : vector<8x128xf32> to vector<8x32xf32>
    %408 = vector.extract_strided_slice %405 {offsets = [0, 64], sizes = [8, 32], strides = [1, 1]} : vector<8x128xf32> to vector<8x32xf32>
    %409 = vector.extract_strided_slice %404 {offsets = [0, 96], sizes = [8, 32], strides = [1, 1]} : vector<8x128xf32> to vector<8x32xf32>
    %410 = arith.mulf %407, %385 : vector<8x32xf32>
    %411 = arith.mulf %406, %408 : vector<8x32xf32>
    %412 = arith.addf %410, %411 : vector<8x32xf32>
    %413 = math.tanh %412 : vector<8x32xf32>
    %414 = arith.mulf %409, %413 : vector<8x32xf32>
    %415 = arith.truncf %414 : vector<8x32xf32> to vector<8x32xbf16>
    %c0_268 = arith.constant 0 : index
    %c0_269 = arith.constant 0 : index
    %416 = vector.load %arg2[%c0_268, %c0_269] : memref<32x128xbf16, #tpu.memory_space<vmem>>, vector<32x128xbf16>
    %cst_270 = arith.constant dense<0.000000e+00> : vector<8x128xf32>
    %417 = tpu.matmul %415, %416, %cst_270 {dimension_numbers = #tpu.dot_dimension_numbers<[1], [0], [0], [1], [0, 0, 1, 1], [], []>} : vector<8x32xbf16>, vector<32x128xbf16>, vector<8x128xf32> -> vector<8x128xf32>
    %c0_271 = arith.constant 0 : index
    %c0_272 = arith.constant 0 : index
    %418 = vector.load %arg3[%c0_271, %c0_272] : memref<1x128xf32, #tpu.memory_space<vmem>>, vector<1x128xf32>
    %419 = vector.broadcast %418 : vector<1x128xf32> to vector<8x128xf32>
    %420 = arith.addf %417, %419 : vector<8x128xf32>
    %c40_273 = arith.constant 40 : index
    %c0_274 = arith.constant 0 : index
    %421 = vector.load %arg13[%c40_273, %c0_274] : memref<64x128xf32, #tpu.memory_space<vmem>>, vector<8x128xf32>
    tpu.vector_store %arg13[%c40_273, %c0_274], %420 {strides = array<i32>} : memref<64x128xf32, #tpu.memory_space<vmem>>, vector<8x128xf32>,
    %c48_275 = arith.constant 48 : index
    %c0_276 = arith.constant 0 : index
    %422 = vector.load %arg13[%c48_275, %c0_276] : memref<64x128xf32, #tpu.memory_space<vmem>>, vector<8x128xf32>
    %423 = arith.truncf %414 : vector<8x32xf32> to vector<8x32xbf16>
    %c0_277 = arith.constant 0 : index
    %c0_278 = arith.constant 0 : index
    %424 = vector.load %arg4[%c0_277, %c0_278] : memref<32x128xbf16, #tpu.memory_space<vmem>>, vector<32x128xbf16>
    %cst_279 = arith.constant dense<0.000000e+00> : vector<8x128xf32>
    %425 = tpu.matmul %423, %424, %cst_279 {dimension_numbers = #tpu.dot_dimension_numbers<[1], [0], [0], [1], [0, 0, 1, 1], [], []>} : vector<8x32xbf16>, vector<32x128xbf16>, vector<8x128xf32> -> vector<8x128xf32>
    %426 = arith.addf %422, %425 : vector<8x128xf32>
    %427 = arith.negf %426 : vector<8x128xf32>
    %428 = math.exp %427 : vector<8x128xf32>
    %cst_280 = arith.constant 1.000000e+00 : f32
    %429 = vector.broadcast %cst_280 : f32 to vector<8x128xf32>
    %430 = arith.addf %429, %428 : vector<8x128xf32>
    %431 = arith.divf %429, %430 : vector<8x128xf32>
    %432 = math.tanh %426 : vector<8x128xf32>
    %433 = vector.extract_strided_slice %431 {offsets = [0, 0], sizes = [8, 32], strides = [1, 1]} : vector<8x128xf32> to vector<8x32xf32>
    %434 = vector.extract_strided_slice %431 {offsets = [0, 32], sizes = [8, 32], strides = [1, 1]} : vector<8x128xf32> to vector<8x32xf32>
    %435 = vector.extract_strided_slice %432 {offsets = [0, 64], sizes = [8, 32], strides = [1, 1]} : vector<8x128xf32> to vector<8x32xf32>
    %436 = vector.extract_strided_slice %431 {offsets = [0, 96], sizes = [8, 32], strides = [1, 1]} : vector<8x128xf32> to vector<8x32xf32>
    %437 = arith.mulf %434, %412 : vector<8x32xf32>
    %438 = arith.mulf %433, %435 : vector<8x32xf32>
    %439 = arith.addf %437, %438 : vector<8x32xf32>
    %440 = math.tanh %439 : vector<8x32xf32>
    %441 = arith.mulf %436, %440 : vector<8x32xf32>
    %442 = arith.truncf %441 : vector<8x32xf32> to vector<8x32xbf16>
    %c0_281 = arith.constant 0 : index
    %c0_282 = arith.constant 0 : index
    %443 = vector.load %arg2[%c0_281, %c0_282] : memref<32x128xbf16, #tpu.memory_space<vmem>>, vector<32x128xbf16>
    %cst_283 = arith.constant dense<0.000000e+00> : vector<8x128xf32>
    %444 = tpu.matmul %442, %443, %cst_283 {dimension_numbers = #tpu.dot_dimension_numbers<[1], [0], [0], [1], [0, 0, 1, 1], [], []>} : vector<8x32xbf16>, vector<32x128xbf16>, vector<8x128xf32> -> vector<8x128xf32>
    %c0_284 = arith.constant 0 : index
    %c0_285 = arith.constant 0 : index
    %445 = vector.load %arg3[%c0_284, %c0_285] : memref<1x128xf32, #tpu.memory_space<vmem>>, vector<1x128xf32>
    %446 = vector.broadcast %445 : vector<1x128xf32> to vector<8x128xf32>
    %447 = arith.addf %444, %446 : vector<8x128xf32>
    %c48_286 = arith.constant 48 : index
    %c0_287 = arith.constant 0 : index
    %448 = vector.load %arg13[%c48_286, %c0_287] : memref<64x128xf32, #tpu.memory_space<vmem>>, vector<8x128xf32>
    tpu.vector_store %arg13[%c48_286, %c0_287], %447 {strides = array<i32>} : memref<64x128xf32, #tpu.memory_space<vmem>>, vector<8x128xf32>,
    %c56_288 = arith.constant 56 : index
    %c0_289 = arith.constant 0 : index
    %449 = vector.load %arg13[%c56_288, %c0_289] : memref<64x128xf32, #tpu.memory_space<vmem>>, vector<8x128xf32>
    %450 = arith.truncf %441 : vector<8x32xf32> to vector<8x32xbf16>
    %c0_290 = arith.constant 0 : index
    %c0_291 = arith.constant 0 : index
    %451 = vector.load %arg4[%c0_290, %c0_291] : memref<32x128xbf16, #tpu.memory_space<vmem>>, vector<32x128xbf16>
    %cst_292 = arith.constant dense<0.000000e+00> : vector<8x128xf32>
    %452 = tpu.matmul %450, %451, %cst_292 {dimension_numbers = #tpu.dot_dimension_numbers<[1], [0], [0], [1], [0, 0, 1, 1], [], []>} : vector<8x32xbf16>, vector<32x128xbf16>, vector<8x128xf32> -> vector<8x128xf32>
    %453 = arith.addf %449, %452 : vector<8x128xf32>
    %454 = arith.negf %453 : vector<8x128xf32>
    %455 = math.exp %454 : vector<8x128xf32>
    %cst_293 = arith.constant 1.000000e+00 : f32
    %456 = vector.broadcast %cst_293 : f32 to vector<8x128xf32>
    %457 = arith.addf %456, %455 : vector<8x128xf32>
    %458 = arith.divf %456, %457 : vector<8x128xf32>
    %459 = math.tanh %453 : vector<8x128xf32>
    %460 = vector.extract_strided_slice %458 {offsets = [0, 0], sizes = [8, 32], strides = [1, 1]} : vector<8x128xf32> to vector<8x32xf32>
    %461 = vector.extract_strided_slice %458 {offsets = [0, 32], sizes = [8, 32], strides = [1, 1]} : vector<8x128xf32> to vector<8x32xf32>
    %462 = vector.extract_strided_slice %459 {offsets = [0, 64], sizes = [8, 32], strides = [1, 1]} : vector<8x128xf32> to vector<8x32xf32>
    %463 = vector.extract_strided_slice %458 {offsets = [0, 96], sizes = [8, 32], strides = [1, 1]} : vector<8x128xf32> to vector<8x32xf32>
    %464 = arith.mulf %461, %439 : vector<8x32xf32>
    %465 = arith.mulf %460, %462 : vector<8x32xf32>
    %466 = arith.addf %464, %465 : vector<8x32xf32>
    %467 = math.tanh %466 : vector<8x32xf32>
    %468 = arith.mulf %463, %467 : vector<8x32xf32>
    %469 = arith.truncf %468 : vector<8x32xf32> to vector<8x32xbf16>
    %c0_294 = arith.constant 0 : index
    %c0_295 = arith.constant 0 : index
    %470 = vector.load %arg2[%c0_294, %c0_295] : memref<32x128xbf16, #tpu.memory_space<vmem>>, vector<32x128xbf16>
    %cst_296 = arith.constant dense<0.000000e+00> : vector<8x128xf32>
    %471 = tpu.matmul %469, %470, %cst_296 {dimension_numbers = #tpu.dot_dimension_numbers<[1], [0], [0], [1], [0, 0, 1, 1], [], []>} : vector<8x32xbf16>, vector<32x128xbf16>, vector<8x128xf32> -> vector<8x128xf32>
    %c0_297 = arith.constant 0 : index
    %c0_298 = arith.constant 0 : index
    %472 = vector.load %arg3[%c0_297, %c0_298] : memref<1x128xf32, #tpu.memory_space<vmem>>, vector<1x128xf32>
    %473 = vector.broadcast %472 : vector<1x128xf32> to vector<8x128xf32>
    %474 = arith.addf %471, %473 : vector<8x128xf32>
    %c56_299 = arith.constant 56 : index
    %c0_300 = arith.constant 0 : index
    %475 = vector.load %arg13[%c56_299, %c0_300] : memref<64x128xf32, #tpu.memory_space<vmem>>, vector<8x128xf32>
    tpu.vector_store %arg13[%c56_299, %c0_300], %474 {strides = array<i32>} : memref<64x128xf32, #tpu.memory_space<vmem>>, vector<8x128xf32>,
    %c0_301 = arith.constant 0 : index
    %c0_302 = arith.constant 0 : index
    %c0_303 = arith.constant 0 : index
    %476 = vector.load %arg11[%c0_301, %c0_302, %c0_303] : memref<2x8x32xf32, #tpu.memory_space<vmem>>, vector<1x8x32xf32>
    %477 = vector.shape_cast %476 : vector<1x8x32xf32> to vector<8x32xf32>
    %478 = vector.shape_cast %468 : vector<8x32xf32> to vector<1x8x32xf32>
    tpu.vector_store %arg11[%c0_301, %c0_302, %c0_303], %478 {strides = array<i32>} : memref<2x8x32xf32, #tpu.memory_space<vmem>>, vector<1x8x32xf32>,
    %c0_304 = arith.constant 0 : index
    %c0_305 = arith.constant 0 : index
    %c0_306 = arith.constant 0 : index
    %479 = vector.load %arg12[%c0_304, %c0_305, %c0_306] : memref<2x8x32xf32, #tpu.memory_space<vmem>>, vector<1x8x32xf32>
    %480 = vector.shape_cast %479 : vector<1x8x32xf32> to vector<8x32xf32>
    %481 = vector.shape_cast %466 : vector<8x32xf32> to vector<1x8x32xf32>
    tpu.vector_store %arg12[%c0_304, %c0_305, %c0_306], %481 {strides = array<i32>} : memref<2x8x32xf32, #tpu.memory_space<vmem>>, vector<1x8x32xf32>,
    %c1_307 = arith.constant 1 : index
    %c0_308 = arith.constant 0 : index
    %c0_309 = arith.constant 0 : index
    %482 = vector.load %arg8[%c1_307, %c0_308, %c0_309] : memref<2x8x32xf32, #tpu.memory_space<vmem>>, vector<1x8x32xf32>
    %483 = vector.shape_cast %482 : vector<1x8x32xf32> to vector<8x32xf32>
    %c1_310 = arith.constant 1 : index
    %c0_311 = arith.constant 0 : index
    %c0_312 = arith.constant 0 : index
    %484 = vector.load %arg9[%c1_310, %c0_311, %c0_312] : memref<2x8x32xf32, #tpu.memory_space<vmem>>, vector<1x8x32xf32>
    %485 = vector.shape_cast %484 : vector<1x8x32xf32> to vector<8x32xf32>
    %c0_313 = arith.constant 0 : index
    %c0_314 = arith.constant 0 : index
    %486 = vector.load %arg13[%c0_313, %c0_314] : memref<64x128xf32, #tpu.memory_space<vmem>>, vector<8x128xf32>
    %487 = arith.truncf %483 : vector<8x32xf32> to vector<8x32xbf16>
    %c0_315 = arith.constant 0 : index
    %c0_316 = arith.constant 0 : index
    %488 = vector.load %arg5[%c0_315, %c0_316] : memref<32x128xbf16, #tpu.memory_space<vmem>>, vector<32x128xbf16>
    %cst_317 = arith.constant dense<0.000000e+00> : vector<8x128xf32>
    %489 = tpu.matmul %487, %488, %cst_317 {dimension_numbers = #tpu.dot_dimension_numbers<[1], [0], [0], [1], [0, 0, 1, 1], [], []>} : vector<8x32xbf16>, vector<32x128xbf16>, vector<8x128xf32> -> vector<8x128xf32>
    %490 = arith.addf %486, %489 : vector<8x128xf32>
    %491 = arith.negf %490 : vector<8x128xf32>
    %492 = math.exp %491 : vector<8x128xf32>
    %cst_318 = arith.constant 1.000000e+00 : f32
    %493 = vector.broadcast %cst_318 : f32 to vector<8x128xf32>
    %494 = arith.addf %493, %492 : vector<8x128xf32>
    %495 = arith.divf %493, %494 : vector<8x128xf32>
    %496 = math.tanh %490 : vector<8x128xf32>
    %497 = vector.extract_strided_slice %495 {offsets = [0, 0], sizes = [8, 32], strides = [1, 1]} : vector<8x128xf32> to vector<8x32xf32>
    %498 = vector.extract_strided_slice %495 {offsets = [0, 32], sizes = [8, 32], strides = [1, 1]} : vector<8x128xf32> to vector<8x32xf32>
    %499 = vector.extract_strided_slice %496 {offsets = [0, 64], sizes = [8, 32], strides = [1, 1]} : vector<8x128xf32> to vector<8x32xf32>
    %500 = vector.extract_strided_slice %495 {offsets = [0, 96], sizes = [8, 32], strides = [1, 1]} : vector<8x128xf32> to vector<8x32xf32>
    %501 = arith.mulf %498, %485 : vector<8x32xf32>
    %502 = arith.mulf %497, %499 : vector<8x32xf32>
    %503 = arith.addf %501, %502 : vector<8x32xf32>
    %504 = math.tanh %503 : vector<8x32xf32>
    %505 = arith.mulf %500, %504 : vector<8x32xf32>
    %506 = arith.truncf %505 : vector<8x32xf32> to vector<8x32xbf16>
    %c0_319 = arith.constant 0 : index
    %c0_320 = arith.constant 0 : index
    %507 = vector.load %arg6[%c0_319, %c0_320] : memref<32x128xbf16, #tpu.memory_space<vmem>>, vector<32x128xbf16>
    %cst_321 = arith.constant dense<0.000000e+00> : vector<8x128xf32>
    %508 = tpu.matmul %506, %507, %cst_321 {dimension_numbers = #tpu.dot_dimension_numbers<[1], [0], [0], [1], [0, 0, 1, 1], [], []>} : vector<8x32xbf16>, vector<32x128xbf16>, vector<8x128xf32> -> vector<8x128xf32>
    %c0_322 = arith.constant 0 : index
    %c0_323 = arith.constant 0 : index
    %509 = vector.load %arg7[%c0_322, %c0_323] : memref<1x128xf32, #tpu.memory_space<vmem>>, vector<1x128xf32>
    %510 = vector.broadcast %509 : vector<1x128xf32> to vector<8x128xf32>
    %511 = arith.addf %508, %510 : vector<8x128xf32>
    %c0_324 = arith.constant 0 : index
    %c0_325 = arith.constant 0 : index
    %c0_326 = arith.constant 0 : index
    %512 = vector.load %arg10[%c0_324, %c0_325, %c0_326] : memref<8x8x128xf32, #tpu.memory_space<vmem>>, vector<1x8x128xf32>
    %513 = vector.shape_cast %512 : vector<1x8x128xf32> to vector<8x128xf32>
    %514 = vector.shape_cast %511 : vector<8x128xf32> to vector<1x8x128xf32>
    tpu.vector_store %arg10[%c0_324, %c0_325, %c0_326], %514 {strides = array<i32>} : memref<8x8x128xf32, #tpu.memory_space<vmem>>, vector<1x8x128xf32>,
    %c8_327 = arith.constant 8 : index
    %c0_328 = arith.constant 0 : index
    %515 = vector.load %arg13[%c8_327, %c0_328] : memref<64x128xf32, #tpu.memory_space<vmem>>, vector<8x128xf32>
    %516 = arith.truncf %505 : vector<8x32xf32> to vector<8x32xbf16>
    %c0_329 = arith.constant 0 : index
    %c0_330 = arith.constant 0 : index
    %517 = vector.load %arg5[%c0_329, %c0_330] : memref<32x128xbf16, #tpu.memory_space<vmem>>, vector<32x128xbf16>
    %cst_331 = arith.constant dense<0.000000e+00> : vector<8x128xf32>
    %518 = tpu.matmul %516, %517, %cst_331 {dimension_numbers = #tpu.dot_dimension_numbers<[1], [0], [0], [1], [0, 0, 1, 1], [], []>} : vector<8x32xbf16>, vector<32x128xbf16>, vector<8x128xf32> -> vector<8x128xf32>
    %519 = arith.addf %515, %518 : vector<8x128xf32>
    %520 = arith.negf %519 : vector<8x128xf32>
    %521 = math.exp %520 : vector<8x128xf32>
    %cst_332 = arith.constant 1.000000e+00 : f32
    %522 = vector.broadcast %cst_332 : f32 to vector<8x128xf32>
    %523 = arith.addf %522, %521 : vector<8x128xf32>
    %524 = arith.divf %522, %523 : vector<8x128xf32>
    %525 = math.tanh %519 : vector<8x128xf32>
    %526 = vector.extract_strided_slice %524 {offsets = [0, 0], sizes = [8, 32], strides = [1, 1]} : vector<8x128xf32> to vector<8x32xf32>
    %527 = vector.extract_strided_slice %524 {offsets = [0, 32], sizes = [8, 32], strides = [1, 1]} : vector<8x128xf32> to vector<8x32xf32>
    %528 = vector.extract_strided_slice %525 {offsets = [0, 64], sizes = [8, 32], strides = [1, 1]} : vector<8x128xf32> to vector<8x32xf32>
    %529 = vector.extract_strided_slice %524 {offsets = [0, 96], sizes = [8, 32], strides = [1, 1]} : vector<8x128xf32> to vector<8x32xf32>
    %530 = arith.mulf %527, %503 : vector<8x32xf32>
    %531 = arith.mulf %526, %528 : vector<8x32xf32>
    %532 = arith.addf %530, %531 : vector<8x32xf32>
    %533 = math.tanh %532 : vector<8x32xf32>
    %534 = arith.mulf %529, %533 : vector<8x32xf32>
    %535 = arith.truncf %534 : vector<8x32xf32> to vector<8x32xbf16>
    %c0_333 = arith.constant 0 : index
    %c0_334 = arith.constant 0 : index
    %536 = vector.load %arg6[%c0_333, %c0_334] : memref<32x128xbf16, #tpu.memory_space<vmem>>, vector<32x128xbf16>
    %cst_335 = arith.constant dense<0.000000e+00> : vector<8x128xf32>
    %537 = tpu.matmul %535, %536, %cst_335 {dimension_numbers = #tpu.dot_dimension_numbers<[1], [0], [0], [1], [0, 0, 1, 1], [], []>} : vector<8x32xbf16>, vector<32x128xbf16>, vector<8x128xf32> -> vector<8x128xf32>
    %c0_336 = arith.constant 0 : index
    %c0_337 = arith.constant 0 : index
    %538 = vector.load %arg7[%c0_336, %c0_337] : memref<1x128xf32, #tpu.memory_space<vmem>>, vector<1x128xf32>
    %539 = vector.broadcast %538 : vector<1x128xf32> to vector<8x128xf32>
    %540 = arith.addf %537, %539 : vector<8x128xf32>
    %c1_338 = arith.constant 1 : index
    %c0_339 = arith.constant 0 : index
    %c0_340 = arith.constant 0 : index
    %541 = vector.load %arg10[%c1_338, %c0_339, %c0_340] : memref<8x8x128xf32, #tpu.memory_space<vmem>>, vector<1x8x128xf32>
    %542 = vector.shape_cast %541 : vector<1x8x128xf32> to vector<8x128xf32>
    %543 = vector.shape_cast %540 : vector<8x128xf32> to vector<1x8x128xf32>
    tpu.vector_store %arg10[%c1_338, %c0_339, %c0_340], %543 {strides = array<i32>} : memref<8x8x128xf32, #tpu.memory_space<vmem>>, vector<1x8x128xf32>,
    %c16_341 = arith.constant 16 : index
    %c0_342 = arith.constant 0 : index
    %544 = vector.load %arg13[%c16_341, %c0_342] : memref<64x128xf32, #tpu.memory_space<vmem>>, vector<8x128xf32>
    %545 = arith.truncf %534 : vector<8x32xf32> to vector<8x32xbf16>
    %c0_343 = arith.constant 0 : index
    %c0_344 = arith.constant 0 : index
    %546 = vector.load %arg5[%c0_343, %c0_344] : memref<32x128xbf16, #tpu.memory_space<vmem>>, vector<32x128xbf16>
    %cst_345 = arith.constant dense<0.000000e+00> : vector<8x128xf32>
    %547 = tpu.matmul %545, %546, %cst_345 {dimension_numbers = #tpu.dot_dimension_numbers<[1], [0], [0], [1], [0, 0, 1, 1], [], []>} : vector<8x32xbf16>, vector<32x128xbf16>, vector<8x128xf32> -> vector<8x128xf32>
    %548 = arith.addf %544, %547 : vector<8x128xf32>
    %549 = arith.negf %548 : vector<8x128xf32>
    %550 = math.exp %549 : vector<8x128xf32>
    %cst_346 = arith.constant 1.000000e+00 : f32
    %551 = vector.broadcast %cst_346 : f32 to vector<8x128xf32>
    %552 = arith.addf %551, %550 : vector<8x128xf32>
    %553 = arith.divf %551, %552 : vector<8x128xf32>
    %554 = math.tanh %548 : vector<8x128xf32>
    %555 = vector.extract_strided_slice %553 {offsets = [0, 0], sizes = [8, 32], strides = [1, 1]} : vector<8x128xf32> to vector<8x32xf32>
    %556 = vector.extract_strided_slice %553 {offsets = [0, 32], sizes = [8, 32], strides = [1, 1]} : vector<8x128xf32> to vector<8x32xf32>
    %557 = vector.extract_strided_slice %554 {offsets = [0, 64], sizes = [8, 32], strides = [1, 1]} : vector<8x128xf32> to vector<8x32xf32>
    %558 = vector.extract_strided_slice %553 {offsets = [0, 96], sizes = [8, 32], strides = [1, 1]} : vector<8x128xf32> to vector<8x32xf32>
    %559 = arith.mulf %556, %532 : vector<8x32xf32>
    %560 = arith.mulf %555, %557 : vector<8x32xf32>
    %561 = arith.addf %559, %560 : vector<8x32xf32>
    %562 = math.tanh %561 : vector<8x32xf32>
    %563 = arith.mulf %558, %562 : vector<8x32xf32>
    %564 = arith.truncf %563 : vector<8x32xf32> to vector<8x32xbf16>
    %c0_347 = arith.constant 0 : index
    %c0_348 = arith.constant 0 : index
    %565 = vector.load %arg6[%c0_347, %c0_348] : memref<32x128xbf16, #tpu.memory_space<vmem>>, vector<32x128xbf16>
    %cst_349 = arith.constant dense<0.000000e+00> : vector<8x128xf32>
    %566 = tpu.matmul %564, %565, %cst_349 {dimension_numbers = #tpu.dot_dimension_numbers<[1], [0], [0], [1], [0, 0, 1, 1], [], []>} : vector<8x32xbf16>, vector<32x128xbf16>, vector<8x128xf32> -> vector<8x128xf32>
    %c0_350 = arith.constant 0 : index
    %c0_351 = arith.constant 0 : index
    %567 = vector.load %arg7[%c0_350, %c0_351] : memref<1x128xf32, #tpu.memory_space<vmem>>, vector<1x128xf32>
    %568 = vector.broadcast %567 : vector<1x128xf32> to vector<8x128xf32>
    %569 = arith.addf %566, %568 : vector<8x128xf32>
    %c2_352 = arith.constant 2 : index
    %c0_353 = arith.constant 0 : index
    %c0_354 = arith.constant 0 : index
    %570 = vector.load %arg10[%c2_352, %c0_353, %c0_354] : memref<8x8x128xf32, #tpu.memory_space<vmem>>, vector<1x8x128xf32>
    %571 = vector.shape_cast %570 : vector<1x8x128xf32> to vector<8x128xf32>
    %572 = vector.shape_cast %569 : vector<8x128xf32> to vector<1x8x128xf32>
    tpu.vector_store %arg10[%c2_352, %c0_353, %c0_354], %572 {strides = array<i32>} : memref<8x8x128xf32, #tpu.memory_space<vmem>>, vector<1x8x128xf32>,
    %c24_355 = arith.constant 24 : index
    %c0_356 = arith.constant 0 : index
    %573 = vector.load %arg13[%c24_355, %c0_356] : memref<64x128xf32, #tpu.memory_space<vmem>>, vector<8x128xf32>
    %574 = arith.truncf %563 : vector<8x32xf32> to vector<8x32xbf16>
    %c0_357 = arith.constant 0 : index
    %c0_358 = arith.constant 0 : index
    %575 = vector.load %arg5[%c0_357, %c0_358] : memref<32x128xbf16, #tpu.memory_space<vmem>>, vector<32x128xbf16>
    %cst_359 = arith.constant dense<0.000000e+00> : vector<8x128xf32>
    %576 = tpu.matmul %574, %575, %cst_359 {dimension_numbers = #tpu.dot_dimension_numbers<[1], [0], [0], [1], [0, 0, 1, 1], [], []>} : vector<8x32xbf16>, vector<32x128xbf16>, vector<8x128xf32> -> vector<8x128xf32>
    %577 = arith.addf %573, %576 : vector<8x128xf32>
    %578 = arith.negf %577 : vector<8x128xf32>
    %579 = math.exp %578 : vector<8x128xf32>
    %cst_360 = arith.constant 1.000000e+00 : f32
    %580 = vector.broadcast %cst_360 : f32 to vector<8x128xf32>
    %581 = arith.addf %580, %579 : vector<8x128xf32>
    %582 = arith.divf %580, %581 : vector<8x128xf32>
    %583 = math.tanh %577 : vector<8x128xf32>
    %584 = vector.extract_strided_slice %582 {offsets = [0, 0], sizes = [8, 32], strides = [1, 1]} : vector<8x128xf32> to vector<8x32xf32>
    %585 = vector.extract_strided_slice %582 {offsets = [0, 32], sizes = [8, 32], strides = [1, 1]} : vector<8x128xf32> to vector<8x32xf32>
    %586 = vector.extract_strided_slice %583 {offsets = [0, 64], sizes = [8, 32], strides = [1, 1]} : vector<8x128xf32> to vector<8x32xf32>
    %587 = vector.extract_strided_slice %582 {offsets = [0, 96], sizes = [8, 32], strides = [1, 1]} : vector<8x128xf32> to vector<8x32xf32>
    %588 = arith.mulf %585, %561 : vector<8x32xf32>
    %589 = arith.mulf %584, %586 : vector<8x32xf32>
    %590 = arith.addf %588, %589 : vector<8x32xf32>
    %591 = math.tanh %590 : vector<8x32xf32>
    %592 = arith.mulf %587, %591 : vector<8x32xf32>
    %593 = arith.truncf %592 : vector<8x32xf32> to vector<8x32xbf16>
    %c0_361 = arith.constant 0 : index
    %c0_362 = arith.constant 0 : index
    %594 = vector.load %arg6[%c0_361, %c0_362] : memref<32x128xbf16, #tpu.memory_space<vmem>>, vector<32x128xbf16>
    %cst_363 = arith.constant dense<0.000000e+00> : vector<8x128xf32>
    %595 = tpu.matmul %593, %594, %cst_363 {dimension_numbers = #tpu.dot_dimension_numbers<[1], [0], [0], [1], [0, 0, 1, 1], [], []>} : vector<8x32xbf16>, vector<32x128xbf16>, vector<8x128xf32> -> vector<8x128xf32>
    %c0_364 = arith.constant 0 : index
    %c0_365 = arith.constant 0 : index
    %596 = vector.load %arg7[%c0_364, %c0_365] : memref<1x128xf32, #tpu.memory_space<vmem>>, vector<1x128xf32>
    %597 = vector.broadcast %596 : vector<1x128xf32> to vector<8x128xf32>
    %598 = arith.addf %595, %597 : vector<8x128xf32>
    %c3_366 = arith.constant 3 : index
    %c0_367 = arith.constant 0 : index
    %c0_368 = arith.constant 0 : index
    %599 = vector.load %arg10[%c3_366, %c0_367, %c0_368] : memref<8x8x128xf32, #tpu.memory_space<vmem>>, vector<1x8x128xf32>
    %600 = vector.shape_cast %599 : vector<1x8x128xf32> to vector<8x128xf32>
    %601 = vector.shape_cast %598 : vector<8x128xf32> to vector<1x8x128xf32>
    tpu.vector_store %arg10[%c3_366, %c0_367, %c0_368], %601 {strides = array<i32>} : memref<8x8x128xf32, #tpu.memory_space<vmem>>, vector<1x8x128xf32>,
    %c32_369 = arith.constant 32 : index
    %c0_370 = arith.constant 0 : index
    %602 = vector.load %arg13[%c32_369, %c0_370] : memref<64x128xf32, #tpu.memory_space<vmem>>, vector<8x128xf32>
    %603 = arith.truncf %592 : vector<8x32xf32> to vector<8x32xbf16>
    %c0_371 = arith.constant 0 : index
    %c0_372 = arith.constant 0 : index
    %604 = vector.load %arg5[%c0_371, %c0_372] : memref<32x128xbf16, #tpu.memory_space<vmem>>, vector<32x128xbf16>
    %cst_373 = arith.constant dense<0.000000e+00> : vector<8x128xf32>
    %605 = tpu.matmul %603, %604, %cst_373 {dimension_numbers = #tpu.dot_dimension_numbers<[1], [0], [0], [1], [0, 0, 1, 1], [], []>} : vector<8x32xbf16>, vector<32x128xbf16>, vector<8x128xf32> -> vector<8x128xf32>
    %606 = arith.addf %602, %605 : vector<8x128xf32>
    %607 = arith.negf %606 : vector<8x128xf32>
    %608 = math.exp %607 : vector<8x128xf32>
    %cst_374 = arith.constant 1.000000e+00 : f32
    %609 = vector.broadcast %cst_374 : f32 to vector<8x128xf32>
    %610 = arith.addf %609, %608 : vector<8x128xf32>
    %611 = arith.divf %609, %610 : vector<8x128xf32>
    %612 = math.tanh %606 : vector<8x128xf32>
    %613 = vector.extract_strided_slice %611 {offsets = [0, 0], sizes = [8, 32], strides = [1, 1]} : vector<8x128xf32> to vector<8x32xf32>
    %614 = vector.extract_strided_slice %611 {offsets = [0, 32], sizes = [8, 32], strides = [1, 1]} : vector<8x128xf32> to vector<8x32xf32>
    %615 = vector.extract_strided_slice %612 {offsets = [0, 64], sizes = [8, 32], strides = [1, 1]} : vector<8x128xf32> to vector<8x32xf32>
    %616 = vector.extract_strided_slice %611 {offsets = [0, 96], sizes = [8, 32], strides = [1, 1]} : vector<8x128xf32> to vector<8x32xf32>
    %617 = arith.mulf %614, %590 : vector<8x32xf32>
    %618 = arith.mulf %613, %615 : vector<8x32xf32>
    %619 = arith.addf %617, %618 : vector<8x32xf32>
    %620 = math.tanh %619 : vector<8x32xf32>
    %621 = arith.mulf %616, %620 : vector<8x32xf32>
    %622 = arith.truncf %621 : vector<8x32xf32> to vector<8x32xbf16>
    %c0_375 = arith.constant 0 : index
    %c0_376 = arith.constant 0 : index
    %623 = vector.load %arg6[%c0_375, %c0_376] : memref<32x128xbf16, #tpu.memory_space<vmem>>, vector<32x128xbf16>
    %cst_377 = arith.constant dense<0.000000e+00> : vector<8x128xf32>
    %624 = tpu.matmul %622, %623, %cst_377 {dimension_numbers = #tpu.dot_dimension_numbers<[1], [0], [0], [1], [0, 0, 1, 1], [], []>} : vector<8x32xbf16>, vector<32x128xbf16>, vector<8x128xf32> -> vector<8x128xf32>
    %c0_378 = arith.constant 0 : index
    %c0_379 = arith.constant 0 : index
    %625 = vector.load %arg7[%c0_378, %c0_379] : memref<1x128xf32, #tpu.memory_space<vmem>>, vector<1x128xf32>
    %626 = vector.broadcast %625 : vector<1x128xf32> to vector<8x128xf32>
    %627 = arith.addf %624, %626 : vector<8x128xf32>
    %c4_380 = arith.constant 4 : index
    %c0_381 = arith.constant 0 : index
    %c0_382 = arith.constant 0 : index
    %628 = vector.load %arg10[%c4_380, %c0_381, %c0_382] : memref<8x8x128xf32, #tpu.memory_space<vmem>>, vector<1x8x128xf32>
    %629 = vector.shape_cast %628 : vector<1x8x128xf32> to vector<8x128xf32>
    %630 = vector.shape_cast %627 : vector<8x128xf32> to vector<1x8x128xf32>
    tpu.vector_store %arg10[%c4_380, %c0_381, %c0_382], %630 {strides = array<i32>} : memref<8x8x128xf32, #tpu.memory_space<vmem>>, vector<1x8x128xf32>,
    %c40_383 = arith.constant 40 : index
    %c0_384 = arith.constant 0 : index
    %631 = vector.load %arg13[%c40_383, %c0_384] : memref<64x128xf32, #tpu.memory_space<vmem>>, vector<8x128xf32>
    %632 = arith.truncf %621 : vector<8x32xf32> to vector<8x32xbf16>
    %c0_385 = arith.constant 0 : index
    %c0_386 = arith.constant 0 : index
    %633 = vector.load %arg5[%c0_385, %c0_386] : memref<32x128xbf16, #tpu.memory_space<vmem>>, vector<32x128xbf16>
    %cst_387 = arith.constant dense<0.000000e+00> : vector<8x128xf32>
    %634 = tpu.matmul %632, %633, %cst_387 {dimension_numbers = #tpu.dot_dimension_numbers<[1], [0], [0], [1], [0, 0, 1, 1], [], []>} : vector<8x32xbf16>, vector<32x128xbf16>, vector<8x128xf32> -> vector<8x128xf32>
    %635 = arith.addf %631, %634 : vector<8x128xf32>
    %636 = arith.negf %635 : vector<8x128xf32>
    %637 = math.exp %636 : vector<8x128xf32>
    %cst_388 = arith.constant 1.000000e+00 : f32
    %638 = vector.broadcast %cst_388 : f32 to vector<8x128xf32>
    %639 = arith.addf %638, %637 : vector<8x128xf32>
    %640 = arith.divf %638, %639 : vector<8x128xf32>
    %641 = math.tanh %635 : vector<8x128xf32>
    %642 = vector.extract_strided_slice %640 {offsets = [0, 0], sizes = [8, 32], strides = [1, 1]} : vector<8x128xf32> to vector<8x32xf32>
    %643 = vector.extract_strided_slice %640 {offsets = [0, 32], sizes = [8, 32], strides = [1, 1]} : vector<8x128xf32> to vector<8x32xf32>
    %644 = vector.extract_strided_slice %641 {offsets = [0, 64], sizes = [8, 32], strides = [1, 1]} : vector<8x128xf32> to vector<8x32xf32>
    %645 = vector.extract_strided_slice %640 {offsets = [0, 96], sizes = [8, 32], strides = [1, 1]} : vector<8x128xf32> to vector<8x32xf32>
    %646 = arith.mulf %643, %619 : vector<8x32xf32>
    %647 = arith.mulf %642, %644 : vector<8x32xf32>
    %648 = arith.addf %646, %647 : vector<8x32xf32>
    %649 = math.tanh %648 : vector<8x32xf32>
    %650 = arith.mulf %645, %649 : vector<8x32xf32>
    %651 = arith.truncf %650 : vector<8x32xf32> to vector<8x32xbf16>
    %c0_389 = arith.constant 0 : index
    %c0_390 = arith.constant 0 : index
    %652 = vector.load %arg6[%c0_389, %c0_390] : memref<32x128xbf16, #tpu.memory_space<vmem>>, vector<32x128xbf16>
    %cst_391 = arith.constant dense<0.000000e+00> : vector<8x128xf32>
    %653 = tpu.matmul %651, %652, %cst_391 {dimension_numbers = #tpu.dot_dimension_numbers<[1], [0], [0], [1], [0, 0, 1, 1], [], []>} : vector<8x32xbf16>, vector<32x128xbf16>, vector<8x128xf32> -> vector<8x128xf32>
    %c0_392 = arith.constant 0 : index
    %c0_393 = arith.constant 0 : index
    %654 = vector.load %arg7[%c0_392, %c0_393] : memref<1x128xf32, #tpu.memory_space<vmem>>, vector<1x128xf32>
    %655 = vector.broadcast %654 : vector<1x128xf32> to vector<8x128xf32>
    %656 = arith.addf %653, %655 : vector<8x128xf32>
    %c5_394 = arith.constant 5 : index
    %c0_395 = arith.constant 0 : index
    %c0_396 = arith.constant 0 : index
    %657 = vector.load %arg10[%c5_394, %c0_395, %c0_396] : memref<8x8x128xf32, #tpu.memory_space<vmem>>, vector<1x8x128xf32>
    %658 = vector.shape_cast %657 : vector<1x8x128xf32> to vector<8x128xf32>
    %659 = vector.shape_cast %656 : vector<8x128xf32> to vector<1x8x128xf32>
    tpu.vector_store %arg10[%c5_394, %c0_395, %c0_396], %659 {strides = array<i32>} : memref<8x8x128xf32, #tpu.memory_space<vmem>>, vector<1x8x128xf32>,
    %c48_397 = arith.constant 48 : index
    %c0_398 = arith.constant 0 : index
    %660 = vector.load %arg13[%c48_397, %c0_398] : memref<64x128xf32, #tpu.memory_space<vmem>>, vector<8x128xf32>
    %661 = arith.truncf %650 : vector<8x32xf32> to vector<8x32xbf16>
    %c0_399 = arith.constant 0 : index
    %c0_400 = arith.constant 0 : index
    %662 = vector.load %arg5[%c0_399, %c0_400] : memref<32x128xbf16, #tpu.memory_space<vmem>>, vector<32x128xbf16>
    %cst_401 = arith.constant dense<0.000000e+00> : vector<8x128xf32>
    %663 = tpu.matmul %661, %662, %cst_401 {dimension_numbers = #tpu.dot_dimension_numbers<[1], [0], [0], [1], [0, 0, 1, 1], [], []>} : vector<8x32xbf16>, vector<32x128xbf16>, vector<8x128xf32> -> vector<8x128xf32>
    %664 = arith.addf %660, %663 : vector<8x128xf32>
    %665 = arith.negf %664 : vector<8x128xf32>
    %666 = math.exp %665 : vector<8x128xf32>
    %cst_402 = arith.constant 1.000000e+00 : f32
    %667 = vector.broadcast %cst_402 : f32 to vector<8x128xf32>
    %668 = arith.addf %667, %666 : vector<8x128xf32>
    %669 = arith.divf %667, %668 : vector<8x128xf32>
    %670 = math.tanh %664 : vector<8x128xf32>
    %671 = vector.extract_strided_slice %669 {offsets = [0, 0], sizes = [8, 32], strides = [1, 1]} : vector<8x128xf32> to vector<8x32xf32>
    %672 = vector.extract_strided_slice %669 {offsets = [0, 32], sizes = [8, 32], strides = [1, 1]} : vector<8x128xf32> to vector<8x32xf32>
    %673 = vector.extract_strided_slice %670 {offsets = [0, 64], sizes = [8, 32], strides = [1, 1]} : vector<8x128xf32> to vector<8x32xf32>
    %674 = vector.extract_strided_slice %669 {offsets = [0, 96], sizes = [8, 32], strides = [1, 1]} : vector<8x128xf32> to vector<8x32xf32>
    %675 = arith.mulf %672, %648 : vector<8x32xf32>
    %676 = arith.mulf %671, %673 : vector<8x32xf32>
    %677 = arith.addf %675, %676 : vector<8x32xf32>
    %678 = math.tanh %677 : vector<8x32xf32>
    %679 = arith.mulf %674, %678 : vector<8x32xf32>
    %680 = arith.truncf %679 : vector<8x32xf32> to vector<8x32xbf16>
    %c0_403 = arith.constant 0 : index
    %c0_404 = arith.constant 0 : index
    %681 = vector.load %arg6[%c0_403, %c0_404] : memref<32x128xbf16, #tpu.memory_space<vmem>>, vector<32x128xbf16>
    %cst_405 = arith.constant dense<0.000000e+00> : vector<8x128xf32>
    %682 = tpu.matmul %680, %681, %cst_405 {dimension_numbers = #tpu.dot_dimension_numbers<[1], [0], [0], [1], [0, 0, 1, 1], [], []>} : vector<8x32xbf16>, vector<32x128xbf16>, vector<8x128xf32> -> vector<8x128xf32>
    %c0_406 = arith.constant 0 : index
    %c0_407 = arith.constant 0 : index
    %683 = vector.load %arg7[%c0_406, %c0_407] : memref<1x128xf32, #tpu.memory_space<vmem>>, vector<1x128xf32>
    %684 = vector.broadcast %683 : vector<1x128xf32> to vector<8x128xf32>
    %685 = arith.addf %682, %684 : vector<8x128xf32>
    %c6_408 = arith.constant 6 : index
    %c0_409 = arith.constant 0 : index
    %c0_410 = arith.constant 0 : index
    %686 = vector.load %arg10[%c6_408, %c0_409, %c0_410] : memref<8x8x128xf32, #tpu.memory_space<vmem>>, vector<1x8x128xf32>
    %687 = vector.shape_cast %686 : vector<1x8x128xf32> to vector<8x128xf32>
    %688 = vector.shape_cast %685 : vector<8x128xf32> to vector<1x8x128xf32>
    tpu.vector_store %arg10[%c6_408, %c0_409, %c0_410], %688 {strides = array<i32>} : memref<8x8x128xf32, #tpu.memory_space<vmem>>, vector<1x8x128xf32>,
    %c56_411 = arith.constant 56 : index
    %c0_412 = arith.constant 0 : index
    %689 = vector.load %arg13[%c56_411, %c0_412] : memref<64x128xf32, #tpu.memory_space<vmem>>, vector<8x128xf32>
    %690 = arith.truncf %679 : vector<8x32xf32> to vector<8x32xbf16>
    %c0_413 = arith.constant 0 : index
    %c0_414 = arith.constant 0 : index
    %691 = vector.load %arg5[%c0_413, %c0_414] : memref<32x128xbf16, #tpu.memory_space<vmem>>, vector<32x128xbf16>
    %cst_415 = arith.constant dense<0.000000e+00> : vector<8x128xf32>
    %692 = tpu.matmul %690, %691, %cst_415 {dimension_numbers = #tpu.dot_dimension_numbers<[1], [0], [0], [1], [0, 0, 1, 1], [], []>} : vector<8x32xbf16>, vector<32x128xbf16>, vector<8x128xf32> -> vector<8x128xf32>
    %693 = arith.addf %689, %692 : vector<8x128xf32>
    %694 = arith.negf %693 : vector<8x128xf32>
    %695 = math.exp %694 : vector<8x128xf32>
    %cst_416 = arith.constant 1.000000e+00 : f32
    %696 = vector.broadcast %cst_416 : f32 to vector<8x128xf32>
    %697 = arith.addf %696, %695 : vector<8x128xf32>
    %698 = arith.divf %696, %697 : vector<8x128xf32>
    %699 = math.tanh %693 : vector<8x128xf32>
    %700 = vector.extract_strided_slice %698 {offsets = [0, 0], sizes = [8, 32], strides = [1, 1]} : vector<8x128xf32> to vector<8x32xf32>
    %701 = vector.extract_strided_slice %698 {offsets = [0, 32], sizes = [8, 32], strides = [1, 1]} : vector<8x128xf32> to vector<8x32xf32>
    %702 = vector.extract_strided_slice %699 {offsets = [0, 64], sizes = [8, 32], strides = [1, 1]} : vector<8x128xf32> to vector<8x32xf32>
    %703 = vector.extract_strided_slice %698 {offsets = [0, 96], sizes = [8, 32], strides = [1, 1]} : vector<8x128xf32> to vector<8x32xf32>
    %704 = arith.mulf %701, %677 : vector<8x32xf32>
    %705 = arith.mulf %700, %702 : vector<8x32xf32>
    %706 = arith.addf %704, %705 : vector<8x32xf32>
    %707 = math.tanh %706 : vector<8x32xf32>
    %708 = arith.mulf %703, %707 : vector<8x32xf32>
    %709 = arith.truncf %708 : vector<8x32xf32> to vector<8x32xbf16>
    %c0_417 = arith.constant 0 : index
    %c0_418 = arith.constant 0 : index
    %710 = vector.load %arg6[%c0_417, %c0_418] : memref<32x128xbf16, #tpu.memory_space<vmem>>, vector<32x128xbf16>
    %cst_419 = arith.constant dense<0.000000e+00> : vector<8x128xf32>
    %711 = tpu.matmul %709, %710, %cst_419 {dimension_numbers = #tpu.dot_dimension_numbers<[1], [0], [0], [1], [0, 0, 1, 1], [], []>} : vector<8x32xbf16>, vector<32x128xbf16>, vector<8x128xf32> -> vector<8x128xf32>
    %c0_420 = arith.constant 0 : index
    %c0_421 = arith.constant 0 : index
    %712 = vector.load %arg7[%c0_420, %c0_421] : memref<1x128xf32, #tpu.memory_space<vmem>>, vector<1x128xf32>
    %713 = vector.broadcast %712 : vector<1x128xf32> to vector<8x128xf32>
    %714 = arith.addf %711, %713 : vector<8x128xf32>
    %c7_422 = arith.constant 7 : index
    %c0_423 = arith.constant 0 : index
    %c0_424 = arith.constant 0 : index
    %715 = vector.load %arg10[%c7_422, %c0_423, %c0_424] : memref<8x8x128xf32, #tpu.memory_space<vmem>>, vector<1x8x128xf32>
    %716 = vector.shape_cast %715 : vector<1x8x128xf32> to vector<8x128xf32>
    %717 = vector.shape_cast %714 : vector<8x128xf32> to vector<1x8x128xf32>
    tpu.vector_store %arg10[%c7_422, %c0_423, %c0_424], %717 {strides = array<i32>} : memref<8x8x128xf32, #tpu.memory_space<vmem>>, vector<1x8x128xf32>,
    %c1_425 = arith.constant 1 : index
    %c0_426 = arith.constant 0 : index
    %c0_427 = arith.constant 0 : index
    %718 = vector.load %arg11[%c1_425, %c0_426, %c0_427] : memref<2x8x32xf32, #tpu.memory_space<vmem>>, vector<1x8x32xf32>
    %719 = vector.shape_cast %718 : vector<1x8x32xf32> to vector<8x32xf32>
    %720 = vector.shape_cast %708 : vector<8x32xf32> to vector<1x8x32xf32>
    tpu.vector_store %arg11[%c1_425, %c0_426, %c0_427], %720 {strides = array<i32>} : memref<2x8x32xf32, #tpu.memory_space<vmem>>, vector<1x8x32xf32>,
    %c1_428 = arith.constant 1 : index
    %c0_429 = arith.constant 0 : index
    %c0_430 = arith.constant 0 : index
    %721 = vector.load %arg12[%c1_428, %c0_429, %c0_430] : memref<2x8x32xf32, #tpu.memory_space<vmem>>, vector<1x8x32xf32>
    %722 = vector.shape_cast %721 : vector<1x8x32xf32> to vector<8x32xf32>
    %723 = vector.shape_cast %706 : vector<8x32xf32> to vector<1x8x32xf32>
    tpu.vector_store %arg12[%c1_428, %c0_429, %c0_430], %723 {strides = array<i32>} : memref<2x8x32xf32, #tpu.memory_space<vmem>>, vector<1x8x32xf32>,
    return
  }
}

</mosaic_0001>

<llo_original>
// kernel: text_rnn_forward.1
$region0: #{text_rnn_forward.1}
  #allocation0 [shape = 'u32[]', space=smem, size = 0x4, offset = 0x4, fixed_abs, tag = 'smem constant byte address 0x4 - core index']
  #allocation1 [shape = 'u32[144,128]{1,0:T(1,128)}', space=vmem, size = 0x12000, scoped, tag = 'internal scratch']
  #allocation2 [shape = 'f32[64,128]{1,0:T(8,128)}', space=vmem, size = 0x8000, scoped, tag = 'scratch operand']
  %s0 = inlined_call_operand.vmem [shape: s32[64], index: 0, kind: input, shape index: {}]
  %s1 = inlined_call_operand.vmem [shape: f32[16,128], index: 1, kind: input, shape index: {}]
  %s2 = inlined_call_operand.vmem [shape: bf16[32,128], index: 2, kind: input, shape index: {}]
  %s3 = inlined_call_operand.vmem [shape: f32[1,128], index: 3, kind: input, shape index: {}]
  %s4 = inlined_call_operand.vmem [shape: bf16[32,128], index: 4, kind: input, shape index: {}]
  %s5 = inlined_call_operand.vmem [shape: bf16[32,128], index: 5, kind: input, shape index: {}]
  %s6 = inlined_call_operand.vmem [shape: bf16[32,128], index: 6, kind: input, shape index: {}]
  %s7 = inlined_call_operand.vmem [shape: f32[1,128], index: 7, kind: input, shape index: {}]
  %s8 = inlined_call_operand.vmem [shape: f32[2,8,32], index: 8, kind: input, shape index: {}]
  %s9 = inlined_call_operand.vmem [shape: f32[2,8,32], index: 9, kind: input, shape index: {}]
  %s10 = inlined_call_operand.vmem [shape: f32[8,8,128], index: 10, kind: output, shape index: {0}]
  %s11 = inlined_call_operand.vmem [shape: f32[2,8,32], index: 11, kind: output, shape index: {1}]
  %s12 = inlined_call_operand.vmem [shape: f32[2,8,32], index: 12, kind: output, shape index: {2}]
  %13 = xla_tuple %s10, %s11, %s12
  %s14 = sld [smem:[#allocation0]]
  $region70: #{text_rnn_forward.1} parent=0
    _
  %s16 = ssub.s32 1, %s14
  %s17 = scalar_select 0, %s16, %s14
  $region1: #{text_rnn_forward.1} parent=0
    #allocation3 [shape = 'u8[512]{0}', space=smem, size = 0x200, scoped, tag = 'input window, operand 0, single buffered']
    #allocation4 [shape = 's32[1]{0}', space=sflag, size = 0x4, scoped, tag = 'scoped memory for text_rnn_forward.1']
    %18 = vsyncpa [#allocation4], 0
    // Predicated region
    $region2: #{text_rnn_forward.1} parent=1 // pred_check
      _
    $region3: #{text_rnn_forward.1} parent=1 // pred_check_branch
      %20 = sbr.rel (0) target = $region5
    $region4: #{text_rnn_forward.1} parent=1 // pred_region
      %s22 = ssub.s32 16, 16
      %23 = vsyncadd [#allocation4], %s22
      %s25 = sshll.u32 %s0, 4
      %s26 = int_to_ptr.vmem [resolvable:$true] %s25
      %28 = dma.vmem_to_smem %s26, 16, [#allocation3], [#allocation4]
    $region5: #{text_rnn_forward.1} parent=1 // pred_fallthru
      _
    // Predicated region
    $region6: #{text_rnn_forward.1} parent=1 // pred_check
      _
    $region7: #{text_rnn_forward.1} parent=1 // pred_check_branch
      %30 = sbr.rel (0) target = $region9
    $region8: #{text_rnn_forward.1} parent=1 // pred_region
      _
    $region9: #{text_rnn_forward.1} parent=1 // pred_fallthru
      _
    // Predicated region
    $region10: #{text_rnn_forward.1} parent=1 // pred_check
      _
    $region11: #{text_rnn_forward.1} parent=1 // pred_check_branch
      %32 = sbr.rel (0) target = $region13
    $region12: #{text_rnn_forward.1} parent=1 // pred_region
      _
    $region13: #{text_rnn_forward.1} parent=1 // pred_fallthru
      _
    // Predicated region
    $region14: #{text_rnn_forward.1} parent=1 // pred_check
      _
    $region15: #{text_rnn_forward.1} parent=1 // pred_check_branch
      %34 = sbr.rel (0) target = $region17
    $region16: #{text_rnn_forward.1} parent=1 // pred_region
      _
    $region17: #{text_rnn_forward.1} parent=1 // pred_fallthru
      _
    // Predicated region
    $region18: #{text_rnn_forward.1} parent=1 // pred_check
      _
    $region19: #{text_rnn_forward.1} parent=1 // pred_check_branch
      %36 = sbr.rel (0) target = $region21
    $region20: #{text_rnn_forward.1} parent=1 // pred_region
      _
    $region21: #{text_rnn_forward.1} parent=1 // pred_fallthru
      _
    // Predicated region
    $region22: #{text_rnn_forward.1} parent=1 // pred_check
      _
    $region23: #{text_rnn_forward.1} parent=1 // pred_check_branch
      %38 = sbr.rel (0) target = $region25
    $region24: #{text_rnn_forward.1} parent=1 // pred_region
      _
    $region25: #{text_rnn_forward.1} parent=1 // pred_fallthru
      _
    // Predicated region
    $region26: #{text_rnn_forward.1} parent=1 // pred_check
      _
    $region27: #{text_rnn_forward.1} parent=1 // pred_check_branch
      %40 = sbr.rel (0) target = $region29
    $region28: #{text_rnn_forward.1} parent=1 // pred_region
      _
    $region29: #{text_rnn_forward.1} parent=1 // pred_fallthru
      _
    // Predicated region
    $region30: #{text_rnn_forward.1} parent=1 // pred_check
      _
    $region31: #{text_rnn_forward.1} parent=1 // pred_check_branch
      %42 = sbr.rel (0) target = $region33
    $region32: #{text_rnn_forward.1} parent=1 // pred_region
      _
    $region33: #{text_rnn_forward.1} parent=1 // pred_fallthru
      _
    // Predicated region
    $region34: #{text_rnn_forward.1} parent=1 // pred_check
      _
    $region35: #{text_rnn_forward.1} parent=1 // pred_check_branch
      %44 = sbr.rel (0) target = $region37
    $region36: #{text_rnn_forward.1} parent=1 // pred_region
      _
    $region37: #{text_rnn_forward.1} parent=1 // pred_fallthru
      _
    // Predicated region
    $region38: #{text_rnn_forward.1} parent=1 // pred_check
      _
    $region39: #{text_rnn_forward.1} parent=1 // pred_check_branch
      %46 = sbr.rel (0) target = $region41
    $region40: #{text_rnn_forward.1} parent=1 // pred_region
      _
    $region41: #{text_rnn_forward.1} parent=1 // pred_fallthru
      _
    // Predicated region
    $region42: #{text_rnn_forward.1} parent=1 // pred_check
      _
    $region43: #{text_rnn_forward.1} parent=1 // pred_check_branch
      %48 = sbr.rel (0) target = $region45
    $region44: #{text_rnn_forward.1} parent=1 // pred_region
      %49 = dma.done [#allocation4], 16
    $region45: #{text_rnn_forward.1} parent=1 // pred_fallthru
      _
    %50 = sfence
    %s52 = sld [smem:[#allocation3]]
    %s53 = scalar_lea.vmem %s1, %s52
    %v54 = vld [vmem:[%s53] sm:$0x1]
    %55 = vst [vmem:[#allocation2] sm:$0x1] %v54
    %s56 = sld [smem:[#allocation3 + $0x1]]
    %s57 = scalar_lea.vmem %s1, %s56
    %v58 = vld [vmem:[%s57] sm:$0x1]
    %59 = vst [vmem:[#allocation2 + $0x1] sm:$0x1] %v58
    %s60 = sld [smem:[#allocation3 + $0x2]]
    %s61 = scalar_lea.vmem %s1, %s60
    %v62 = vld [vmem:[%s61] sm:$0x1]
    %63 = vst [vmem:[#allocation2 + $0x2] sm:$0x1] %v62
    %s64 = sld [smem:[#allocation3 + $0x3]]
    %s65 = scalar_lea.vmem %s1, %s64
    %v66 = vld [vmem:[%s65] sm:$0x1]
    %67 = vst [vmem:[#allocation2 + $0x3] sm:$0x1] %v66
    %s68 = sld [smem:[#allocation3 + $0x4]]
    %s69 = scalar_lea.vmem %s1, %s68
    %v70 = vld [vmem:[%s69] sm:$0x1]
    %71 = vst [vmem:[#allocation2 + $0x4] sm:$0x1] %v70
    %s72 = sld [smem:[#allocation3 + $0x5]]
    %s73 = scalar_lea.vmem %s1, %s72
    %v74 = vld [vmem:[%s73] sm:$0x1]
    %75 = vst [vmem:[#allocation2 + $0x5] sm:$0x1] %v74
    %s76 = sld [smem:[#allocation3 + $0x6]]
    %s77 = scalar_lea.vmem %s1, %s76
    %v78 = vld [vmem:[%s77] sm:$0x1]
    %79 = vst [vmem:[#allocation2 + $0x6] sm:$0x1] %v78
    %s80 = sld [smem:[#allocation3 + $0x7]]
    %s81 = scalar_lea.vmem %s1, %s80
    %v82 = vld [vmem:[%s81] sm:$0x1]
    %83 = vst [vmem:[#allocation2 + $0x7] sm:$0x1] %v82
    %s84 = sld [smem:[#allocation3 + $0x8]]
    %s85 = scalar_lea.vmem %s1, %s84
    %v86 = vld [vmem:[%s85] sm:$0x1]
    %87 = vst [vmem:[#allocation2 + $0x8] sm:$0x1] %v86
    %s88 = sld [smem:[#allocation3 + $0x9]]
    %s89 = scalar_lea.vmem %s1, %s88
    %v90 = vld [vmem:[%s89] sm:$0x1]
    %91 = vst [vmem:[#allocation2 + $0x9] sm:$0x1] %v90
    %s92 = sld [smem:[#allocation3 + $0xa]]
    %s93 = scalar_lea.vmem %s1, %s92
    %v94 = vld [vmem:[%s93] sm:$0x1]
    %95 = vst [vmem:[#allocation2 + $0xa] sm:$0x1] %v94
    %s96 = sld [smem:[#allocation3 + $0xb]]
    %s97 = scalar_lea.vmem %s1, %s96
    %v98 = vld [vmem:[%s97] sm:$0x1]
    %99 = vst [vmem:[#allocation2 + $0xb] sm:$0x1] %v98
    %s100 = sld [smem:[#allocation3 + $0xc]]
    %s101 = scalar_lea.vmem %s1, %s100
    %v102 = vld [vmem:[%s101] sm:$0x1]
    %103 = vst [vmem:[#allocation2 + $0xc] sm:$0x1] %v102
    %s104 = sld [smem:[#allocation3 + $0xd]]
    %s105 = scalar_lea.vmem %s1, %s104
    %v106 = vld [vmem:[%s105] sm:$0x1]
    %107 = vst [vmem:[#allocation2 + $0xd] sm:$0x1] %v106
    %s108 = sld [smem:[#allocation3 + $0xe]]
    %s109 = scalar_lea.vmem %s1, %s108
    %v110 = vld [vmem:[%s109] sm:$0x1]
    %111 = vst [vmem:[#allocation2 + $0xe] sm:$0x1] %v110
    %s112 = sld [smem:[#allocation3 + $0xf]]
    %s113 = scalar_lea.vmem %s1, %s112
    %v114 = vld [vmem:[%s113] sm:$0x1]
    %115 = vst [vmem:[#allocation2 + $0xf] sm:$0x1] %v114
    %s116 = sld [smem:[#allocation3 + $0x10]]
    %s117 = scalar_lea.vmem %s1, %s116
    %v118 = vld [vmem:[%s117] sm:$0x1]
    %119 = vst [vmem:[#allocation2 + $0x10] sm:$0x1] %v118
    %s120 = sld [smem:[#allocation3 + $0x11]]
    %s121 = scalar_lea.vmem %s1, %s120
    %v122 = vld [vmem:[%s121] sm:$0x1]
    %123 = vst [vmem:[#allocation2 + $0x11] sm:$0x1] %v122
    %s124 = sld [smem:[#allocation3 + $0x12]]
    %s125 = scalar_lea.vmem %s1, %s124
    %v126 = vld [vmem:[%s125] sm:$0x1]
    %127 = vst [vmem:[#allocation2 + $0x12] sm:$0x1] %v126
    %s128 = sld [smem:[#allocation3 + $0x13]]
    %s129 = scalar_lea.vmem %s1, %s128
    %v130 = vld [vmem:[%s129] sm:$0x1]
    %131 = vst [vmem:[#allocation2 + $0x13] sm:$0x1] %v130
    %s132 = sld [smem:[#allocation3 + $0x14]]
    %s133 = scalar_lea.vmem %s1, %s132
    %v134 = vld [vmem:[%s133] sm:$0x1]
    %135 = vst [vmem:[#allocation2 + $0x14] sm:$0x1] %v134
    %s136 = sld [smem:[#allocation3 + $0x15]]
    %s137 = scalar_lea.vmem %s1, %s136
    %v138 = vld [vmem:[%s137] sm:$0x1]
    %139 = vst [vmem:[#allocation2 + $0x15] sm:$0x1] %v138
    %s140 = sld [smem:[#allocation3 + $0x16]]
    %s141 = scalar_lea.vmem %s1, %s140
    %v142 = vld [vmem:[%s141] sm:$0x1]
    %143 = vst [vmem:[#allocation2 + $0x16] sm:$0x1] %v142
    %s144 = sld [smem:[#allocation3 + $0x17]]
    %s145 = scalar_lea.vmem %s1, %s144
    %v146 = vld [vmem:[%s145] sm:$0x1]
    %147 = vst [vmem:[#allocation2 + $0x17] sm:$0x1] %v146
    %s148 = sld [smem:[#allocation3 + $0x18]]
    %s149 = scalar_lea.vmem %s1, %s148
    %v150 = vld [vmem:[%s149] sm:$0x1]
    %151 = vst [vmem:[#allocation2 + $0x18] sm:$0x1] %v150
    %s152 = sld [smem:[#allocation3 + $0x19]]
    %s153 = scalar_lea.vmem %s1, %s152
    %v154 = vld [vmem:[%s153] sm:$0x1]
    %155 = vst [vmem:[#allocation2 + $0x19] sm:$0x1] %v154
    %s156 = sld [smem:[#allocation3 + $0x1a]]
    %s157 = scalar_lea.vmem %s1, %s156
    %v158 = vld [vmem:[%s157] sm:$0x1]
    %159 = vst [vmem:[#allocation2 + $0x1a] sm:$0x1] %v158
    %s160 = sld [smem:[#allocation3 + $0x1b]]
    %s161 = scalar_lea.vmem %s1, %s160
    %v162 = vld [vmem:[%s161] sm:$0x1]
    %163 = vst [vmem:[#allocation2 + $0x1b] sm:$0x1] %v162
    %s164 = sld [smem:[#allocation3 + $0x1c]]
    %s165 = scalar_lea.vmem %s1, %s164
    %v166 = vld [vmem:[%s165] sm:$0x1]
    %167 = vst [vmem:[#allocation2 + $0x1c] sm:$0x1] %v166
    %s168 = sld [smem:[#allocation3 + $0x1d]]
    %s169 = scalar_lea.vmem %s1, %s168
    %v170 = vld [vmem:[%s169] sm:$0x1]
    %171 = vst [vmem:[#allocation2 + $0x1d] sm:$0x1] %v170
    %s172 = sld [smem:[#allocation3 + $0x1e]]
    %s173 = scalar_lea.vmem %s1, %s172
    %v174 = vld [vmem:[%s173] sm:$0x1]
    %175 = vst [vmem:[#allocation2 + $0x1e] sm:$0x1] %v174
    %s176 = sld [smem:[#allocation3 + $0x1f]]
    %s177 = scalar_lea.vmem %s1, %s176
    %v178 = vld [vmem:[%s177] sm:$0x1]
    %179 = vst [vmem:[#allocation2 + $0x1f] sm:$0x1] %v178
    %s180 = sld [smem:[#allocation3 + $0x20]]
    %s181 = scalar_lea.vmem %s1, %s180
    %v182 = vld [vmem:[%s181] sm:$0x1]
    %183 = vst [vmem:[#allocation2 + $0x20] sm:$0x1] %v182
    %s184 = sld [smem:[#allocation3 + $0x21]]
    %s185 = scalar_lea.vmem %s1, %s184
    %v186 = vld [vmem:[%s185] sm:$0x1]
    %187 = vst [vmem:[#allocation2 + $0x21] sm:$0x1] %v186
    %s188 = sld [smem:[#allocation3 + $0x22]]
    %s189 = scalar_lea.vmem %s1, %s188
    %v190 = vld [vmem:[%s189] sm:$0x1]
    %191 = vst [vmem:[#allocation2 + $0x22] sm:$0x1] %v190
    %s192 = sld [smem:[#allocation3 + $0x23]]
    %s193 = scalar_lea.vmem %s1, %s192
    %v194 = vld [vmem:[%s193] sm:$0x1]
    %195 = vst [vmem:[#allocation2 + $0x23] sm:$0x1] %v194
    %s196 = sld [smem:[#allocation3 + $0x24]]
    %s197 = scalar_lea.vmem %s1, %s196
    %v198 = vld [vmem:[%s197] sm:$0x1]
    %199 = vst [vmem:[#allocation2 + $0x24] sm:$0x1] %v198
    %s200 = sld [smem:[#allocation3 + $0x25]]
    %s201 = scalar_lea.vmem %s1, %s200
    %v202 = vld [vmem:[%s201] sm:$0x1]
    %203 = vst [vmem:[#allocation2 + $0x25] sm:$0x1] %v202
    %s204 = sld [smem:[#allocation3 + $0x26]]
    %s205 = scalar_lea.vmem %s1, %s204
    %v206 = vld [vmem:[%s205] sm:$0x1]
    %207 = vst [vmem:[#allocation2 + $0x26] sm:$0x1] %v206
    %s208 = sld [smem:[#allocation3 + $0x27]]
    %s209 = scalar_lea.vmem %s1, %s208
    %v210 = vld [vmem:[%s209] sm:$0x1]
    %211 = vst [vmem:[#allocation2 + $0x27] sm:$0x1] %v210
    %s212 = sld [smem:[#allocation3 + $0x28]]
    %s213 = scalar_lea.vmem %s1, %s212
    %v214 = vld [vmem:[%s213] sm:$0x1]
    %215 = vst [vmem:[#allocation2 + $0x28] sm:$0x1] %v214
    %s216 = sld [smem:[#allocation3 + $0x29]]
    %s217 = scalar_lea.vmem %s1, %s216
    %v218 = vld [vmem:[%s217] sm:$0x1]
    %219 = vst [vmem:[#allocation2 + $0x29] sm:$0x1] %v218
    %s220 = sld [smem:[#allocation3 + $0x2a]]
    %s221 = scalar_lea.vmem %s1, %s220
    %v222 = vld [vmem:[%s221] sm:$0x1]
    %223 = vst [vmem:[#allocation2 + $0x2a] sm:$0x1] %v222
    %s224 = sld [smem:[#allocation3 + $0x2b]]
    %s225 = scalar_lea.vmem %s1, %s224
    %v226 = vld [vmem:[%s225] sm:$0x1]
    %227 = vst [vmem:[#allocation2 + $0x2b] sm:$0x1] %v226
    %s228 = sld [smem:[#allocation3 + $0x2c]]
    %s229 = scalar_lea.vmem %s1, %s228
    %v230 = vld [vmem:[%s229] sm:$0x1]
    %231 = vst [vmem:[#allocation2 + $0x2c] sm:$0x1] %v230
    %s232 = sld [smem:[#allocation3 + $0x2d]]
    %s233 = scalar_lea.vmem %s1, %s232
    %v234 = vld [vmem:[%s233] sm:$0x1]
    %235 = vst [vmem:[#allocation2 + $0x2d] sm:$0x1] %v234
    %s236 = sld [smem:[#allocation3 + $0x2e]]
    %s237 = scalar_lea.vmem %s1, %s236
    %v238 = vld [vmem:[%s237] sm:$0x1]
    %239 = vst [vmem:[#allocation2 + $0x2e] sm:$0x1] %v238
    %s240 = sld [smem:[#allocation3 + $0x2f]]
    %s241 = scalar_lea.vmem %s1, %s240
    %v242 = vld [vmem:[%s241] sm:$0x1]
    %243 = vst [vmem:[#allocation2 + $0x2f] sm:$0x1] %v242
    %s244 = sld [smem:[#allocation3 + $0x30]]
    %s245 = scalar_lea.vmem %s1, %s244
    %v246 = vld [vmem:[%s245] sm:$0x1]
    %247 = vst [vmem:[#allocation2 + $0x30] sm:$0x1] %v246
    %s248 = sld [smem:[#allocation3 + $0x31]]
    %s249 = scalar_lea.vmem %s1, %s248
    %v250 = vld [vmem:[%s249] sm:$0x1]
    %251 = vst [vmem:[#allocation2 + $0x31] sm:$0x1] %v250
    %s252 = sld [smem:[#allocation3 + $0x32]]
    %s253 = scalar_lea.vmem %s1, %s252
    %v254 = vld [vmem:[%s253] sm:$0x1]
    %255 = vst [vmem:[#allocation2 + $0x32] sm:$0x1] %v254
    %s256 = sld [smem:[#allocation3 + $0x33]]
    %s257 = scalar_lea.vmem %s1, %s256
    %v258 = vld [vmem:[%s257] sm:$0x1]
    %259 = vst [vmem:[#allocation2 + $0x33] sm:$0x1] %v258
    %s260 = sld [smem:[#allocation3 + $0x34]]
    %s261 = scalar_lea.vmem %s1, %s260
    %v262 = vld [vmem:[%s261] sm:$0x1]
    %263 = vst [vmem:[#allocation2 + $0x34] sm:$0x1] %v262
    %s264 = sld [smem:[#allocation3 + $0x35]]
    %s265 = scalar_lea.vmem %s1, %s264
    %v266 = vld [vmem:[%s265] sm:$0x1]
    %267 = vst [vmem:[#allocation2 + $0x35] sm:$0x1] %v266
    %s268 = sld [smem:[#allocation3 + $0x36]]
    %s269 = scalar_lea.vmem %s1, %s268
    %v270 = vld [vmem:[%s269] sm:$0x1]
    %271 = vst [vmem:[#allocation2 + $0x36] sm:$0x1] %v270
    %s272 = sld [smem:[#allocation3 + $0x37]]
    %s273 = scalar_lea.vmem %s1, %s272
    %v274 = vld [vmem:[%s273] sm:$0x1]
    %275 = vst [vmem:[#allocation2 + $0x37] sm:$0x1] %v274
    %s276 = sld [smem:[#allocation3 + $0x38]]
    %s277 = scalar_lea.vmem %s1, %s276
    %v278 = vld [vmem:[%s277] sm:$0x1]
    %279 = vst [vmem:[#allocation2 + $0x38] sm:$0x1] %v278
    %s280 = sld [smem:[#allocation3 + $0x39]]
    %s281 = scalar_lea.vmem %s1, %s280
    %v282 = vld [vmem:[%s281] sm:$0x1]
    %283 = vst [vmem:[#allocation2 + $0x39] sm:$0x1] %v282
    %s284 = sld [smem:[#allocation3 + $0x3a]]
    %s285 = scalar_lea.vmem %s1, %s284
    %v286 = vld [vmem:[%s285] sm:$0x1]
    %287 = vst [vmem:[#allocation2 + $0x3a] sm:$0x1] %v286
    %s288 = sld [smem:[#allocation3 + $0x3b]]
    %s289 = scalar_lea.vmem %s1, %s288
    %v290 = vld [vmem:[%s289] sm:$0x1]
    %291 = vst [vmem:[#allocation2 + $0x3b] sm:$0x1] %v290
    %s292 = sld [smem:[#allocation3 + $0x3c]]
    %s293 = scalar_lea.vmem %s1, %s292
    %v294 = vld [vmem:[%s293] sm:$0x1]
    %295 = vst [vmem:[#allocation2 + $0x3c] sm:$0x1] %v294
    %s296 = sld [smem:[#allocation3 + $0x3d]]
    %s297 = scalar_lea.vmem %s1, %s296
    %v298 = vld [vmem:[%s297] sm:$0x1]
    %299 = vst [vmem:[#allocation2 + $0x3d] sm:$0x1] %v298
    %s300 = sld [smem:[#allocation3 + $0x3e]]
    %s301 = scalar_lea.vmem %s1, %s300
    %v302 = vld [vmem:[%s301] sm:$0x1]
    %303 = vst [vmem:[#allocation2 + $0x3e] sm:$0x1] %v302
    %s304 = sld [smem:[#allocation3 + $0x3f]]
    %s305 = scalar_lea.vmem %s1, %s304
    %v306 = vld [vmem:[%s305] sm:$0x1]
    %307 = vst [vmem:[#allocation2 + $0x3f] sm:$0x1] %v306
    %v308 = vld [vmem:[%s8] sm:$0xff]
    %v309 = vld [vmem:[%s9] sm:$0xff]
    %v310 = vld [vmem:[#allocation2] sm:$0xff]
    %v311 = vpack.c.bf16 %v308, %v308
    %v312 = vld [vmem:[%s4] sm:$0xf]
    %v313 = vld [vmem:[%s4 + $0x4] sm:$0xf]
    %v314 = vld [vmem:[%s4 + $0x8] sm:$0xf]
    %v315 = vld [vmem:[%s4 + $0xc] sm:$0xf]
    %v320 = vunpack.c.l.b16 %v312
    %v321 = vunpack.c.l.b16 %v313
    %v322 = vunpack.c.l.b16 %v314
    %v323 = vunpack.c.l.b16 %v315
    %v324 = vpack.c.b16 %v321, %v320
    %v325 = vpack.c.b16 %v323, %v322
    %vm328 = vcmask 261120
    %v330 = vsel %vm328, %v311, 0
    %332 = vmatprep.subr.bf16.mxu0 0
    %333 = vmatpush1.bf16.msra.mxu0 %v324
    %334 = vmatprep.subr.bf16.mxu0 0
    %335 = vmatpush1.bf16.msra.mxu0 %v325
    %336 = vmatprep.subr.bf16.mxu0 0
    %337 = vmatpush1.bf16.msra.mxu0 0
    %338 = vmatprep.subr.bf16.mxu0 0
    %339 = vmatpush1.bf16.msra.mxu0 0
    %340 = vmatprep.subr.bf16.mxu0 0
    %341 = vmatpush1.bf16.msra.mxu0 0
    %342 = vmatprep.subr.bf16.mxu0 0
    %343 = vmatpush1.bf16.msra.mxu0 0
    %344 = vmatprep.subr.bf16.mxu0 0
    %345 = vmatpush1.bf16.msra.mxu0 0
    %346 = vmatprep.subr.bf16.mxu0 0
    %347 = vmatpush1.bf16.msra.mxu0 0
    %348 = vmatprep.subr.bf16.mxu0 0
    %349 = vmatpush1.bf16.msra.mxu0 0
    %350 = vmatprep.subr.bf16.mxu0 0
    %351 = vmatpush1.bf16.msra.mxu0 0
    %352 = vmatprep.subr.bf16.mxu0 0
    %353 = vmatpush1.bf16.msra.mxu0 0
    %354 = vmatprep.subr.bf16.mxu0 0
    %355 = vmatpush1.bf16.msra.mxu0 0
    %356 = vmatprep.subr.bf16.mxu0 0
    %357 = vmatpush1.bf16.msra.mxu0 0
    %358 = vmatprep.subr.bf16.mxu0 0
    %359 = vmatpush1.bf16.msra.mxu0 0
    %360 = vmatprep.subr.bf16.mxu0 0
    %361 = vmatpush1.bf16.msra.mxu0 0
    %362 = vmatprep.subr.bf16.mxu0 0
    %363 = vmatpush1.bf16.msra.mxu0 0
    %364 = vmatprep.mubr.bf16.mxu0 0
    %365 = vmatmul.mubr.bf16.gmra.mrb[0].mxu0 %v330
    %v366 = vpop.f32.mrb[0].mxu0
    %v367 = vadd.f32 0.0, %v366
    %v368 = vpop.f32.mrb[0].mxu0
    %v369 = vpop.f32.mrb[0].mxu0
    %v370 = vpop.f32.mrb[0].mxu0
    %371 = vdwg.mxu0
    %v372 = vadd.f32 %v310, %v367
    %v373 = vxor.u32 %v372, 2147483648
    %v374 = vmul.f32 %v373, 1.442695
    %v375 = vpow.pop %v374
    %v376 = vadd.f32 %v375, 1.0
    %v377 = vrcp.pop %v376
    %v378 = vmul.f32 1.0, %v377
    %v379 = vtanh.pop %v372
    %381 = vrot.lane.b32.xlu0 %v309, 32
    %v382 = vpop.permute.xlu0 %381
    %v384 = vmul.f32 %v378, %v382
    %386 = vrot.lane.b32.xlu0 %v379, 64
    %v387 = vpop.permute.xlu0 %386
    %v389 = vmul.f32 %v378, %v387
    %391 = vrot.lane.b32.xlu0 %v389, 32
    %v392 = vpop.permute.xlu0 %391
    %v394 = vadd.f32 %v384, %v392
    %v395 = vtanh.pop %v394
    %397 = vrot.lane.b32.xlu0 %v395, 64
    %v398 = vpop.permute.xlu0 %397
    %v400 = vmul.f32 %v378, %v398
    %v401 = vpack.c.bf16 %v400, %v400
    %v402 = vld [vmem:[%s2] sm:$0xf]
    %v403 = vld [vmem:[%s2 + $0x4] sm:$0xf]
    %v404 = vld [vmem:[%s2 + $0x8] sm:$0xf]
    %v405 = vld [vmem:[%s2 + $0xc] sm:$0xf]
    %v406 = vld [vmem:[%s3] sm:$0x1]
    %v408 = vlaneseq
    %v409 = vshrl.u32 %v408, 7
    %v410 = vsub.s32 0, %v409
    %v411 = vrot.slane %v406, %v410
    %414 = vrot.lane.b32.xlu0 %v401, 32
    %v415 = vpop.permute.xlu0 %414
    %v420 = vunpack.c.l.b16 %v402
    %v421 = vunpack.c.l.b16 %v403
    %v422 = vunpack.c.l.b16 %v404
    %v423 = vunpack.c.l.b16 %v405
    %v424 = vpack.c.b16 %v421, %v420
    %v425 = vpack.c.b16 %v423, %v422
    %v429 = vsel %vm328, %v415, 0
    %431 = vmatprep.subr.bf16.mxu0 0
    %432 = vmatpush1.bf16.msra.mxu0 %v424
    %433 = vmatprep.subr.bf16.mxu0 0
    %434 = vmatpush1.bf16.msra.mxu0 %v425
    %435 = vmatprep.subr.bf16.mxu0 0
    %436 = vmatpush1.bf16.msra.mxu0 0
    %437 = vmatprep.subr.bf16.mxu0 0
    %438 = vmatpush1.bf16.msra.mxu0 0
    %439 = vmatprep.subr.bf16.mxu0 0
    %440 = vmatpush1.bf16.msra.mxu0 0
    %441 = vmatprep.subr.bf16.mxu0 0
    %442 = vmatpush1.bf16.msra.mxu0 0
    %443 = vmatprep.subr.bf16.mxu0 0
    %444 = vmatpush1.bf16.msra.mxu0 0
    %445 = vmatprep.subr.bf16.mxu0 0
    %446 = vmatpush1.bf16.msra.mxu0 0
    %447 = vmatprep.subr.bf16.mxu0 0
    %448 = vmatpush1.bf16.msra.mxu0 0
    %449 = vmatprep.subr.bf16.mxu0 0
    %450 = vmatpush1.bf16.msra.mxu0 0
    %451 = vmatprep.subr.bf16.mxu0 0
    %452 = vmatpush1.bf16.msra.mxu0 0
    %453 = vmatprep.subr.bf16.mxu0 0
    %454 = vmatpush1.bf16.msra.mxu0 0
    %455 = vmatprep.subr.bf16.mxu0 0
    %456 = vmatpush1.bf16.msra.mxu0 0
    %457 = vmatprep.subr.bf16.mxu0 0
    %458 = vmatpush1.bf16.msra.mxu0 0
    %459 = vmatprep.subr.bf16.mxu0 0
    %460 = vmatpush1.bf16.msra.mxu0 0
    %461 = vmatprep.subr.bf16.mxu0 0
    %462 = vmatpush1.bf16.msra.mxu0 0
    %463 = vmatprep.mubr.bf16.mxu0 0
    %464 = vmatmul.mubr.bf16.gmra.mrb[0].mxu0 %v429
    %v465 = vpop.f32.mrb[0].mxu0
    %v466 = vadd.f32 %v411, %v465
    %v467 = vpop.f32.mrb[0].mxu0
    %v468 = vpop.f32.mrb[0].mxu0
    %v469 = vpop.f32.mrb[0].mxu0
    %470 = vdwg.mxu0
    %471 = vst [vmem:[#allocation2] sm:$0xff] %v466
    %v472 = vld [vmem:[#allocation2 + $0x8] sm:$0xff]
    %v473 = vld [vmem:[%s4] sm:$0xf]
    %v474 = vld [vmem:[%s4 + $0x4] sm:$0xf]
    %v475 = vld [vmem:[%s4 + $0x8] sm:$0xf]
    %v476 = vld [vmem:[%s4 + $0xc] sm:$0xf]
    %v481 = vunpack.c.l.b16 %v473
    %v482 = vunpack.c.l.b16 %v474
    %v483 = vunpack.c.l.b16 %v475
    %v484 = vunpack.c.l.b16 %v476
    %v485 = vpack.c.b16 %v482, %v481
    %v486 = vpack.c.b16 %v484, %v483
    %489 = vmatprep.subr.bf16.mxu0 0
    %490 = vmatpush1.bf16.msra.mxu0 %v485
    %491 = vmatprep.subr.bf16.mxu0 0
    %492 = vmatpush1.bf16.msra.mxu0 %v486
    %493 = vmatprep.subr.bf16.mxu0 0
    %494 = vmatpush1.bf16.msra.mxu0 0
    %495 = vmatprep.subr.bf16.mxu0 0
    %496 = vmatpush1.bf16.msra.mxu0 0
    %497 = vmatprep.subr.bf16.mxu0 0
    %498 = vmatpush1.bf16.msra.mxu0 0
    %499 = vmatprep.subr.bf16.mxu0 0
    %500 = vmatpush1.bf16.msra.mxu0 0
    %501 = vmatprep.subr.bf16.mxu0 0
    %502 = vmatpush1.bf16.msra.mxu0 0
    %503 = vmatprep.subr.bf16.mxu0 0
    %504 = vmatpush1.bf16.msra.mxu0 0
    %505 = vmatprep.subr.bf16.mxu0 0
    %506 = vmatpush1.bf16.msra.mxu0 0
    %507 = vmatprep.subr.bf16.mxu0 0
    %508 = vmatpush1.bf16.msra.mxu0 0
    %509 = vmatprep.subr.bf16.mxu0 0
    %510 = vmatpush1.bf16.msra.mxu0 0
    %511 = vmatprep.subr.bf16.mxu0 0
    %512 = vmatpush1.bf16.msra.mxu0 0
    %513 = vmatprep.subr.bf16.mxu0 0
    %514 = vmatpush1.bf16.msra.mxu0 0
    %515 = vmatprep.subr.bf16.mxu0 0
    %516 = vmatpush1.bf16.msra.mxu0 0
    %517 = vmatprep.subr.bf16.mxu0 0
    %518 = vmatpush1.bf16.msra.mxu0 0
    %519 = vmatprep.subr.bf16.mxu0 0
    %520 = vmatpush1.bf16.msra.mxu0 0
    %521 = vmatprep.mubr.bf16.mxu0 0
    %522 = vmatmul.mubr.bf16.gmra.mrb[0].mxu0 %v429
    %v523 = vpop.f32.mrb[0].mxu0
    %v524 = vadd.f32 0.0, %v523
    %v525 = vpop.f32.mrb[0].mxu0
    %v526 = vpop.f32.mrb[0].mxu0
    %v527 = vpop.f32.mrb[0].mxu0
    %528 = vdwg.mxu0
    %v529 = vadd.f32 %v472, %v524
    %v530 = vxor.u32 %v529, 2147483648
    %v531 = vmul.f32 %v530, 1.442695
    %v532 = vpow.pop %v531
    %v533 = vadd.f32 %v532, 1.0
    %v534 = vrcp.pop %v533
    %v535 = vmul.f32 1.0, %v534
    %v536 = vtanh.pop %v529
    %v537 = vmul.f32 %v535, %v394
    %539 = vrot.lane.b32.xlu0 %v536, 64
    %v540 = vpop.permute.xlu0 %539
    %v542 = vmul.f32 %v535, %v540
    %544 = vrot.lane.b32.xlu0 %v542, 32
    %v545 = vpop.permute.xlu0 %544
    %v547 = vadd.f32 %v537, %v545
    %v548 = vtanh.pop %v547
    %550 = vrot.lane.b32.xlu0 %v548, 64
    %v551 = vpop.permute.xlu0 %550
    %v553 = vmul.f32 %v535, %v551
    %v554 = vpack.c.bf16 %v553, %v553
    %v555 = vld [vmem:[%s2] sm:$0xf]
    %v556 = vld [vmem:[%s2 + $0x4] sm:$0xf]
    %v557 = vld [vmem:[%s2 + $0x8] sm:$0xf]
    %v558 = vld [vmem:[%s2 + $0xc] sm:$0xf]
    %v559 = vld [vmem:[%s3] sm:$0x1]
    %v561 = vlaneseq
    %v562 = vshrl.u32 %v561, 7
    %v563 = vsub.s32 0, %v562
    %v564 = vrot.slane %v559, %v563
    %567 = vrot.lane.b32.xlu0 %v554, 32
    %v568 = vpop.permute.xlu0 %567
    %v573 = vunpack.c.l.b16 %v555
    %v574 = vunpack.c.l.b16 %v556
    %v575 = vunpack.c.l.b16 %v557
    %v576 = vunpack.c.l.b16 %v558
    %v577 = vpack.c.b16 %v574, %v573
    %v578 = vpack.c.b16 %v576, %v575
    %v582 = vsel %vm328, %v568, 0
    %584 = vmatprep.subr.bf16.mxu0 0
    %585 = vmatpush1.bf16.msra.mxu0 %v577
    %586 = vmatprep.subr.bf16.mxu0 0
    %587 = vmatpush1.bf16.msra.mxu0 %v578
    %588 = vmatprep.subr.bf16.mxu0 0
    %589 = vmatpush1.bf16.msra.mxu0 0
    %590 = vmatprep.subr.bf16.mxu0 0
    %591 = vmatpush1.bf16.msra.mxu0 0
    %592 = vmatprep.subr.bf16.mxu0 0
    %593 = vmatpush1.bf16.msra.mxu0 0
    %594 = vmatprep.subr.bf16.mxu0 0
    %595 = vmatpush1.bf16.msra.mxu0 0
    %596 = vmatprep.subr.bf16.mxu0 0
    %597 = vmatpush1.bf16.msra.mxu0 0
    %598 = vmatprep.subr.bf16.mxu0 0
    %599 = vmatpush1.bf16.msra.mxu0 0
    %600 = vmatprep.subr.bf16.mxu0 0
    %601 = vmatpush1.bf16.msra.mxu0 0
    %602 = vmatprep.subr.bf16.mxu0 0
    %603 = vmatpush1.bf16.msra.mxu0 0
    %604 = vmatprep.subr.bf16.mxu0 0
    %605 = vmatpush1.bf16.msra.mxu0 0
    %606 = vmatprep.subr.bf16.mxu0 0
    %607 = vmatpush1.bf16.msra.mxu0 0
    %608 = vmatprep.subr.bf16.mxu0 0
    %609 = vmatpush1.bf16.msra.mxu0 0
    %610 = vmatprep.subr.bf16.mxu0 0
    %611 = vmatpush1.bf16.msra.mxu0 0
    %612 = vmatprep.subr.bf16.mxu0 0
    %613 = vmatpush1.bf16.msra.mxu0 0
    %614 = vmatprep.subr.bf16.mxu0 0
    %615 = vmatpush1.bf16.msra.mxu0 0
    %616 = vmatprep.mubr.bf16.mxu0 0
    %617 = vmatmul.mubr.bf16.gmra.mrb[0].mxu0 %v582
    %v618 = vpop.f32.mrb[0].mxu0
    %v619 = vadd.f32 %v564, %v618
    %v620 = vpop.f32.mrb[0].mxu0
    %v621 = vpop.f32.mrb[0].mxu0
    %v622 = vpop.f32.mrb[0].mxu0
    %623 = vdwg.mxu0
    %624 = vst [vmem:[#allocation2 + $0x8] sm:$0xff] %v619
    %v625 = vld [vmem:[#allocation2 + $0x10] sm:$0xff]
    %v626 = vld [vmem:[%s4] sm:$0xf]
    %v627 = vld [vmem:[%s4 + $0x4] sm:$0xf]
    %v628 = vld [vmem:[%s4 + $0x8] sm:$0xf]
    %v629 = vld [vmem:[%s4 + $0xc] sm:$0xf]
    %v634 = vunpack.c.l.b16 %v626
    %v635 = vunpack.c.l.b16 %v627
    %v636 = vunpack.c.l.b16 %v628
    %v637 = vunpack.c.l.b16 %v629
    %v638 = vpack.c.b16 %v635, %v634
    %v639 = vpack.c.b16 %v637, %v636
    %642 = vmatprep.subr.bf16.mxu0 0
    %643 = vmatpush1.bf16.msra.mxu0 %v638
    %644 = vmatprep.subr.bf16.mxu0 0
    %645 = vmatpush1.bf16.msra.mxu0 %v639
    %646 = vmatprep.subr.bf16.mxu0 0
    %647 = vmatpush1.bf16.msra.mxu0 0
    %648 = vmatprep.subr.bf16.mxu0 0
    %649 = vmatpush1.bf16.msra.mxu0 0
    %650 = vmatprep.subr.bf16.mxu0 0
    %651 = vmatpush1.bf16.msra.mxu0 0
    %652 = vmatprep.subr.bf16.mxu0 0
    %653 = vmatpush1.bf16.msra.mxu0 0
    %654 = vmatprep.subr.bf16.mxu0 0
    %655 = vmatpush1.bf16.msra.mxu0 0
    %656 = vmatprep.subr.bf16.mxu0 0
    %657 = vmatpush1.bf16.msra.mxu0 0
    %658 = vmatprep.subr.bf16.mxu0 0
    %659 = vmatpush1.bf16.msra.mxu0 0
    %660 = vmatprep.subr.bf16.mxu0 0
    %661 = vmatpush1.bf16.msra.mxu0 0
    %662 = vmatprep.subr.bf16.mxu0 0
    %663 = vmatpush1.bf16.msra.mxu0 0
    %664 = vmatprep.subr.bf16.mxu0 0
    %665 = vmatpush1.bf16.msra.mxu0 0
    %666 = vmatprep.subr.bf16.mxu0 0
    %667 = vmatpush1.bf16.msra.mxu0 0
    %668 = vmatprep.subr.bf16.mxu0 0
    %669 = vmatpush1.bf16.msra.mxu0 0
    %670 = vmatprep.subr.bf16.mxu0 0
    %671 = vmatpush1.bf16.msra.mxu0 0
    %672 = vmatprep.subr.bf16.mxu0 0
    %673 = vmatpush1.bf16.msra.mxu0 0
    %674 = vmatprep.mubr.bf16.mxu0 0
    %675 = vmatmul.mubr.bf16.gmra.mrb[0].mxu0 %v582
    %v676 = vpop.f32.mrb[0].mxu0
    %v677 = vadd.f32 0.0, %v676
    %v678 = vpop.f32.mrb[0].mxu0
    %v679 = vpop.f32.mrb[0].mxu0
    %v680 = vpop.f32.mrb[0].mxu0
    %681 = vdwg.mxu0
    %v682 = vadd.f32 %v625, %v677
    %v683 = vxor.u32 %v682, 2147483648
    %v684 = vmul.f32 %v683, 1.442695
    %v685 = vpow.pop %v684
    %v686 = vadd.f32 %v685, 1.0
    %v687 = vrcp.pop %v686
    %v688 = vmul.f32 1.0, %v687
    %v689 = vtanh.pop %v682
    %v690 = vmul.f32 %v688, %v547
    %692 = vrot.lane.b32.xlu0 %v689, 64
    %v693 = vpop.permute.xlu0 %692
    %v695 = vmul.f32 %v688, %v693
    %697 = vrot.lane.b32.xlu0 %v695, 32
    %v698 = vpop.permute.xlu0 %697
    %v700 = vadd.f32 %v690, %v698
    %v701 = vtanh.pop %v700
    %703 = vrot.lane.b32.xlu0 %v701, 64
    %v704 = vpop.permute.xlu0 %703
    %v706 = vmul.f32 %v688, %v704
    %v707 = vpack.c.bf16 %v706, %v706
    %v708 = vld [vmem:[%s2] sm:$0xf]
    %v709 = vld [vmem:[%s2 + $0x4] sm:$0xf]
    %v710 = vld [vmem:[%s2 + $0x8] sm:$0xf]
    %v711 = vld [vmem:[%s2 + $0xc] sm:$0xf]
    %v712 = vld [vmem:[%s3] sm:$0x1]
    %v714 = vlaneseq
    %v715 = vshrl.u32 %v714, 7
    %v716 = vsub.s32 0, %v715
    %v717 = vrot.slane %v712, %v716
    %720 = vrot.lane.b32.xlu0 %v707, 32
    %v721 = vpop.permute.xlu0 %720
    %v726 = vunpack.c.l.b16 %v708
    %v727 = vunpack.c.l.b16 %v709
    %v728 = vunpack.c.l.b16 %v710
    %v729 = vunpack.c.l.b16 %v711
    %v730 = vpack.c.b16 %v727, %v726
    %v731 = vpack.c.b16 %v729, %v728
    %v735 = vsel %vm328, %v721, 0
    %737 = vmatprep.subr.bf16.mxu0 0
    %738 = vmatpush1.bf16.msra.mxu0 %v730
    %739 = vmatprep.subr.bf16.mxu0 0
    %740 = vmatpush1.bf16.msra.mxu0 %v731
    %741 = vmatprep.subr.bf16.mxu0 0
    %742 = vmatpush1.bf16.msra.mxu0 0
    %743 = vmatprep.subr.bf16.mxu0 0
    %744 = vmatpush1.bf16.msra.mxu0 0
    %745 = vmatprep.subr.bf16.mxu0 0
    %746 = vmatpush1.bf16.msra.mxu0 0
    %747 = vmatprep.subr.bf16.mxu0 0
    %748 = vmatpush1.bf16.msra.mxu0 0
    %749 = vmatprep.subr.bf16.mxu0 0
    %750 = vmatpush1.bf16.msra.mxu0 0
    %751 = vmatprep.subr.bf16.mxu0 0
    %752 = vmatpush1.bf16.msra.mxu0 0
    %753 = vmatprep.subr.bf16.mxu0 0
    %754 = vmatpush1.bf16.msra.mxu0 0
    %755 = vmatprep.subr.bf16.mxu0 0
    %756 = vmatpush1.bf16.msra.mxu0 0
    %757 = vmatprep.subr.bf16.mxu0 0
    %758 = vmatpush1.bf16.msra.mxu0 0
    %759 = vmatprep.subr.bf16.mxu0 0
    %760 = vmatpush1.bf16.msra.mxu0 0
    %761 = vmatprep.subr.bf16.mxu0 0
    %762 = vmatpush1.bf16.msra.mxu0 0
    %763 = vmatprep.subr.bf16.mxu0 0
    %764 = vmatpush1.bf16.msra.mxu0 0
    %765 = vmatprep.subr.bf16.mxu0 0
    %766 = vmatpush1.bf16.msra.mxu0 0
    %767 = vmatprep.subr.bf16.mxu0 0
    %768 = vmatpush1.bf16.msra.mxu0 0
    %769 = vmatprep.mubr.bf16.mxu0 0
    %770 = vmatmul.mubr.bf16.gmra.mrb[0].mxu0 %v735
    %v771 = vpop.f32.mrb[0].mxu0
    %v772 = vadd.f32 %v717, %v771
    %v773 = vpop.f32.mrb[0].mxu0
    %v774 = vpop.f32.mrb[0].mxu0
    %v775 = vpop.f32.mrb[0].mxu0
    %776 = vdwg.mxu0
    %777 = vst [vmem:[#allocation2 + $0x10] sm:$0xff] %v772
    %v778 = vld [vmem:[#allocation2 + $0x18] sm:$0xff]
    %v779 = vld [vmem:[%s4] sm:$0xf]
    %v780 = vld [vmem:[%s4 + $0x4] sm:$0xf]
    %v781 = vld [vmem:[%s4 + $0x8] sm:$0xf]
    %v782 = vld [vmem:[%s4 + $0xc] sm:$0xf]
    %v787 = vunpack.c.l.b16 %v779
    %v788 = vunpack.c.l.b16 %v780
    %v789 = vunpack.c.l.b16 %v781
    %v790 = vunpack.c.l.b16 %v782
    %v791 = vpack.c.b16 %v788, %v787
    %v792 = vpack.c.b16 %v790, %v789
    %795 = vmatprep.subr.bf16.mxu0 0
    %796 = vmatpush1.bf16.msra.mxu0 %v791
    %797 = vmatprep.subr.bf16.mxu0 0
    %798 = vmatpush1.bf16.msra.mxu0 %v792
    %799 = vmatprep.subr.bf16.mxu0 0
    %800 = vmatpush1.bf16.msra.mxu0 0
    %801 = vmatprep.subr.bf16.mxu0 0
    %802 = vmatpush1.bf16.msra.mxu0 0
    %803 = vmatprep.subr.bf16.mxu0 0
    %804 = vmatpush1.bf16.msra.mxu0 0
    %805 = vmatprep.subr.bf16.mxu0 0
    %806 = vmatpush1.bf16.msra.mxu0 0
    %807 = vmatprep.subr.bf16.mxu0 0
    %808 = vmatpush1.bf16.msra.mxu0 0
    %809 = vmatprep.subr.bf16.mxu0 0
    %810 = vmatpush1.bf16.msra.mxu0 0
    %811 = vmatprep.subr.bf16.mxu0 0
    %812 = vmatpush1.bf16.msra.mxu0 0
    %813 = vmatprep.subr.bf16.mxu0 0
    %814 = vmatpush1.bf16.msra.mxu0 0
    %815 = vmatprep.subr.bf16.mxu0 0
    %816 = vmatpush1.bf16.msra.mxu0 0
    %817 = vmatprep.subr.bf16.mxu0 0
    %818 = vmatpush1.bf16.msra.mxu0 0
    %819 = vmatprep.subr.bf16.mxu0 0
    %820 = vmatpush1.bf16.msra.mxu0 0
    %821 = vmatprep.subr.bf16.mxu0 0
    %822 = vmatpush1.bf16.msra.mxu0 0
    %823 = vmatprep.subr.bf16.mxu0 0
    %824 = vmatpush1.bf16.msra.mxu0 0
    %825 = vmatprep.subr.bf16.mxu0 0
    %826 = vmatpush1.bf16.msra.mxu0 0
    %827 = vmatprep.mubr.bf16.mxu0 0
    %828 = vmatmul.mubr.bf16.gmra.mrb[0].mxu0 %v735
    %v829 = vpop.f32.mrb[0].mxu0
    %v830 = vadd.f32 0.0, %v829
    %v831 = vpop.f32.mrb[0].mxu0
    %v832 = vpop.f32.mrb[0].mxu0
    %v833 = vpop.f32.mrb[0].mxu0
    %834 = vdwg.mxu0
    %v835 = vadd.f32 %v778, %v830
    %v836 = vxor.u32 %v835, 2147483648
    %v837 = vmul.f32 %v836, 1.442695
    %v838 = vpow.pop %v837
    %v839 = vadd.f32 %v838, 1.0
    %v840 = vrcp.pop %v839
    %v841 = vmul.f32 1.0, %v840
    %v842 = vtanh.pop %v835
    %v843 = vmul.f32 %v841, %v700
    %845 = vrot.lane.b32.xlu0 %v842, 64
    %v846 = vpop.permute.xlu0 %845
    %v848 = vmul.f32 %v841, %v846
    %850 = vrot.lane.b32.xlu0 %v848, 32
    %v851 = vpop.permute.xlu0 %850
    %v853 = vadd.f32 %v843, %v851
    %v854 = vtanh.pop %v853
    %856 = vrot.lane.b32.xlu0 %v854, 64
    %v857 = vpop.permute.xlu0 %856
    %v859 = vmul.f32 %v841, %v857
    %v860 = vpack.c.bf16 %v859, %v859
    %v861 = vld [vmem:[%s2] sm:$0xf]
    %v862 = vld [vmem:[%s2 + $0x4] sm:$0xf]
    %v863 = vld [vmem:[%s2 + $0x8] sm:$0xf]
    %v864 = vld [vmem:[%s2 + $0xc] sm:$0xf]
    %v865 = vld [vmem:[%s3] sm:$0x1]
    %v867 = vlaneseq
    %v868 = vshrl.u32 %v867, 7
    %v869 = vsub.s32 0, %v868
    %v870 = vrot.slane %v865, %v869
    %873 = vrot.lane.b32.xlu0 %v860, 32
    %v874 = vpop.permute.xlu0 %873
    %v879 = vunpack.c.l.b16 %v861
    %v880 = vunpack.c.l.b16 %v862
    %v881 = vunpack.c.l.b16 %v863
    %v882 = vunpack.c.l.b16 %v864
    %v883 = vpack.c.b16 %v880, %v879
    %v884 = vpack.c.b16 %v882, %v881
    %v888 = vsel %vm328, %v874, 0
    %890 = vmatprep.subr.bf16.mxu0 0
    %891 = vmatpush1.bf16.msra.mxu0 %v883
    %892 = vmatprep.subr.bf16.mxu0 0
    %893 = vmatpush1.bf16.msra.mxu0 %v884
    %894 = vmatprep.subr.bf16.mxu0 0
    %895 = vmatpush1.bf16.msra.mxu0 0
    %896 = vmatprep.subr.bf16.mxu0 0
    %897 = vmatpush1.bf16.msra.mxu0 0
    %898 = vmatprep.subr.bf16.mxu0 0
    %899 = vmatpush1.bf16.msra.mxu0 0
    %900 = vmatprep.subr.bf16.mxu0 0
    %901 = vmatpush1.bf16.msra.mxu0 0
    %902 = vmatprep.subr.bf16.mxu0 0
    %903 = vmatpush1.bf16.msra.mxu0 0
    %904 = vmatprep.subr.bf16.mxu0 0
    %905 = vmatpush1.bf16.msra.mxu0 0
    %906 = vmatprep.subr.bf16.mxu0 0
    %907 = vmatpush1.bf16.msra.mxu0 0
    %908 = vmatprep.subr.bf16.mxu0 0
    %909 = vmatpush1.bf16.msra.mxu0 0
    %910 = vmatprep.subr.bf16.mxu0 0
    %911 = vmatpush1.bf16.msra.mxu0 0
    %912 = vmatprep.subr.bf16.mxu0 0
    %913 = vmatpush1.bf16.msra.mxu0 0
    %914 = vmatprep.subr.bf16.mxu0 0
    %915 = vmatpush1.bf16.msra.mxu0 0
    %916 = vmatprep.subr.bf16.mxu0 0
    %917 = vmatpush1.bf16.msra.mxu0 0
    %918 = vmatprep.subr.bf16.mxu0 0
    %919 = vmatpush1.bf16.msra.mxu0 0
    %920 = vmatprep.subr.bf16.mxu0 0
    %921 = vmatpush1.bf16.msra.mxu0 0
    %922 = vmatprep.mubr.bf16.mxu0 0
    %923 = vmatmul.mubr.bf16.gmra.mrb[0].mxu0 %v888
    %v924 = vpop.f32.mrb[0].mxu0
    %v925 = vadd.f32 %v870, %v924
    %v926 = vpop.f32.mrb[0].mxu0
    %v927 = vpop.f32.mrb[0].mxu0
    %v928 = vpop.f32.mrb[0].mxu0
    %929 = vdwg.mxu0
    %930 = vst [vmem:[#allocation2 + $0x18] sm:$0xff] %v925
    %v931 = vld [vmem:[#allocation2 + $0x20] sm:$0xff]
    %v932 = vld [vmem:[%s4] sm:$0xf]
    %v933 = vld [vmem:[%s4 + $0x4] sm:$0xf]
    %v934 = vld [vmem:[%s4 + $0x8] sm:$0xf]
    %v935 = vld [vmem:[%s4 + $0xc] sm:$0xf]
    %v940 = vunpack.c.l.b16 %v932
    %v941 = vunpack.c.l.b16 %v933
    %v942 = vunpack.c.l.b16 %v934
    %v943 = vunpack.c.l.b16 %v935
    %v944 = vpack.c.b16 %v941, %v940
    %v945 = vpack.c.b16 %v943, %v942
    %948 = vmatprep.subr.bf16.mxu0 0
    %949 = vmatpush1.bf16.msra.mxu0 %v944
    %950 = vmatprep.subr.bf16.mxu0 0
    %951 = vmatpush1.bf16.msra.mxu0 %v945
    %952 = vmatprep.subr.bf16.mxu0 0
    %953 = vmatpush1.bf16.msra.mxu0 0
    %954 = vmatprep.subr.bf16.mxu0 0
    %955 = vmatpush1.bf16.msra.mxu0 0
    %956 = vmatprep.subr.bf16.mxu0 0
    %957 = vmatpush1.bf16.msra.mxu0 0
    %958 = vmatprep.subr.bf16.mxu0 0
    %959 = vmatpush1.bf16.msra.mxu0 0
    %960 = vmatprep.subr.bf16.mxu0 0
    %961 = vmatpush1.bf16.msra.mxu0 0
    %962 = vmatprep.subr.bf16.mxu0 0
    %963 = vmatpush1.bf16.msra.mxu0 0
    %964 = vmatprep.subr.bf16.mxu0 0
    %965 = vmatpush1.bf16.msra.mxu0 0
    %966 = vmatprep.subr.bf16.mxu0 0
    %967 = vmatpush1.bf16.msra.mxu0 0
    %968 = vmatprep.subr.bf16.mxu0 0
    %969 = vmatpush1.bf16.msra.mxu0 0
    %970 = vmatprep.subr.bf16.mxu0 0
    %971 = vmatpush1.bf16.msra.mxu0 0
    %972 = vmatprep.subr.bf16.mxu0 0
    %973 = vmatpush1.bf16.msra.mxu0 0
    %974 = vmatprep.subr.bf16.mxu0 0
    %975 = vmatpush1.bf16.msra.mxu0 0
    %976 = vmatprep.subr.bf16.mxu0 0
    %977 = vmatpush1.bf16.msra.mxu0 0
    %978 = vmatprep.subr.bf16.mxu0 0
    %979 = vmatpush1.bf16.msra.mxu0 0
    %980 = vmatprep.mubr.bf16.mxu0 0
    %981 = vmatmul.mubr.bf16.gmra.mrb[0].mxu0 %v888
    %v982 = vpop.f32.mrb[0].mxu0
    %v983 = vadd.f32 0.0, %v982
    %v984 = vpop.f32.mrb[0].mxu0
    %v985 = vpop.f32.mrb[0].mxu0
    %v986 = vpop.f32.mrb[0].mxu0
    %987 = vdwg.mxu0
    %v988 = vadd.f32 %v931, %v983
    %v989 = vxor.u32 %v988, 2147483648
    %v990 = vmul.f32 %v989, 1.442695
    %v991 = vpow.pop %v990
    %v992 = vadd.f32 %v991, 1.0
    %v993 = vrcp.pop %v992
    %v994 = vmul.f32 1.0, %v993
    %v995 = vtanh.pop %v988
    %v996 = vmul.f32 %v994, %v853
    %998 = vrot.lane.b32.xlu0 %v995, 64
    %v999 = vpop.permute.xlu0 %998
    %v1001 = vmul.f32 %v994, %v999
    %1003 = vrot.lane.b32.xlu0 %v1001, 32
    %v1004 = vpop.permute.xlu0 %1003
    %v1006 = vadd.f32 %v996, %v1004
    %v1007 = vtanh.pop %v1006
    %1009 = vrot.lane.b32.xlu0 %v1007, 64
    %v1010 = vpop.permute.xlu0 %1009
    %v1012 = vmul.f32 %v994, %v1010
    %v1013 = vpack.c.bf16 %v1012, %v1012
    %v1014 = vld [vmem:[%s2] sm:$0xf]
    %v1015 = vld [vmem:[%s2 + $0x4] sm:$0xf]
    %v1016 = vld [vmem:[%s2 + $0x8] sm:$0xf]
    %v1017 = vld [vmem:[%s2 + $0xc] sm:$0xf]
    %v1018 = vld [vmem:[%s3] sm:$0x1]
    %v1020 = vlaneseq
    %v1021 = vshrl.u32 %v1020, 7
    %v1022 = vsub.s32 0, %v1021
    %v1023 = vrot.slane %v1018, %v1022
    %1026 = vrot.lane.b32.xlu0 %v1013, 32
    %v1027 = vpop.permute.xlu0 %1026
    %v1032 = vunpack.c.l.b16 %v1014
    %v1033 = vunpack.c.l.b16 %v1015
    %v1034 = vunpack.c.l.b16 %v1016
    %v1035 = vunpack.c.l.b16 %v1017
    %v1036 = vpack.c.b16 %v1033, %v1032
    %v1037 = vpack.c.b16 %v1035, %v1034
    %v1041 = vsel %vm328, %v1027, 0
    %1043 = vmatprep.subr.bf16.mxu0 0
    %1044 = vmatpush1.bf16.msra.mxu0 %v1036
    %1045 = vmatprep.subr.bf16.mxu0 0
    %1046 = vmatpush1.bf16.msra.mxu0 %v1037
    %1047 = vmatprep.subr.bf16.mxu0 0
    %1048 = vmatpush1.bf16.msra.mxu0 0
    %1049 = vmatprep.subr.bf16.mxu0 0
    %1050 = vmatpush1.bf16.msra.mxu0 0
    %1051 = vmatprep.subr.bf16.mxu0 0
    %1052 = vmatpush1.bf16.msra.mxu0 0
    %1053 = vmatprep.subr.bf16.mxu0 0
    %1054 = vmatpush1.bf16.msra.mxu0 0
    %1055 = vmatprep.subr.bf16.mxu0 0
    %1056 = vmatpush1.bf16.msra.mxu0 0
    %1057 = vmatprep.subr.bf16.mxu0 0
    %1058 = vmatpush1.bf16.msra.mxu0 0
    %1059 = vmatprep.subr.bf16.mxu0 0
    %1060 = vmatpush1.bf16.msra.mxu0 0
    %1061 = vmatprep.subr.bf16.mxu0 0
    %1062 = vmatpush1.bf16.msra.mxu0 0
    %1063 = vmatprep.subr.bf16.mxu0 0
    %1064 = vmatpush1.bf16.msra.mxu0 0
    %1065 = vmatprep.subr.bf16.mxu0 0
    %1066 = vmatpush1.bf16.msra.mxu0 0
    %1067 = vmatprep.subr.bf16.mxu0 0
    %1068 = vmatpush1.bf16.msra.mxu0 0
    %1069 = vmatprep.subr.bf16.mxu0 0
    %1070 = vmatpush1.bf16.msra.mxu0 0
    %1071 = vmatprep.subr.bf16.mxu0 0
    %1072 = vmatpush1.bf16.msra.mxu0 0
    %1073 = vmatprep.subr.bf16.mxu0 0
    %1074 = vmatpush1.bf16.msra.mxu0 0
    %1075 = vmatprep.mubr.bf16.mxu0 0
    %1076 = vmatmul.mubr.bf16.gmra.mrb[0].mxu0 %v1041
    %v1077 = vpop.f32.mrb[0].mxu0
    %v1078 = vadd.f32 %v1023, %v1077
    %v1079 = vpop.f32.mrb[0].mxu0
    %v1080 = vpop.f32.mrb[0].mxu0
    %v1081 = vpop.f32.mrb[0].mxu0
    %1082 = vdwg.mxu0
    %1083 = vst [vmem:[#allocation2 + $0x20] sm:$0xff] %v1078
    %v1084 = vld [vmem:[#allocation2 + $0x28] sm:$0xff]
    %v1085 = vld [vmem:[%s4] sm:$0xf]
    %v1086 = vld [vmem:[%s4 + $0x4] sm:$0xf]
    %v1087 = vld [vmem:[%s4 + $0x8] sm:$0xf]
    %v1088 = vld [vmem:[%s4 + $0xc] sm:$0xf]
    %v1093 = vunpack.c.l.b16 %v1085
    %v1094 = vunpack.c.l.b16 %v1086
    %v1095 = vunpack.c.l.b16 %v1087
    %v1096 = vunpack.c.l.b16 %v1088
    %v1097 = vpack.c.b16 %v1094, %v1093
    %v1098 = vpack.c.b16 %v1096, %v1095
    %1101 = vmatprep.subr.bf16.mxu0 0
    %1102 = vmatpush1.bf16.msra.mxu0 %v1097
    %1103 = vmatprep.subr.bf16.mxu0 0
    %1104 = vmatpush1.bf16.msra.mxu0 %v1098
    %1105 = vmatprep.subr.bf16.mxu0 0
    %1106 = vmatpush1.bf16.msra.mxu0 0
    %1107 = vmatprep.subr.bf16.mxu0 0
    %1108 = vmatpush1.bf16.msra.mxu0 0
    %1109 = vmatprep.subr.bf16.mxu0 0
    %1110 = vmatpush1.bf16.msra.mxu0 0
    %1111 = vmatprep.subr.bf16.mxu0 0
    %1112 = vmatpush1.bf16.msra.mxu0 0
    %1113 = vmatprep.subr.bf16.mxu0 0
    %1114 = vmatpush1.bf16.msra.mxu0 0
    %1115 = vmatprep.subr.bf16.mxu0 0
    %1116 = vmatpush1.bf16.msra.mxu0 0
    %1117 = vmatprep.subr.bf16.mxu0 0
    %1118 = vmatpush1.bf16.msra.mxu0 0
    %1119 = vmatprep.subr.bf16.mxu0 0
    %1120 = vmatpush1.bf16.msra.mxu0 0
    %1121 = vmatprep.subr.bf16.mxu0 0
    %1122 = vmatpush1.bf16.msra.mxu0 0
    %1123 = vmatprep.subr.bf16.mxu0 0
    %1124 = vmatpush1.bf16.msra.mxu0 0
    %1125 = vmatprep.subr.bf16.mxu0 0
    %1126 = vmatpush1.bf16.msra.mxu0 0
    %1127 = vmatprep.subr.bf16.mxu0 0
    %1128 = vmatpush1.bf16.msra.mxu0 0
    %1129 = vmatprep.subr.bf16.mxu0 0
    %1130 = vmatpush1.bf16.msra.mxu0 0
    %1131 = vmatprep.subr.bf16.mxu0 0
    %1132 = vmatpush1.bf16.msra.mxu0 0
    %1133 = vmatprep.mubr.bf16.mxu0 0
    %1134 = vmatmul.mubr.bf16.gmra.mrb[0].mxu0 %v1041
    %v1135 = vpop.f32.mrb[0].mxu0
    %v1136 = vadd.f32 0.0, %v1135
    %v1137 = vpop.f32.mrb[0].mxu0
    %v1138 = vpop.f32.mrb[0].mxu0
    %v1139 = vpop.f32.mrb[0].mxu0
    %1140 = vdwg.mxu0
    %v1141 = vadd.f32 %v1084, %v1136
    %v1142 = vxor.u32 %v1141, 2147483648
    %v1143 = vmul.f32 %v1142, 1.442695
    %v1144 = vpow.pop %v1143
    %v1145 = vadd.f32 %v1144, 1.0
    %v1146 = vrcp.pop %v1145
    %v1147 = vmul.f32 1.0, %v1146
    %v1148 = vtanh.pop %v1141
    %v1149 = vmul.f32 %v1147, %v1006
    %1151 = vrot.lane.b32.xlu0 %v1148, 64
    %v1152 = vpop.permute.xlu0 %1151
    %v1154 = vmul.f32 %v1147, %v1152
    %1156 = vrot.lane.b32.xlu0 %v1154, 32
    %v1157 = vpop.permute.xlu0 %1156
    %v1159 = vadd.f32 %v1149, %v1157
    %v1160 = vtanh.pop %v1159
    %1162 = vrot.lane.b32.xlu0 %v1160, 64
    %v1163 = vpop.permute.xlu0 %1162
    %v1165 = vmul.f32 %v1147, %v1163
    %v1166 = vpack.c.bf16 %v1165, %v1165
    %v1167 = vld [vmem:[%s2] sm:$0xf]
    %v1168 = vld [vmem:[%s2 + $0x4] sm:$0xf]
    %v1169 = vld [vmem:[%s2 + $0x8] sm:$0xf]
    %v1170 = vld [vmem:[%s2 + $0xc] sm:$0xf]
    %v1171 = vld [vmem:[%s3] sm:$0x1]
    %v1173 = vlaneseq
    %v1174 = vshrl.u32 %v1173, 7
    %v1175 = vsub.s32 0, %v1174
    %v1176 = vrot.slane %v1171, %v1175
    %1179 = vrot.lane.b32.xlu0 %v1166, 32
    %v1180 = vpop.permute.xlu0 %1179
    %v1185 = vunpack.c.l.b16 %v1167
    %v1186 = vunpack.c.l.b16 %v1168
    %v1187 = vunpack.c.l.b16 %v1169
    %v1188 = vunpack.c.l.b16 %v1170
    %v1189 = vpack.c.b16 %v1186, %v1185
    %v1190 = vpack.c.b16 %v1188, %v1187
    %v1194 = vsel %vm328, %v1180, 0
    %1196 = vmatprep.subr.bf16.mxu0 0
    %1197 = vmatpush1.bf16.msra.mxu0 %v1189
    %1198 = vmatprep.subr.bf16.mxu0 0
    %1199 = vmatpush1.bf16.msra.mxu0 %v1190
    %1200 = vmatprep.subr.bf16.mxu0 0
    %1201 = vmatpush1.bf16.msra.mxu0 0
    %1202 = vmatprep.subr.bf16.mxu0 0
    %1203 = vmatpush1.bf16.msra.mxu0 0
    %1204 = vmatprep.subr.bf16.mxu0 0
    %1205 = vmatpush1.bf16.msra.mxu0 0
    %1206 = vmatprep.subr.bf16.mxu0 0
    %1207 = vmatpush1.bf16.msra.mxu0 0
    %1208 = vmatprep.subr.bf16.mxu0 0
    %1209 = vmatpush1.bf16.msra.mxu0 0
    %1210 = vmatprep.subr.bf16.mxu0 0
    %1211 = vmatpush1.bf16.msra.mxu0 0
    %1212 = vmatprep.subr.bf16.mxu0 0
    %1213 = vmatpush1.bf16.msra.mxu0 0
    %1214 = vmatprep.subr.bf16.mxu0 0
    %1215 = vmatpush1.bf16.msra.mxu0 0
    %1216 = vmatprep.subr.bf16.mxu0 0
    %1217 = vmatpush1.bf16.msra.mxu0 0
    %1218 = vmatprep.subr.bf16.mxu0 0
    %1219 = vmatpush1.bf16.msra.mxu0 0
    %1220 = vmatprep.subr.bf16.mxu0 0
    %1221 = vmatpush1.bf16.msra.mxu0 0
    %1222 = vmatprep.subr.bf16.mxu0 0
    %1223 = vmatpush1.bf16.msra.mxu0 0
    %1224 = vmatprep.subr.bf16.mxu0 0
    %1225 = vmatpush1.bf16.msra.mxu0 0
    %1226 = vmatprep.subr.bf16.mxu0 0
    %1227 = vmatpush1.bf16.msra.mxu0 0
    %1228 = vmatprep.mubr.bf16.mxu0 0
    %1229 = vmatmul.mubr.bf16.gmra.mrb[0].mxu0 %v1194
    %v1230 = vpop.f32.mrb[0].mxu0
    %v1231 = vadd.f32 %v1176, %v1230
    %v1232 = vpop.f32.mrb[0].mxu0
    %v1233 = vpop.f32.mrb[0].mxu0
    %v1234 = vpop.f32.mrb[0].mxu0
    %1235 = vdwg.mxu0
    %1236 = vst [vmem:[#allocation2 + $0x28] sm:$0xff] %v1231
    %v1237 = vld [vmem:[#allocation2 + $0x30] sm:$0xff]
    %v1238 = vld [vmem:[%s4] sm:$0xf]
    %v1239 = vld [vmem:[%s4 + $0x4] sm:$0xf]
    %v1240 = vld [vmem:[%s4 + $0x8] sm:$0xf]
    %v1241 = vld [vmem:[%s4 + $0xc] sm:$0xf]
    %v1246 = vunpack.c.l.b16 %v1238
    %v1247 = vunpack.c.l.b16 %v1239
    %v1248 = vunpack.c.l.b16 %v1240
    %v1249 = vunpack.c.l.b16 %v1241
    %v1250 = vpack.c.b16 %v1247, %v1246
    %v1251 = vpack.c.b16 %v1249, %v1248
    %1254 = vmatprep.subr.bf16.mxu0 0
    %1255 = vmatpush1.bf16.msra.mxu0 %v1250
    %1256 = vmatprep.subr.bf16.mxu0 0
    %1257 = vmatpush1.bf16.msra.mxu0 %v1251
    %1258 = vmatprep.subr.bf16.mxu0 0
    %1259 = vmatpush1.bf16.msra.mxu0 0
    %1260 = vmatprep.subr.bf16.mxu0 0
    %1261 = vmatpush1.bf16.msra.mxu0 0
    %1262 = vmatprep.subr.bf16.mxu0 0
    %1263 = vmatpush1.bf16.msra.mxu0 0
    %1264 = vmatprep.subr.bf16.mxu0 0
    %1265 = vmatpush1.bf16.msra.mxu0 0
    %1266 = vmatprep.subr.bf16.mxu0 0
    %1267 = vmatpush1.bf16.msra.mxu0 0
    %1268 = vmatprep.subr.bf16.mxu0 0
    %1269 = vmatpush1.bf16.msra.mxu0 0
    %1270 = vmatprep.subr.bf16.mxu0 0
    %1271 = vmatpush1.bf16.msra.mxu0 0
    %1272 = vmatprep.subr.bf16.mxu0 0
    %1273 = vmatpush1.bf16.msra.mxu0 0
    %1274 = vmatprep.subr.bf16.mxu0 0
    %1275 = vmatpush1.bf16.msra.mxu0 0
    %1276 = vmatprep.subr.bf16.mxu0 0
    %1277 = vmatpush1.bf16.msra.mxu0 0
    %1278 = vmatprep.subr.bf16.mxu0 0
    %1279 = vmatpush1.bf16.msra.mxu0 0
    %1280 = vmatprep.subr.bf16.mxu0 0
    %1281 = vmatpush1.bf16.msra.mxu0 0
    %1282 = vmatprep.subr.bf16.mxu0 0
    %1283 = vmatpush1.bf16.msra.mxu0 0
    %1284 = vmatprep.subr.bf16.mxu0 0
    %1285 = vmatpush1.bf16.msra.mxu0 0
    %1286 = vmatprep.mubr.bf16.mxu0 0
    %1287 = vmatmul.mubr.bf16.gmra.mrb[0].mxu0 %v1194
    %v1288 = vpop.f32.mrb[0].mxu0
    %v1289 = vadd.f32 0.0, %v1288
    %v1290 = vpop.f32.mrb[0].mxu0
    %v1291 = vpop.f32.mrb[0].mxu0
    %v1292 = vpop.f32.mrb[0].mxu0
    %1293 = vdwg.mxu0
    %v1294 = vadd.f32 %v1237, %v1289
    %v1295 = vxor.u32 %v1294, 2147483648
    %v1296 = vmul.f32 %v1295, 1.442695
    %v1297 = vpow.pop %v1296
    %v1298 = vadd.f32 %v1297, 1.0
    %v1299 = vrcp.pop %v1298
    %v1300 = vmul.f32 1.0, %v1299
    %v1301 = vtanh.pop %v1294
    %v1302 = vmul.f32 %v1300, %v1159
    %1304 = vrot.lane.b32.xlu0 %v1301, 64
    %v1305 = vpop.permute.xlu0 %1304
    %v1307 = vmul.f32 %v1300, %v1305
    %1309 = vrot.lane.b32.xlu0 %v1307, 32
    %v1310 = vpop.permute.xlu0 %1309
    %v1312 = vadd.f32 %v1302, %v1310
    %v1313 = vtanh.pop %v1312
    %1315 = vrot.lane.b32.xlu0 %v1313, 64
    %v1316 = vpop.permute.xlu0 %1315
    %v1318 = vmul.f32 %v1300, %v1316
    %v1319 = vpack.c.bf16 %v1318, %v1318
    %v1320 = vld [vmem:[%s2] sm:$0xf]
    %v1321 = vld [vmem:[%s2 + $0x4] sm:$0xf]
    %v1322 = vld [vmem:[%s2 + $0x8] sm:$0xf]
    %v1323 = vld [vmem:[%s2 + $0xc] sm:$0xf]
    %v1324 = vld [vmem:[%s3] sm:$0x1]
    %v1326 = vlaneseq
    %v1327 = vshrl.u32 %v1326, 7
    %v1328 = vsub.s32 0, %v1327
    %v1329 = vrot.slane %v1324, %v1328
    %1332 = vrot.lane.b32.xlu0 %v1319, 32
    %v1333 = vpop.permute.xlu0 %1332
    %v1338 = vunpack.c.l.b16 %v1320
    %v1339 = vunpack.c.l.b16 %v1321
    %v1340 = vunpack.c.l.b16 %v1322
    %v1341 = vunpack.c.l.b16 %v1323
    %v1342 = vpack.c.b16 %v1339, %v1338
    %v1343 = vpack.c.b16 %v1341, %v1340
    %v1347 = vsel %vm328, %v1333, 0
    %1349 = vmatprep.subr.bf16.mxu0 0
    %1350 = vmatpush1.bf16.msra.mxu0 %v1342
    %1351 = vmatprep.subr.bf16.mxu0 0
    %1352 = vmatpush1.bf16.msra.mxu0 %v1343
    %1353 = vmatprep.subr.bf16.mxu0 0
    %1354 = vmatpush1.bf16.msra.mxu0 0
    %1355 = vmatprep.subr.bf16.mxu0 0
    %1356 = vmatpush1.bf16.msra.mxu0 0
    %1357 = vmatprep.subr.bf16.mxu0 0
    %1358 = vmatpush1.bf16.msra.mxu0 0
    %1359 = vmatprep.subr.bf16.mxu0 0
    %1360 = vmatpush1.bf16.msra.mxu0 0
    %1361 = vmatprep.subr.bf16.mxu0 0
    %1362 = vmatpush1.bf16.msra.mxu0 0
    %1363 = vmatprep.subr.bf16.mxu0 0
    %1364 = vmatpush1.bf16.msra.mxu0 0
    %1365 = vmatprep.subr.bf16.mxu0 0
    %1366 = vmatpush1.bf16.msra.mxu0 0
    %1367 = vmatprep.subr.bf16.mxu0 0
    %1368 = vmatpush1.bf16.msra.mxu0 0
    %1369 = vmatprep.subr.bf16.mxu0 0
    %1370 = vmatpush1.bf16.msra.mxu0 0
    %1371 = vmatprep.subr.bf16.mxu0 0
    %1372 = vmatpush1.bf16.msra.mxu0 0
    %1373 = vmatprep.subr.bf16.mxu0 0
    %1374 = vmatpush1.bf16.msra.mxu0 0
    %1375 = vmatprep.subr.bf16.mxu0 0
    %1376 = vmatpush1.bf16.msra.mxu0 0
    %1377 = vmatprep.subr.bf16.mxu0 0
    %1378 = vmatpush1.bf16.msra.mxu0 0
    %1379 = vmatprep.subr.bf16.mxu0 0
    %1380 = vmatpush1.bf16.msra.mxu0 0
    %1381 = vmatprep.mubr.bf16.mxu0 0
    %1382 = vmatmul.mubr.bf16.gmra.mrb[0].mxu0 %v1347
    %v1383 = vpop.f32.mrb[0].mxu0
    %v1384 = vadd.f32 %v1329, %v1383
    %v1385 = vpop.f32.mrb[0].mxu0
    %v1386 = vpop.f32.mrb[0].mxu0
    %v1387 = vpop.f32.mrb[0].mxu0
    %1388 = vdwg.mxu0
    %1389 = vst [vmem:[#allocation2 + $0x30] sm:$0xff] %v1384
    %v1390 = vld [vmem:[#allocation2 + $0x38] sm:$0xff]
    %v1391 = vld [vmem:[%s4] sm:$0xf]
    %v1392 = vld [vmem:[%s4 + $0x4] sm:$0xf]
    %v1393 = vld [vmem:[%s4 + $0x8] sm:$0xf]
    %v1394 = vld [vmem:[%s4 + $0xc] sm:$0xf]
    %v1399 = vunpack.c.l.b16 %v1391
    %v1400 = vunpack.c.l.b16 %v1392
    %v1401 = vunpack.c.l.b16 %v1393
    %v1402 = vunpack.c.l.b16 %v1394
    %v1403 = vpack.c.b16 %v1400, %v1399
    %v1404 = vpack.c.b16 %v1402, %v1401
    %1407 = vmatprep.subr.bf16.mxu0 0
    %1408 = vmatpush1.bf16.msra.mxu0 %v1403
    %1409 = vmatprep.subr.bf16.mxu0 0
    %1410 = vmatpush1.bf16.msra.mxu0 %v1404
    %1411 = vmatprep.subr.bf16.mxu0 0
    %1412 = vmatpush1.bf16.msra.mxu0 0
    %1413 = vmatprep.subr.bf16.mxu0 0
    %1414 = vmatpush1.bf16.msra.mxu0 0
    %1415 = vmatprep.subr.bf16.mxu0 0
    %1416 = vmatpush1.bf16.msra.mxu0 0
    %1417 = vmatprep.subr.bf16.mxu0 0
    %1418 = vmatpush1.bf16.msra.mxu0 0
    %1419 = vmatprep.subr.bf16.mxu0 0
    %1420 = vmatpush1.bf16.msra.mxu0 0
    %1421 = vmatprep.subr.bf16.mxu0 0
    %1422 = vmatpush1.bf16.msra.mxu0 0
    %1423 = vmatprep.subr.bf16.mxu0 0
    %1424 = vmatpush1.bf16.msra.mxu0 0
    %1425 = vmatprep.subr.bf16.mxu0 0
    %1426 = vmatpush1.bf16.msra.mxu0 0
    %1427 = vmatprep.subr.bf16.mxu0 0
    %1428 = vmatpush1.bf16.msra.mxu0 0
    %1429 = vmatprep.subr.bf16.mxu0 0
    %1430 = vmatpush1.bf16.msra.mxu0 0
    %1431 = vmatprep.subr.bf16.mxu0 0
    %1432 = vmatpush1.bf16.msra.mxu0 0
    %1433 = vmatprep.subr.bf16.mxu0 0
    %1434 = vmatpush1.bf16.msra.mxu0 0
    %1435 = vmatprep.subr.bf16.mxu0 0
    %1436 = vmatpush1.bf16.msra.mxu0 0
    %1437 = vmatprep.subr.bf16.mxu0 0
    %1438 = vmatpush1.bf16.msra.mxu0 0
    %1439 = vmatprep.mubr.bf16.mxu0 0
    %1440 = vmatmul.mubr.bf16.gmra.mrb[0].mxu0 %v1347
    %v1441 = vpop.f32.mrb[0].mxu0
    %v1442 = vadd.f32 0.0, %v1441
    %v1443 = vpop.f32.mrb[0].mxu0
    %v1444 = vpop.f32.mrb[0].mxu0
    %v1445 = vpop.f32.mrb[0].mxu0
    %1446 = vdwg.mxu0
    %v1447 = vadd.f32 %v1390, %v1442
    %v1448 = vxor.u32 %v1447, 2147483648
    %v1449 = vmul.f32 %v1448, 1.442695
    %v1450 = vpow.pop %v1449
    %v1451 = vadd.f32 %v1450, 1.0
    %v1452 = vrcp.pop %v1451
    %v1453 = vmul.f32 1.0, %v1452
    %v1454 = vtanh.pop %v1447
    %v1455 = vmul.f32 %v1453, %v1312
    %1457 = vrot.lane.b32.xlu0 %v1454, 64
    %v1458 = vpop.permute.xlu0 %1457
    %v1460 = vmul.f32 %v1453, %v1458
    %1462 = vrot.lane.b32.xlu0 %v1460, 32
    %v1463 = vpop.permute.xlu0 %1462
    %v1465 = vadd.f32 %v1455, %v1463
    %v1466 = vtanh.pop %v1465
    %1468 = vrot.lane.b32.xlu0 %v1466, 64
    %v1469 = vpop.permute.xlu0 %1468
    %v1471 = vmul.f32 %v1453, %v1469
    %v1472 = vpack.c.bf16 %v1471, %v1471
    %v1473 = vld [vmem:[%s2] sm:$0xf]
    %v1474 = vld [vmem:[%s2 + $0x4] sm:$0xf]
    %v1475 = vld [vmem:[%s2 + $0x8] sm:$0xf]
    %v1476 = vld [vmem:[%s2 + $0xc] sm:$0xf]
    %v1477 = vld [vmem:[%s3] sm:$0x1]
    %v1479 = vlaneseq
    %v1480 = vshrl.u32 %v1479, 7
    %v1481 = vsub.s32 0, %v1480
    %v1482 = vrot.slane %v1477, %v1481
    %1485 = vrot.lane.b32.xlu0 %v1472, 32
    %v1486 = vpop.permute.xlu0 %1485
    %v1491 = vunpack.c.l.b16 %v1473
    %v1492 = vunpack.c.l.b16 %v1474
    %v1493 = vunpack.c.l.b16 %v1475
    %v1494 = vunpack.c.l.b16 %v1476
    %v1495 = vpack.c.b16 %v1492, %v1491
    %v1496 = vpack.c.b16 %v1494, %v1493
    %v1500 = vsel %vm328, %v1486, 0
    %1502 = vmatprep.subr.bf16.mxu0 0
    %1503 = vmatpush1.bf16.msra.mxu0 %v1495
    %1504 = vmatprep.subr.bf16.mxu0 0
    %1505 = vmatpush1.bf16.msra.mxu0 %v1496
    %1506 = vmatprep.subr.bf16.mxu0 0
    %1507 = vmatpush1.bf16.msra.mxu0 0
    %1508 = vmatprep.subr.bf16.mxu0 0
    %1509 = vmatpush1.bf16.msra.mxu0 0
    %1510 = vmatprep.subr.bf16.mxu0 0
    %1511 = vmatpush1.bf16.msra.mxu0 0
    %1512 = vmatprep.subr.bf16.mxu0 0
    %1513 = vmatpush1.bf16.msra.mxu0 0
    %1514 = vmatprep.subr.bf16.mxu0 0
    %1515 = vmatpush1.bf16.msra.mxu0 0
    %1516 = vmatprep.subr.bf16.mxu0 0
    %1517 = vmatpush1.bf16.msra.mxu0 0
    %1518 = vmatprep.subr.bf16.mxu0 0
    %1519 = vmatpush1.bf16.msra.mxu0 0
    %1520 = vmatprep.subr.bf16.mxu0 0
    %1521 = vmatpush1.bf16.msra.mxu0 0
    %1522 = vmatprep.subr.bf16.mxu0 0
    %1523 = vmatpush1.bf16.msra.mxu0 0
    %1524 = vmatprep.subr.bf16.mxu0 0
    %1525 = vmatpush1.bf16.msra.mxu0 0
    %1526 = vmatprep.subr.bf16.mxu0 0
    %1527 = vmatpush1.bf16.msra.mxu0 0
    %1528 = vmatprep.subr.bf16.mxu0 0
    %1529 = vmatpush1.bf16.msra.mxu0 0
    %1530 = vmatprep.subr.bf16.mxu0 0
    %1531 = vmatpush1.bf16.msra.mxu0 0
    %1532 = vmatprep.subr.bf16.mxu0 0
    %1533 = vmatpush1.bf16.msra.mxu0 0
    %1534 = vmatprep.mubr.bf16.mxu0 0
    %1535 = vmatmul.mubr.bf16.gmra.mrb[0].mxu0 %v1500
    %v1536 = vpop.f32.mrb[0].mxu0
    %v1537 = vadd.f32 %v1482, %v1536
    %v1538 = vpop.f32.mrb[0].mxu0
    %v1539 = vpop.f32.mrb[0].mxu0
    %v1540 = vpop.f32.mrb[0].mxu0
    %1541 = vdwg.mxu0
    %1542 = vst [vmem:[#allocation2 + $0x38] sm:$0xff] %v1537
    %1544 = vrot.lane.b32.xlu0 %v1471, 32
    %v1545 = vpop.permute.xlu0 %1544
    %1547 = vst.msk [vmem:[%s11] sm:$0xff] %vm328, %v1545
    %1549 = vrot.lane.b32.xlu0 %v1465, 96
    %v1550 = vpop.permute.xlu0 %1549
    %1552 = vst.msk [vmem:[%s12] sm:$0xff] %vm328, %v1550
    %s1553 = scalar_lea.vmem %s8, 8
    %v1554 = vld [vmem:[%s1553] sm:$0xff]
    %s1555 = scalar_lea.vmem %s9, 8
    %v1556 = vld [vmem:[%s1555] sm:$0xff]
    %v1557 = vld [vmem:[#allocation2] sm:$0xff]
    %v1558 = vpack.c.bf16 %v1554, %v1554
    %v1559 = vld [vmem:[%s5] sm:$0xf]
    %v1560 = vld [vmem:[%s5 + $0x4] sm:$0xf]
    %v1561 = vld [vmem:[%s5 + $0x8] sm:$0xf]
    %v1562 = vld [vmem:[%s5 + $0xc] sm:$0xf]
    %v1567 = vunpack.c.l.b16 %v1559
    %v1568 = vunpack.c.l.b16 %v1560
    %v1569 = vunpack.c.l.b16 %v1561
    %v1570 = vunpack.c.l.b16 %v1562
    %v1571 = vpack.c.b16 %v1568, %v1567
    %v1572 = vpack.c.b16 %v1570, %v1569
    %v1576 = vsel %vm328, %v1558, 0
    %1578 = vmatprep.subr.bf16.mxu0 0
    %1579 = vmatpush1.bf16.msra.mxu0 %v1571
    %1580 = vmatprep.subr.bf16.mxu0 0
    %1581 = vmatpush1.bf16.msra.mxu0 %v1572
    %1582 = vmatprep.subr.bf16.mxu0 0
    %1583 = vmatpush1.bf16.msra.mxu0 0
    %1584 = vmatprep.subr.bf16.mxu0 0
    %1585 = vmatpush1.bf16.msra.mxu0 0
    %1586 = vmatprep.subr.bf16.mxu0 0
    %1587 = vmatpush1.bf16.msra.mxu0 0
    %1588 = vmatprep.subr.bf16.mxu0 0
    %1589 = vmatpush1.bf16.msra.mxu0 0
    %1590 = vmatprep.subr.bf16.mxu0 0
    %1591 = vmatpush1.bf16.msra.mxu0 0
    %1592 = vmatprep.subr.bf16.mxu0 0
    %1593 = vmatpush1.bf16.msra.mxu0 0
    %1594 = vmatprep.subr.bf16.mxu0 0
    %1595 = vmatpush1.bf16.msra.mxu0 0
    %1596 = vmatprep.subr.bf16.mxu0 0
    %1597 = vmatpush1.bf16.msra.mxu0 0
    %1598 = vmatprep.subr.bf16.mxu0 0
    %1599 = vmatpush1.bf16.msra.mxu0 0
    %1600 = vmatprep.subr.bf16.mxu0 0
    %1601 = vmatpush1.bf16.msra.mxu0 0
    %1602 = vmatprep.subr.bf16.mxu0 0
    %1603 = vmatpush1.bf16.msra.mxu0 0
    %1604 = vmatprep.subr.bf16.mxu0 0
    %1605 = vmatpush1.bf16.msra.mxu0 0
    %1606 = vmatprep.subr.bf16.mxu0 0
    %1607 = vmatpush1.bf16.msra.mxu0 0
    %1608 = vmatprep.subr.bf16.mxu0 0
    %1609 = vmatpush1.bf16.msra.mxu0 0
    %1610 = vmatprep.mubr.bf16.mxu0 0
    %1611 = vmatmul.mubr.bf16.gmra.mrb[0].mxu0 %v1576
    %v1612 = vpop.f32.mrb[0].mxu0
    %v1613 = vadd.f32 0.0, %v1612
    %v1614 = vpop.f32.mrb[0].mxu0
    %v1615 = vpop.f32.mrb[0].mxu0
    %v1616 = vpop.f32.mrb[0].mxu0
    %1617 = vdwg.mxu0
    %v1618 = vadd.f32 %v1557, %v1613
    %v1619 = vxor.u32 %v1618, 2147483648
    %v1620 = vmul.f32 %v1619, 1.442695
    %v1621 = vpow.pop %v1620
    %v1622 = vadd.f32 %v1621, 1.0
    %v1623 = vrcp.pop %v1622
    %v1624 = vmul.f32 1.0, %v1623
    %v1625 = vtanh.pop %v1618
    %1627 = vrot.lane.b32.xlu0 %v1556, 32
    %v1628 = vpop.permute.xlu0 %1627
    %v1630 = vmul.f32 %v1624, %v1628
    %1632 = vrot.lane.b32.xlu0 %v1625, 64
    %v1633 = vpop.permute.xlu0 %1632
    %v1635 = vmul.f32 %v1624, %v1633
    %1637 = vrot.lane.b32.xlu0 %v1635, 32
    %v1638 = vpop.permute.xlu0 %1637
    %v1640 = vadd.f32 %v1630, %v1638
    %v1641 = vtanh.pop %v1640
    %1643 = vrot.lane.b32.xlu0 %v1641, 64
    %v1644 = vpop.permute.xlu0 %1643
    %v1646 = vmul.f32 %v1624, %v1644
    %v1647 = vpack.c.bf16 %v1646, %v1646
    %v1648 = vld [vmem:[%s6] sm:$0xf]
    %v1649 = vld [vmem:[%s6 + $0x4] sm:$0xf]
    %v1650 = vld [vmem:[%s6 + $0x8] sm:$0xf]
    %v1651 = vld [vmem:[%s6 + $0xc] sm:$0xf]
    %v1652 = vld [vmem:[%s7] sm:$0x1]
    %v1654 = vlaneseq
    %v1655 = vshrl.u32 %v1654, 7
    %v1656 = vsub.s32 0, %v1655
    %v1657 = vrot.slane %v1652, %v1656
    %1660 = vrot.lane.b32.xlu0 %v1647, 32
    %v1661 = vpop.permute.xlu0 %1660
    %v1666 = vunpack.c.l.b16 %v1648
    %v1667 = vunpack.c.l.b16 %v1649
    %v1668 = vunpack.c.l.b16 %v1650
    %v1669 = vunpack.c.l.b16 %v1651
    %v1670 = vpack.c.b16 %v1667, %v1666
    %v1671 = vpack.c.b16 %v1669, %v1668
    %v1675 = vsel %vm328, %v1661, 0
    %1677 = vmatprep.subr.bf16.mxu0 0
    %1678 = vmatpush1.bf16.msra.mxu0 %v1670
    %1679 = vmatprep.subr.bf16.mxu0 0
    %1680 = vmatpush1.bf16.msra.mxu0 %v1671
    %1681 = vmatprep.subr.bf16.mxu0 0
    %1682 = vmatpush1.bf16.msra.mxu0 0
    %1683 = vmatprep.subr.bf16.mxu0 0
    %1684 = vmatpush1.bf16.msra.mxu0 0
    %1685 = vmatprep.subr.bf16.mxu0 0
    %1686 = vmatpush1.bf16.msra.mxu0 0
    %1687 = vmatprep.subr.bf16.mxu0 0
    %1688 = vmatpush1.bf16.msra.mxu0 0
    %1689 = vmatprep.subr.bf16.mxu0 0
    %1690 = vmatpush1.bf16.msra.mxu0 0
    %1691 = vmatprep.subr.bf16.mxu0 0
    %1692 = vmatpush1.bf16.msra.mxu0 0
    %1693 = vmatprep.subr.bf16.mxu0 0
    %1694 = vmatpush1.bf16.msra.mxu0 0
    %1695 = vmatprep.subr.bf16.mxu0 0
    %1696 = vmatpush1.bf16.msra.mxu0 0
    %1697 = vmatprep.subr.bf16.mxu0 0
    %1698 = vmatpush1.bf16.msra.mxu0 0
    %1699 = vmatprep.subr.bf16.mxu0 0
    %1700 = vmatpush1.bf16.msra.mxu0 0
    %1701 = vmatprep.subr.bf16.mxu0 0
    %1702 = vmatpush1.bf16.msra.mxu0 0
    %1703 = vmatprep.subr.bf16.mxu0 0
    %1704 = vmatpush1.bf16.msra.mxu0 0
    %1705 = vmatprep.subr.bf16.mxu0 0
    %1706 = vmatpush1.bf16.msra.mxu0 0
    %1707 = vmatprep.subr.bf16.mxu0 0
    %1708 = vmatpush1.bf16.msra.mxu0 0
    %1709 = vmatprep.mubr.bf16.mxu0 0
    %1710 = vmatmul.mubr.bf16.gmra.mrb[0].mxu0 %v1675
    %v1711 = vpop.f32.mrb[0].mxu0
    %v1712 = vadd.f32 %v1657, %v1711
    %v1713 = vpop.f32.mrb[0].mxu0
    %v1714 = vpop.f32.mrb[0].mxu0
    %v1715 = vpop.f32.mrb[0].mxu0
    %1716 = vdwg.mxu0
    %1717 = vst [vmem:[%s10] sm:$0xff] %v1712
    %v1718 = vld [vmem:[#allocation2 + $0x8] sm:$0xff]
    %v1719 = vld [vmem:[%s5] sm:$0xf]
    %v1720 = vld [vmem:[%s5 + $0x4] sm:$0xf]
    %v1721 = vld [vmem:[%s5 + $0x8] sm:$0xf]
    %v1722 = vld [vmem:[%s5 + $0xc] sm:$0xf]
    %v1727 = vunpack.c.l.b16 %v1719
    %v1728 = vunpack.c.l.b16 %v1720
    %v1729 = vunpack.c.l.b16 %v1721
    %v1730 = vunpack.c.l.b16 %v1722
    %v1731 = vpack.c.b16 %v1728, %v1727
    %v1732 = vpack.c.b16 %v1730, %v1729
    %1735 = vmatprep.subr.bf16.mxu0 0
    %1736 = vmatpush1.bf16.msra.mxu0 %v1731
    %1737 = vmatprep.subr.bf16.mxu0 0
    %1738 = vmatpush1.bf16.msra.mxu0 %v1732
    %1739 = vmatprep.subr.bf16.mxu0 0
    %1740 = vmatpush1.bf16.msra.mxu0 0
    %1741 = vmatprep.subr.bf16.mxu0 0
    %1742 = vmatpush1.bf16.msra.mxu0 0
    %1743 = vmatprep.subr.bf16.mxu0 0
    %1744 = vmatpush1.bf16.msra.mxu0 0
    %1745 = vmatprep.subr.bf16.mxu0 0
    %1746 = vmatpush1.bf16.msra.mxu0 0
    %1747 = vmatprep.subr.bf16.mxu0 0
    %1748 = vmatpush1.bf16.msra.mxu0 0
    %1749 = vmatprep.subr.bf16.mxu0 0
    %1750 = vmatpush1.bf16.msra.mxu0 0
    %1751 = vmatprep.subr.bf16.mxu0 0
    %1752 = vmatpush1.bf16.msra.mxu0 0
    %1753 = vmatprep.subr.bf16.mxu0 0
    %1754 = vmatpush1.bf16.msra.mxu0 0
    %1755 = vmatprep.subr.bf16.mxu0 0
    %1756 = vmatpush1.bf16.msra.mxu0 0
    %1757 = vmatprep.subr.bf16.mxu0 0
    %1758 = vmatpush1.bf16.msra.mxu0 0
    %1759 = vmatprep.subr.bf16.mxu0 0
    %1760 = vmatpush1.bf16.msra.mxu0 0
    %1761 = vmatprep.subr.bf16.mxu0 0
    %1762 = vmatpush1.bf16.msra.mxu0 0
    %1763 = vmatprep.subr.bf16.mxu0 0
    %1764 = vmatpush1.bf16.msra.mxu0 0
    %1765 = vmatprep.subr.bf16.mxu0 0
    %1766 = vmatpush1.bf16.msra.mxu0 0
    %1767 = vmatprep.mubr.bf16.mxu0 0
    %1768 = vmatmul.mubr.bf16.gmra.mrb[0].mxu0 %v1675
    %v1769 = vpop.f32.mrb[0].mxu0
    %v1770 = vadd.f32 0.0, %v1769
    %v1771 = vpop.f32.mrb[0].mxu0
    %v1772 = vpop.f32.mrb[0].mxu0
    %v1773 = vpop.f32.mrb[0].mxu0
    %1774 = vdwg.mxu0
    %v1775 = vadd.f32 %v1718, %v1770
    %v1776 = vxor.u32 %v1775, 2147483648
    %v1777 = vmul.f32 %v1776, 1.442695
    %v1778 = vpow.pop %v1777
    %v1779 = vadd.f32 %v1778, 1.0
    %v1780 = vrcp.pop %v1779
    %v1781 = vmul.f32 1.0, %v1780
    %v1782 = vtanh.pop %v1775
    %v1783 = vmul.f32 %v1781, %v1640
    %1785 = vrot.lane.b32.xlu0 %v1782, 64
    %v1786 = vpop.permute.xlu0 %1785
    %v1788 = vmul.f32 %v1781, %v1786
    %1790 = vrot.lane.b32.xlu0 %v1788, 32
    %v1791 = vpop.permute.xlu0 %1790
    %v1793 = vadd.f32 %v1783, %v1791
    %v1794 = vtanh.pop %v1793
    %1796 = vrot.lane.b32.xlu0 %v1794, 64
    %v1797 = vpop.permute.xlu0 %1796
    %v1799 = vmul.f32 %v1781, %v1797
    %v1800 = vpack.c.bf16 %v1799, %v1799
    %v1801 = vld [vmem:[%s6] sm:$0xf]
    %v1802 = vld [vmem:[%s6 + $0x4] sm:$0xf]
    %v1803 = vld [vmem:[%s6 + $0x8] sm:$0xf]
    %v1804 = vld [vmem:[%s6 + $0xc] sm:$0xf]
    %v1805 = vld [vmem:[%s7] sm:$0x1]
    %v1807 = vlaneseq
    %v1808 = vshrl.u32 %v1807, 7
    %v1809 = vsub.s32 0, %v1808
    %v1810 = vrot.slane %v1805, %v1809
    %1813 = vrot.lane.b32.xlu0 %v1800, 32
    %v1814 = vpop.permute.xlu0 %1813
    %v1819 = vunpack.c.l.b16 %v1801
    %v1820 = vunpack.c.l.b16 %v1802
    %v1821 = vunpack.c.l.b16 %v1803
    %v1822 = vunpack.c.l.b16 %v1804
    %v1823 = vpack.c.b16 %v1820, %v1819
    %v1824 = vpack.c.b16 %v1822, %v1821
    %v1828 = vsel %vm328, %v1814, 0
    %1830 = vmatprep.subr.bf16.mxu0 0
    %1831 = vmatpush1.bf16.msra.mxu0 %v1823
    %1832 = vmatprep.subr.bf16.mxu0 0
    %1833 = vmatpush1.bf16.msra.mxu0 %v1824
    %1834 = vmatprep.subr.bf16.mxu0 0
    %1835 = vmatpush1.bf16.msra.mxu0 0
    %1836 = vmatprep.subr.bf16.mxu0 0
    %1837 = vmatpush1.bf16.msra.mxu0 0
    %1838 = vmatprep.subr.bf16.mxu0 0
    %1839 = vmatpush1.bf16.msra.mxu0 0
    %1840 = vmatprep.subr.bf16.mxu0 0
    %1841 = vmatpush1.bf16.msra.mxu0 0
    %1842 = vmatprep.subr.bf16.mxu0 0
    %1843 = vmatpush1.bf16.msra.mxu0 0
    %1844 = vmatprep.subr.bf16.mxu0 0
    %1845 = vmatpush1.bf16.msra.mxu0 0
    %1846 = vmatprep.subr.bf16.mxu0 0
    %1847 = vmatpush1.bf16.msra.mxu0 0
    %1848 = vmatprep.subr.bf16.mxu0 0
    %1849 = vmatpush1.bf16.msra.mxu0 0
    %1850 = vmatprep.subr.bf16.mxu0 0
    %1851 = vmatpush1.bf16.msra.mxu0 0
    %1852 = vmatprep.subr.bf16.mxu0 0
    %1853 = vmatpush1.bf16.msra.mxu0 0
    %1854 = vmatprep.subr.bf16.mxu0 0
    %1855 = vmatpush1.bf16.msra.mxu0 0
    %1856 = vmatprep.subr.bf16.mxu0 0
    %1857 = vmatpush1.bf16.msra.mxu0 0
    %1858 = vmatprep.subr.bf16.mxu0 0
    %1859 = vmatpush1.bf16.msra.mxu0 0
    %1860 = vmatprep.subr.bf16.mxu0 0
    %1861 = vmatpush1.bf16.msra.mxu0 0
    %1862 = vmatprep.mubr.bf16.mxu0 0
    %1863 = vmatmul.mubr.bf16.gmra.mrb[0].mxu0 %v1828
    %v1864 = vpop.f32.mrb[0].mxu0
    %v1865 = vadd.f32 %v1810, %v1864
    %v1866 = vpop.f32.mrb[0].mxu0
    %v1867 = vpop.f32.mrb[0].mxu0
    %v1868 = vpop.f32.mrb[0].mxu0
    %1869 = vdwg.mxu0
    %s1870 = scalar_lea.vmem %s10, 8
    %1871 = vst [vmem:[%s1870] sm:$0xff] %v1865
    %v1872 = vld [vmem:[#allocation2 + $0x10] sm:$0xff]
    %v1873 = vld [vmem:[%s5] sm:$0xf]
    %v1874 = vld [vmem:[%s5 + $0x4] sm:$0xf]
    %v1875 = vld [vmem:[%s5 + $0x8] sm:$0xf]
    %v1876 = vld [vmem:[%s5 + $0xc] sm:$0xf]
    %v1881 = vunpack.c.l.b16 %v1873
    %v1882 = vunpack.c.l.b16 %v1874
    %v1883 = vunpack.c.l.b16 %v1875
    %v1884 = vunpack.c.l.b16 %v1876
    %v1885 = vpack.c.b16 %v1882, %v1881
    %v1886 = vpack.c.b16 %v1884, %v1883
    %1889 = vmatprep.subr.bf16.mxu0 0
    %1890 = vmatpush1.bf16.msra.mxu0 %v1885
    %1891 = vmatprep.subr.bf16.mxu0 0
    %1892 = vmatpush1.bf16.msra.mxu0 %v1886
    %1893 = vmatprep.subr.bf16.mxu0 0
    %1894 = vmatpush1.bf16.msra.mxu0 0
    %1895 = vmatprep.subr.bf16.mxu0 0
    %1896 = vmatpush1.bf16.msra.mxu0 0
    %1897 = vmatprep.subr.bf16.mxu0 0
    %1898 = vmatpush1.bf16.msra.mxu0 0
    %1899 = vmatprep.subr.bf16.mxu0 0
    %1900 = vmatpush1.bf16.msra.mxu0 0
    %1901 = vmatprep.subr.bf16.mxu0 0
    %1902 = vmatpush1.bf16.msra.mxu0 0
    %1903 = vmatprep.subr.bf16.mxu0 0
    %1904 = vmatpush1.bf16.msra.mxu0 0
    %1905 = vmatprep.subr.bf16.mxu0 0
    %1906 = vmatpush1.bf16.msra.mxu0 0
    %1907 = vmatprep.subr.bf16.mxu0 0
    %1908 = vmatpush1.bf16.msra.mxu0 0
    %1909 = vmatprep.subr.bf16.mxu0 0
    %1910 = vmatpush1.bf16.msra.mxu0 0
    %1911 = vmatprep.subr.bf16.mxu0 0
    %1912 = vmatpush1.bf16.msra.mxu0 0
    %1913 = vmatprep.subr.bf16.mxu0 0
    %1914 = vmatpush1.bf16.msra.mxu0 0
    %1915 = vmatprep.subr.bf16.mxu0 0
    %1916 = vmatpush1.bf16.msra.mxu0 0
    %1917 = vmatprep.subr.bf16.mxu0 0
    %1918 = vmatpush1.bf16.msra.mxu0 0
    %1919 = vmatprep.subr.bf16.mxu0 0
    %1920 = vmatpush1.bf16.msra.mxu0 0
    %1921 = vmatprep.mubr.bf16.mxu0 0
    %1922 = vmatmul.mubr.bf16.gmra.mrb[0].mxu0 %v1828
    %v1923 = vpop.f32.mrb[0].mxu0
    %v1924 = vadd.f32 0.0, %v1923
    %v1925 = vpop.f32.mrb[0].mxu0
    %v1926 = vpop.f32.mrb[0].mxu0
    %v1927 = vpop.f32.mrb[0].mxu0
    %1928 = vdwg.mxu0
    %v1929 = vadd.f32 %v1872, %v1924
    %v1930 = vxor.u32 %v1929, 2147483648
    %v1931 = vmul.f32 %v1930, 1.442695
    %v1932 = vpow.pop %v1931
    %v1933 = vadd.f32 %v1932, 1.0
    %v1934 = vrcp.pop %v1933
    %v1935 = vmul.f32 1.0, %v1934
    %v1936 = vtanh.pop %v1929
    %v1937 = vmul.f32 %v1935, %v1793
    %1939 = vrot.lane.b32.xlu0 %v1936, 64
    %v1940 = vpop.permute.xlu0 %1939
    %v1942 = vmul.f32 %v1935, %v1940
    %1944 = vrot.lane.b32.xlu0 %v1942, 32
    %v1945 = vpop.permute.xlu0 %1944
    %v1947 = vadd.f32 %v1937, %v1945
    %v1948 = vtanh.pop %v1947
    %1950 = vrot.lane.b32.xlu0 %v1948, 64
    %v1951 = vpop.permute.xlu0 %1950
    %v1953 = vmul.f32 %v1935, %v1951
    %v1954 = vpack.c.bf16 %v1953, %v1953
    %v1955 = vld [vmem:[%s6] sm:$0xf]
    %v1956 = vld [vmem:[%s6 + $0x4] sm:$0xf]
    %v1957 = vld [vmem:[%s6 + $0x8] sm:$0xf]
    %v1958 = vld [vmem:[%s6 + $0xc] sm:$0xf]
    %v1959 = vld [vmem:[%s7] sm:$0x1]
    %v1961 = vlaneseq
    %v1962 = vshrl.u32 %v1961, 7
    %v1963 = vsub.s32 0, %v1962
    %v1964 = vrot.slane %v1959, %v1963
    %1967 = vrot.lane.b32.xlu0 %v1954, 32
    %v1968 = vpop.permute.xlu0 %1967
    %v1973 = vunpack.c.l.b16 %v1955
    %v1974 = vunpack.c.l.b16 %v1956
    %v1975 = vunpack.c.l.b16 %v1957
    %v1976 = vunpack.c.l.b16 %v1958
    %v1977 = vpack.c.b16 %v1974, %v1973
    %v1978 = vpack.c.b16 %v1976, %v1975
    %v1982 = vsel %vm328, %v1968, 0
    %1984 = vmatprep.subr.bf16.mxu0 0
    %1985 = vmatpush1.bf16.msra.mxu0 %v1977
    %1986 = vmatprep.subr.bf16.mxu0 0
    %1987 = vmatpush1.bf16.msra.mxu0 %v1978
    %1988 = vmatprep.subr.bf16.mxu0 0
    %1989 = vmatpush1.bf16.msra.mxu0 0
    %1990 = vmatprep.subr.bf16.mxu0 0
    %1991 = vmatpush1.bf16.msra.mxu0 0
    %1992 = vmatprep.subr.bf16.mxu0 0
    %1993 = vmatpush1.bf16.msra.mxu0 0
    %1994 = vmatprep.subr.bf16.mxu0 0
    %1995 = vmatpush1.bf16.msra.mxu0 0
    %1996 = vmatprep.subr.bf16.mxu0 0
    %1997 = vmatpush1.bf16.msra.mxu0 0
    %1998 = vmatprep.subr.bf16.mxu0 0
    %1999 = vmatpush1.bf16.msra.mxu0 0
    %2000 = vmatprep.subr.bf16.mxu0 0
    %2001 = vmatpush1.bf16.msra.mxu0 0
    %2002 = vmatprep.subr.bf16.mxu0 0
    %2003 = vmatpush1.bf16.msra.mxu0 0
    %2004 = vmatprep.subr.bf16.mxu0 0
    %2005 = vmatpush1.bf16.msra.mxu0 0
    %2006 = vmatprep.subr.bf16.mxu0 0
    %2007 = vmatpush1.bf16.msra.mxu0 0
    %2008 = vmatprep.subr.bf16.mxu0 0
    %2009 = vmatpush1.bf16.msra.mxu0 0
    %2010 = vmatprep.subr.bf16.mxu0 0
    %2011 = vmatpush1.bf16.msra.mxu0 0
    %2012 = vmatprep.subr.bf16.mxu0 0
    %2013 = vmatpush1.bf16.msra.mxu0 0
    %2014 = vmatprep.subr.bf16.mxu0 0
    %2015 = vmatpush1.bf16.msra.mxu0 0
    %2016 = vmatprep.mubr.bf16.mxu0 0
    %2017 = vmatmul.mubr.bf16.gmra.mrb[0].mxu0 %v1982
    %v2018 = vpop.f32.mrb[0].mxu0
    %v2019 = vadd.f32 %v1964, %v2018
    %v2020 = vpop.f32.mrb[0].mxu0
    %v2021 = vpop.f32.mrb[0].mxu0
    %v2022 = vpop.f32.mrb[0].mxu0
    %2023 = vdwg.mxu0
    %s2024 = scalar_lea.vmem %s10, 16
    %2025 = vst [vmem:[%s2024] sm:$0xff] %v2019
    %v2026 = vld [vmem:[#allocation2 + $0x18] sm:$0xff]
    %v2027 = vld [vmem:[%s5] sm:$0xf]
    %v2028 = vld [vmem:[%s5 + $0x4] sm:$0xf]
    %v2029 = vld [vmem:[%s5 + $0x8] sm:$0xf]
    %v2030 = vld [vmem:[%s5 + $0xc] sm:$0xf]
    %v2035 = vunpack.c.l.b16 %v2027
    %v2036 = vunpack.c.l.b16 %v2028
    %v2037 = vunpack.c.l.b16 %v2029
    %v2038 = vunpack.c.l.b16 %v2030
    %v2039 = vpack.c.b16 %v2036, %v2035
    %v2040 = vpack.c.b16 %v2038, %v2037
    %2043 = vmatprep.subr.bf16.mxu0 0
    %2044 = vmatpush1.bf16.msra.mxu0 %v2039
    %2045 = vmatprep.subr.bf16.mxu0 0
    %2046 = vmatpush1.bf16.msra.mxu0 %v2040
    %2047 = vmatprep.subr.bf16.mxu0 0
    %2048 = vmatpush1.bf16.msra.mxu0 0
    %2049 = vmatprep.subr.bf16.mxu0 0
    %2050 = vmatpush1.bf16.msra.mxu0 0
    %2051 = vmatprep.subr.bf16.mxu0 0
    %2052 = vmatpush1.bf16.msra.mxu0 0
    %2053 = vmatprep.subr.bf16.mxu0 0
    %2054 = vmatpush1.bf16.msra.mxu0 0
    %2055 = vmatprep.subr.bf16.mxu0 0
    %2056 = vmatpush1.bf16.msra.mxu0 0
    %2057 = vmatprep.subr.bf16.mxu0 0
    %2058 = vmatpush1.bf16.msra.mxu0 0
    %2059 = vmatprep.subr.bf16.mxu0 0
    %2060 = vmatpush1.bf16.msra.mxu0 0
    %2061 = vmatprep.subr.bf16.mxu0 0
    %2062 = vmatpush1.bf16.msra.mxu0 0
    %2063 = vmatprep.subr.bf16.mxu0 0
    %2064 = vmatpush1.bf16.msra.mxu0 0
    %2065 = vmatprep.subr.bf16.mxu0 0
    %2066 = vmatpush1.bf16.msra.mxu0 0
    %2067 = vmatprep.subr.bf16.mxu0 0
    %2068 = vmatpush1.bf16.msra.mxu0 0
    %2069 = vmatprep.subr.bf16.mxu0 0
    %2070 = vmatpush1.bf16.msra.mxu0 0
    %2071 = vmatprep.subr.bf16.mxu0 0
    %2072 = vmatpush1.bf16.msra.mxu0 0
    %2073 = vmatprep.subr.bf16.mxu0 0
    %2074 = vmatpush1.bf16.msra.mxu0 0
    %2075 = vmatprep.mubr.bf16.mxu0 0
    %2076 = vmatmul.mubr.bf16.gmra.mrb[0].mxu0 %v1982
    %v2077 = vpop.f32.mrb[0].mxu0
    %v2078 = vadd.f32 0.0, %v2077
    %v2079 = vpop.f32.mrb[0].mxu0
    %v2080 = vpop.f32.mrb[0].mxu0
    %v2081 = vpop.f32.mrb[0].mxu0
    %2082 = vdwg.mxu0
    %v2083 = vadd.f32 %v2026, %v2078
    %v2084 = vxor.u32 %v2083, 2147483648
    %v2085 = vmul.f32 %v2084, 1.442695
    %v2086 = vpow.pop %v2085
    %v2087 = vadd.f32 %v2086, 1.0
    %v2088 = vrcp.pop %v2087
    %v2089 = vmul.f32 1.0, %v2088
    %v2090 = vtanh.pop %v2083
    %v2091 = vmul.f32 %v2089, %v1947
    %2093 = vrot.lane.b32.xlu0 %v2090, 64
    %v2094 = vpop.permute.xlu0 %2093
    %v2096 = vmul.f32 %v2089, %v2094
    %2098 = vrot.lane.b32.xlu0 %v2096, 32
    %v2099 = vpop.permute.xlu0 %2098
    %v2101 = vadd.f32 %v2091, %v2099
    %v2102 = vtanh.pop %v2101
    %2104 = vrot.lane.b32.xlu0 %v2102, 64
    %v2105 = vpop.permute.xlu0 %2104
    %v2107 = vmul.f32 %v2089, %v2105
    %v2108 = vpack.c.bf16 %v2107, %v2107
    %v2109 = vld [vmem:[%s6] sm:$0xf]
    %v2110 = vld [vmem:[%s6 + $0x4] sm:$0xf]
    %v2111 = vld [vmem:[%s6 + $0x8] sm:$0xf]
    %v2112 = vld [vmem:[%s6 + $0xc] sm:$0xf]
    %v2113 = vld [vmem:[%s7] sm:$0x1]
    %v2115 = vlaneseq
    %v2116 = vshrl.u32 %v2115, 7
    %v2117 = vsub.s32 0, %v2116
    %v2118 = vrot.slane %v2113, %v2117
    %2121 = vrot.lane.b32.xlu0 %v2108, 32
    %v2122 = vpop.permute.xlu0 %2121
    %v2127 = vunpack.c.l.b16 %v2109
    %v2128 = vunpack.c.l.b16 %v2110
    %v2129 = vunpack.c.l.b16 %v2111
    %v2130 = vunpack.c.l.b16 %v2112
    %v2131 = vpack.c.b16 %v2128, %v2127
    %v2132 = vpack.c.b16 %v2130, %v2129
    %v2136 = vsel %vm328, %v2122, 0
    %2138 = vmatprep.subr.bf16.mxu0 0
    %2139 = vmatpush1.bf16.msra.mxu0 %v2131
    %2140 = vmatprep.subr.bf16.mxu0 0
    %2141 = vmatpush1.bf16.msra.mxu0 %v2132
    %2142 = vmatprep.subr.bf16.mxu0 0
    %2143 = vmatpush1.bf16.msra.mxu0 0
    %2144 = vmatprep.subr.bf16.mxu0 0
    %2145 = vmatpush1.bf16.msra.mxu0 0
    %2146 = vmatprep.subr.bf16.mxu0 0
    %2147 = vmatpush1.bf16.msra.mxu0 0
    %2148 = vmatprep.subr.bf16.mxu0 0
    %2149 = vmatpush1.bf16.msra.mxu0 0
    %2150 = vmatprep.subr.bf16.mxu0 0
    %2151 = vmatpush1.bf16.msra.mxu0 0
    %2152 = vmatprep.subr.bf16.mxu0 0
    %2153 = vmatpush1.bf16.msra.mxu0 0
    %2154 = vmatprep.subr.bf16.mxu0 0
    %2155 = vmatpush1.bf16.msra.mxu0 0
    %2156 = vmatprep.subr.bf16.mxu0 0
    %2157 = vmatpush1.bf16.msra.mxu0 0
    %2158 = vmatprep.subr.bf16.mxu0 0
    %2159 = vmatpush1.bf16.msra.mxu0 0
    %2160 = vmatprep.subr.bf16.mxu0 0
    %2161 = vmatpush1.bf16.msra.mxu0 0
    %2162 = vmatprep.subr.bf16.mxu0 0
    %2163 = vmatpush1.bf16.msra.mxu0 0
    %2164 = vmatprep.subr.bf16.mxu0 0
    %2165 = vmatpush1.bf16.msra.mxu0 0
    %2166 = vmatprep.subr.bf16.mxu0 0
    %2167 = vmatpush1.bf16.msra.mxu0 0
    %2168 = vmatprep.subr.bf16.mxu0 0
    %2169 = vmatpush1.bf16.msra.mxu0 0
    %2170 = vmatprep.mubr.bf16.mxu0 0
    %2171 = vmatmul.mubr.bf16.gmra.mrb[0].mxu0 %v2136
    %v2172 = vpop.f32.mrb[0].mxu0
    %v2173 = vadd.f32 %v2118, %v2172
    %v2174 = vpop.f32.mrb[0].mxu0
    %v2175 = vpop.f32.mrb[0].mxu0
    %v2176 = vpop.f32.mrb[0].mxu0
    %2177 = vdwg.mxu0
    %s2178 = scalar_lea.vmem %s10, 24
    %2179 = vst [vmem:[%s2178] sm:$0xff] %v2173
    %v2180 = vld [vmem:[#allocation2 + $0x20] sm:$0xff]
    %v2181 = vld [vmem:[%s5] sm:$0xf]
    %v2182 = vld [vmem:[%s5 + $0x4] sm:$0xf]
    %v2183 = vld [vmem:[%s5 + $0x8] sm:$0xf]
    %v2184 = vld [vmem:[%s5 + $0xc] sm:$0xf]
    %v2189 = vunpack.c.l.b16 %v2181
    %v2190 = vunpack.c.l.b16 %v2182
    %v2191 = vunpack.c.l.b16 %v2183
    %v2192 = vunpack.c.l.b16 %v2184
    %v2193 = vpack.c.b16 %v2190, %v2189
    %v2194 = vpack.c.b16 %v2192, %v2191
    %2197 = vmatprep.subr.bf16.mxu0 0
    %2198 = vmatpush1.bf16.msra.mxu0 %v2193
    %2199 = vmatprep.subr.bf16.mxu0 0
    %2200 = vmatpush1.bf16.msra.mxu0 %v2194
    %2201 = vmatprep.subr.bf16.mxu0 0
    %2202 = vmatpush1.bf16.msra.mxu0 0
    %2203 = vmatprep.subr.bf16.mxu0 0
    %2204 = vmatpush1.bf16.msra.mxu0 0
    %2205 = vmatprep.subr.bf16.mxu0 0
    %2206 = vmatpush1.bf16.msra.mxu0 0
    %2207 = vmatprep.subr.bf16.mxu0 0
    %2208 = vmatpush1.bf16.msra.mxu0 0
    %2209 = vmatprep.subr.bf16.mxu0 0
    %2210 = vmatpush1.bf16.msra.mxu0 0
    %2211 = vmatprep.subr.bf16.mxu0 0
    %2212 = vmatpush1.bf16.msra.mxu0 0
    %2213 = vmatprep.subr.bf16.mxu0 0
    %2214 = vmatpush1.bf16.msra.mxu0 0
    %2215 = vmatprep.subr.bf16.mxu0 0
    %2216 = vmatpush1.bf16.msra.mxu0 0
    %2217 = vmatprep.subr.bf16.mxu0 0
    %2218 = vmatpush1.bf16.msra.mxu0 0
    %2219 = vmatprep.subr.bf16.mxu0 0
    %2220 = vmatpush1.bf16.msra.mxu0 0
    %2221 = vmatprep.subr.bf16.mxu0 0
    %2222 = vmatpush1.bf16.msra.mxu0 0
    %2223 = vmatprep.subr.bf16.mxu0 0
    %2224 = vmatpush1.bf16.msra.mxu0 0
    %2225 = vmatprep.subr.bf16.mxu0 0
    %2226 = vmatpush1.bf16.msra.mxu0 0
    %2227 = vmatprep.subr.bf16.mxu0 0
    %2228 = vmatpush1.bf16.msra.mxu0 0
    %2229 = vmatprep.mubr.bf16.mxu0 0
    %2230 = vmatmul.mubr.bf16.gmra.mrb[0].mxu0 %v2136
    %v2231 = vpop.f32.mrb[0].mxu0
    %v2232 = vadd.f32 0.0, %v2231
    %v2233 = vpop.f32.mrb[0].mxu0
    %v2234 = vpop.f32.mrb[0].mxu0
    %v2235 = vpop.f32.mrb[0].mxu0
    %2236 = vdwg.mxu0
    %v2237 = vadd.f32 %v2180, %v2232
    %v2238 = vxor.u32 %v2237, 2147483648
    %v2239 = vmul.f32 %v2238, 1.442695
    %v2240 = vpow.pop %v2239
    %v2241 = vadd.f32 %v2240, 1.0
    %v2242 = vrcp.pop %v2241
    %v2243 = vmul.f32 1.0, %v2242
    %v2244 = vtanh.pop %v2237
    %v2245 = vmul.f32 %v2243, %v2101
    %2247 = vrot.lane.b32.xlu0 %v2244, 64
    %v2248 = vpop.permute.xlu0 %2247
    %v2250 = vmul.f32 %v2243, %v2248
    %2252 = vrot.lane.b32.xlu0 %v2250, 32
    %v2253 = vpop.permute.xlu0 %2252
    %v2255 = vadd.f32 %v2245, %v2253
    %v2256 = vtanh.pop %v2255
    %2258 = vrot.lane.b32.xlu0 %v2256, 64
    %v2259 = vpop.permute.xlu0 %2258
    %v2261 = vmul.f32 %v2243, %v2259
    %v2262 = vpack.c.bf16 %v2261, %v2261
    %v2263 = vld [vmem:[%s6] sm:$0xf]
    %v2264 = vld [vmem:[%s6 + $0x4] sm:$0xf]
    %v2265 = vld [vmem:[%s6 + $0x8] sm:$0xf]
    %v2266 = vld [vmem:[%s6 + $0xc] sm:$0xf]
    %v2267 = vld [vmem:[%s7] sm:$0x1]
    %v2269 = vlaneseq
    %v2270 = vshrl.u32 %v2269, 7
    %v2271 = vsub.s32 0, %v2270
    %v2272 = vrot.slane %v2267, %v2271
    %2275 = vrot.lane.b32.xlu0 %v2262, 32
    %v2276 = vpop.permute.xlu0 %2275
    %v2281 = vunpack.c.l.b16 %v2263
    %v2282 = vunpack.c.l.b16 %v2264
    %v2283 = vunpack.c.l.b16 %v2265
    %v2284 = vunpack.c.l.b16 %v2266
    %v2285 = vpack.c.b16 %v2282, %v2281
    %v2286 = vpack.c.b16 %v2284, %v2283
    %v2290 = vsel %vm328, %v2276, 0
    %2292 = vmatprep.subr.bf16.mxu0 0
    %2293 = vmatpush1.bf16.msra.mxu0 %v2285
    %2294 = vmatprep.subr.bf16.mxu0 0
    %2295 = vmatpush1.bf16.msra.mxu0 %v2286
    %2296 = vmatprep.subr.bf16.mxu0 0
    %2297 = vmatpush1.bf16.msra.mxu0 0
    %2298 = vmatprep.subr.bf16.mxu0 0
    %2299 = vmatpush1.bf16.msra.mxu0 0
    %2300 = vmatprep.subr.bf16.mxu0 0
    %2301 = vmatpush1.bf16.msra.mxu0 0
    %2302 = vmatprep.subr.bf16.mxu0 0
    %2303 = vmatpush1.bf16.msra.mxu0 0
    %2304 = vmatprep.subr.bf16.mxu0 0
    %2305 = vmatpush1.bf16.msra.mxu0 0
    %2306 = vmatprep.subr.bf16.mxu0 0
    %2307 = vmatpush1.bf16.msra.mxu0 0
    %2308 = vmatprep.subr.bf16.mxu0 0
    %2309 = vmatpush1.bf16.msra.mxu0 0
    %2310 = vmatprep.subr.bf16.mxu0 0
    %2311 = vmatpush1.bf16.msra.mxu0 0
    %2312 = vmatprep.subr.bf16.mxu0 0
    %2313 = vmatpush1.bf16.msra.mxu0 0
    %2314 = vmatprep.subr.bf16.mxu0 0
    %2315 = vmatpush1.bf16.msra.mxu0 0
    %2316 = vmatprep.subr.bf16.mxu0 0
    %2317 = vmatpush1.bf16.msra.mxu0 0
    %2318 = vmatprep.subr.bf16.mxu0 0
    %2319 = vmatpush1.bf16.msra.mxu0 0
    %2320 = vmatprep.subr.bf16.mxu0 0
    %2321 = vmatpush1.bf16.msra.mxu0 0
    %2322 = vmatprep.subr.bf16.mxu0 0
    %2323 = vmatpush1.bf16.msra.mxu0 0
    %2324 = vmatprep.mubr.bf16.mxu0 0
    %2325 = vmatmul.mubr.bf16.gmra.mrb[0].mxu0 %v2290
    %v2326 = vpop.f32.mrb[0].mxu0
    %v2327 = vadd.f32 %v2272, %v2326
    %v2328 = vpop.f32.mrb[0].mxu0
    %v2329 = vpop.f32.mrb[0].mxu0
    %v2330 = vpop.f32.mrb[0].mxu0
    %2331 = vdwg.mxu0
    %s2332 = scalar_lea.vmem %s10, 32
    %2333 = vst [vmem:[%s2332] sm:$0xff] %v2327
    %v2334 = vld [vmem:[#allocation2 + $0x28] sm:$0xff]
    %v2335 = vld [vmem:[%s5] sm:$0xf]
    %v2336 = vld [vmem:[%s5 + $0x4] sm:$0xf]
    %v2337 = vld [vmem:[%s5 + $0x8] sm:$0xf]
    %v2338 = vld [vmem:[%s5 + $0xc] sm:$0xf]
    %v2343 = vunpack.c.l.b16 %v2335
    %v2344 = vunpack.c.l.b16 %v2336
    %v2345 = vunpack.c.l.b16 %v2337
    %v2346 = vunpack.c.l.b16 %v2338
    %v2347 = vpack.c.b16 %v2344, %v2343
    %v2348 = vpack.c.b16 %v2346, %v2345
    %2351 = vmatprep.subr.bf16.mxu0 0
    %2352 = vmatpush1.bf16.msra.mxu0 %v2347
    %2353 = vmatprep.subr.bf16.mxu0 0
    %2354 = vmatpush1.bf16.msra.mxu0 %v2348
    %2355 = vmatprep.subr.bf16.mxu0 0
    %2356 = vmatpush1.bf16.msra.mxu0 0
    %2357 = vmatprep.subr.bf16.mxu0 0
    %2358 = vmatpush1.bf16.msra.mxu0 0
    %2359 = vmatprep.subr.bf16.mxu0 0
    %2360 = vmatpush1.bf16.msra.mxu0 0
    %2361 = vmatprep.subr.bf16.mxu0 0
    %2362 = vmatpush1.bf16.msra.mxu0 0
    %2363 = vmatprep.subr.bf16.mxu0 0
    %2364 = vmatpush1.bf16.msra.mxu0 0
    %2365 = vmatprep.subr.bf16.mxu0 0
    %2366 = vmatpush1.bf16.msra.mxu0 0
    %2367 = vmatprep.subr.bf16.mxu0 0
    %2368 = vmatpush1.bf16.msra.mxu0 0
    %2369 = vmatprep.subr.bf16.mxu0 0
    %2370 = vmatpush1.bf16.msra.mxu0 0
    %2371 = vmatprep.subr.bf16.mxu0 0
    %2372 = vmatpush1.bf16.msra.mxu0 0
    %2373 = vmatprep.subr.bf16.mxu0 0
    %2374 = vmatpush1.bf16.msra.mxu0 0
    %2375 = vmatprep.subr.bf16.mxu0 0
    %2376 = vmatpush1.bf16.msra.mxu0 0
    %2377 = vmatprep.subr.bf16.mxu0 0
    %2378 = vmatpush1.bf16.msra.mxu0 0
    %2379 = vmatprep.subr.bf16.mxu0 0
    %2380 = vmatpush1.bf16.msra.mxu0 0
    %2381 = vmatprep.subr.bf16.mxu0 0
    %2382 = vmatpush1.bf16.msra.mxu0 0
    %2383 = vmatprep.mubr.bf16.mxu0 0
    %2384 = vmatmul.mubr.bf16.gmra.mrb[0].mxu0 %v2290
    %v2385 = vpop.f32.mrb[0].mxu0
    %v2386 = vadd.f32 0.0, %v2385
    %v2387 = vpop.f32.mrb[0].mxu0
    %v2388 = vpop.f32.mrb[0].mxu0
    %v2389 = vpop.f32.mrb[0].mxu0
    %2390 = vdwg.mxu0
    %v2391 = vadd.f32 %v2334, %v2386
    %v2392 = vxor.u32 %v2391, 2147483648
    %v2393 = vmul.f32 %v2392, 1.442695
    %v2394 = vpow.pop %v2393
    %v2395 = vadd.f32 %v2394, 1.0
    %v2396 = vrcp.pop %v2395
    %v2397 = vmul.f32 1.0, %v2396
    %v2398 = vtanh.pop %v2391
    %v2399 = vmul.f32 %v2397, %v2255
    %2401 = vrot.lane.b32.xlu0 %v2398, 64
    %v2402 = vpop.permute.xlu0 %2401
    %v2404 = vmul.f32 %v2397, %v2402
    %2406 = vrot.lane.b32.xlu0 %v2404, 32
    %v2407 = vpop.permute.xlu0 %2406
    %v2409 = vadd.f32 %v2399, %v2407
    %v2410 = vtanh.pop %v2409
    %2412 = vrot.lane.b32.xlu0 %v2410, 64
    %v2413 = vpop.permute.xlu0 %2412
    %v2415 = vmul.f32 %v2397, %v2413
    %v2416 = vpack.c.bf16 %v2415, %v2415
    %v2417 = vld [vmem:[%s6] sm:$0xf]
    %v2418 = vld [vmem:[%s6 + $0x4] sm:$0xf]
    %v2419 = vld [vmem:[%s6 + $0x8] sm:$0xf]
    %v2420 = vld [vmem:[%s6 + $0xc] sm:$0xf]
    %v2421 = vld [vmem:[%s7] sm:$0x1]
    %v2423 = vlaneseq
    %v2424 = vshrl.u32 %v2423, 7
    %v2425 = vsub.s32 0, %v2424
    %v2426 = vrot.slane %v2421, %v2425
    %2429 = vrot.lane.b32.xlu0 %v2416, 32
    %v2430 = vpop.permute.xlu0 %2429
    %v2435 = vunpack.c.l.b16 %v2417
    %v2436 = vunpack.c.l.b16 %v2418
    %v2437 = vunpack.c.l.b16 %v2419
    %v2438 = vunpack.c.l.b16 %v2420
    %v2439 = vpack.c.b16 %v2436, %v2435
    %v2440 = vpack.c.b16 %v2438, %v2437
    %v2444 = vsel %vm328, %v2430, 0
    %2446 = vmatprep.subr.bf16.mxu0 0
    %2447 = vmatpush1.bf16.msra.mxu0 %v2439
    %2448 = vmatprep.subr.bf16.mxu0 0
    %2449 = vmatpush1.bf16.msra.mxu0 %v2440
    %2450 = vmatprep.subr.bf16.mxu0 0
    %2451 = vmatpush1.bf16.msra.mxu0 0
    %2452 = vmatprep.subr.bf16.mxu0 0
    %2453 = vmatpush1.bf16.msra.mxu0 0
    %2454 = vmatprep.subr.bf16.mxu0 0
    %2455 = vmatpush1.bf16.msra.mxu0 0
    %2456 = vmatprep.subr.bf16.mxu0 0
    %2457 = vmatpush1.bf16.msra.mxu0 0
    %2458 = vmatprep.subr.bf16.mxu0 0
    %2459 = vmatpush1.bf16.msra.mxu0 0
    %2460 = vmatprep.subr.bf16.mxu0 0
    %2461 = vmatpush1.bf16.msra.mxu0 0
    %2462 = vmatprep.subr.bf16.mxu0 0
    %2463 = vmatpush1.bf16.msra.mxu0 0
    %2464 = vmatprep.subr.bf16.mxu0 0
    %2465 = vmatpush1.bf16.msra.mxu0 0
    %2466 = vmatprep.subr.bf16.mxu0 0
    %2467 = vmatpush1.bf16.msra.mxu0 0
    %2468 = vmatprep.subr.bf16.mxu0 0
    %2469 = vmatpush1.bf16.msra.mxu0 0
    %2470 = vmatprep.subr.bf16.mxu0 0
    %2471 = vmatpush1.bf16.msra.mxu0 0
    %2472 = vmatprep.subr.bf16.mxu0 0
    %2473 = vmatpush1.bf16.msra.mxu0 0
    %2474 = vmatprep.subr.bf16.mxu0 0
    %2475 = vmatpush1.bf16.msra.mxu0 0
    %2476 = vmatprep.subr.bf16.mxu0 0
    %2477 = vmatpush1.bf16.msra.mxu0 0
    %2478 = vmatprep.mubr.bf16.mxu0 0
    %2479 = vmatmul.mubr.bf16.gmra.mrb[0].mxu0 %v2444
    %v2480 = vpop.f32.mrb[0].mxu0
    %v2481 = vadd.f32 %v2426, %v2480
    %v2482 = vpop.f32.mrb[0].mxu0
    %v2483 = vpop.f32.mrb[0].mxu0
    %v2484 = vpop.f32.mrb[0].mxu0
    %2485 = vdwg.mxu0
    %s2486 = scalar_lea.vmem %s10, 40
    %2487 = vst [vmem:[%s2486] sm:$0xff] %v2481
    %v2488 = vld [vmem:[#allocation2 + $0x30] sm:$0xff]
    %v2489 = vld [vmem:[%s5] sm:$0xf]
    %v2490 = vld [vmem:[%s5 + $0x4] sm:$0xf]
    %v2491 = vld [vmem:[%s5 + $0x8] sm:$0xf]
    %v2492 = vld [vmem:[%s5 + $0xc] sm:$0xf]
    %v2497 = vunpack.c.l.b16 %v2489
    %v2498 = vunpack.c.l.b16 %v2490
    %v2499 = vunpack.c.l.b16 %v2491
    %v2500 = vunpack.c.l.b16 %v2492
    %v2501 = vpack.c.b16 %v2498, %v2497
    %v2502 = vpack.c.b16 %v2500, %v2499
    %2505 = vmatprep.subr.bf16.mxu0 0
    %2506 = vmatpush1.bf16.msra.mxu0 %v2501
    %2507 = vmatprep.subr.bf16.mxu0 0
    %2508 = vmatpush1.bf16.msra.mxu0 %v2502
    %2509 = vmatprep.subr.bf16.mxu0 0
    %2510 = vmatpush1.bf16.msra.mxu0 0
    %2511 = vmatprep.subr.bf16.mxu0 0
    %2512 = vmatpush1.bf16.msra.mxu0 0
    %2513 = vmatprep.subr.bf16.mxu0 0
    %2514 = vmatpush1.bf16.msra.mxu0 0
    %2515 = vmatprep.subr.bf16.mxu0 0
    %2516 = vmatpush1.bf16.msra.mxu0 0
    %2517 = vmatprep.subr.bf16.mxu0 0
    %2518 = vmatpush1.bf16.msra.mxu0 0
    %2519 = vmatprep.subr.bf16.mxu0 0
    %2520 = vmatpush1.bf16.msra.mxu0 0
    %2521 = vmatprep.subr.bf16.mxu0 0
    %2522 = vmatpush1.bf16.msra.mxu0 0
    %2523 = vmatprep.subr.bf16.mxu0 0
    %2524 = vmatpush1.bf16.msra.mxu0 0
    %2525 = vmatprep.subr.bf16.mxu0 0
    %2526 = vmatpush1.bf16.msra.mxu0 0
    %2527 = vmatprep.subr.bf16.mxu0 0
    %2528 = vmatpush1.bf16.msra.mxu0 0
    %2529 = vmatprep.subr.bf16.mxu0 0
    %2530 = vmatpush1.bf16.msra.mxu0 0
    %2531 = vmatprep.subr.bf16.mxu0 0
    %2532 = vmatpush1.bf16.msra.mxu0 0
    %2533 = vmatprep.subr.bf16.mxu0 0
    %2534 = vmatpush1.bf16.msra.mxu0 0
    %2535 = vmatprep.subr.bf16.mxu0 0
    %2536 = vmatpush1.bf16.msra.mxu0 0
    %2537 = vmatprep.mubr.bf16.mxu0 0
    %2538 = vmatmul.mubr.bf16.gmra.mrb[0].mxu0 %v2444
    %v2539 = vpop.f32.mrb[0].mxu0
    %v2540 = vadd.f32 0.0, %v2539
    %v2541 = vpop.f32.mrb[0].mxu0
    %v2542 = vpop.f32.mrb[0].mxu0
    %v2543 = vpop.f32.mrb[0].mxu0
    %2544 = vdwg.mxu0
    %v2545 = vadd.f32 %v2488, %v2540
    %v2546 = vxor.u32 %v2545, 2147483648
    %v2547 = vmul.f32 %v2546, 1.442695
    %v2548 = vpow.pop %v2547
    %v2549 = vadd.f32 %v2548, 1.0
    %v2550 = vrcp.pop %v2549
    %v2551 = vmul.f32 1.0, %v2550
    %v2552 = vtanh.pop %v2545
    %v2553 = vmul.f32 %v2551, %v2409
    %2555 = vrot.lane.b32.xlu0 %v2552, 64
    %v2556 = vpop.permute.xlu0 %2555
    %v2558 = vmul.f32 %v2551, %v2556
    %2560 = vrot.lane.b32.xlu0 %v2558, 32
    %v2561 = vpop.permute.xlu0 %2560
    %v2563 = vadd.f32 %v2553, %v2561
    %v2564 = vtanh.pop %v2563
    %2566 = vrot.lane.b32.xlu0 %v2564, 64
    %v2567 = vpop.permute.xlu0 %2566
    %v2569 = vmul.f32 %v2551, %v2567
    %v2570 = vpack.c.bf16 %v2569, %v2569
    %v2571 = vld [vmem:[%s6] sm:$0xf]
    %v2572 = vld [vmem:[%s6 + $0x4] sm:$0xf]
    %v2573 = vld [vmem:[%s6 + $0x8] sm:$0xf]
    %v2574 = vld [vmem:[%s6 + $0xc] sm:$0xf]
    %v2575 = vld [vmem:[%s7] sm:$0x1]
    %v2577 = vlaneseq
    %v2578 = vshrl.u32 %v2577, 7
    %v2579 = vsub.s32 0, %v2578
    %v2580 = vrot.slane %v2575, %v2579
    %2583 = vrot.lane.b32.xlu0 %v2570, 32
    %v2584 = vpop.permute.xlu0 %2583
    %v2589 = vunpack.c.l.b16 %v2571
    %v2590 = vunpack.c.l.b16 %v2572
    %v2591 = vunpack.c.l.b16 %v2573
    %v2592 = vunpack.c.l.b16 %v2574
    %v2593 = vpack.c.b16 %v2590, %v2589
    %v2594 = vpack.c.b16 %v2592, %v2591
    %v2598 = vsel %vm328, %v2584, 0
    %2600 = vmatprep.subr.bf16.mxu0 0
    %2601 = vmatpush1.bf16.msra.mxu0 %v2593
    %2602 = vmatprep.subr.bf16.mxu0 0
    %2603 = vmatpush1.bf16.msra.mxu0 %v2594
    %2604 = vmatprep.subr.bf16.mxu0 0
    %2605 = vmatpush1.bf16.msra.mxu0 0
    %2606 = vmatprep.subr.bf16.mxu0 0
    %2607 = vmatpush1.bf16.msra.mxu0 0
    %2608 = vmatprep.subr.bf16.mxu0 0
    %2609 = vmatpush1.bf16.msra.mxu0 0
    %2610 = vmatprep.subr.bf16.mxu0 0
    %2611 = vmatpush1.bf16.msra.mxu0 0
    %2612 = vmatprep.subr.bf16.mxu0 0
    %2613 = vmatpush1.bf16.msra.mxu0 0
    %2614 = vmatprep.subr.bf16.mxu0 0
    %2615 = vmatpush1.bf16.msra.mxu0 0
    %2616 = vmatprep.subr.bf16.mxu0 0
    %2617 = vmatpush1.bf16.msra.mxu0 0
    %2618 = vmatprep.subr.bf16.mxu0 0
    %2619 = vmatpush1.bf16.msra.mxu0 0
    %2620 = vmatprep.subr.bf16.mxu0 0
    %2621 = vmatpush1.bf16.msra.mxu0 0
    %2622 = vmatprep.subr.bf16.mxu0 0
    %2623 = vmatpush1.bf16.msra.mxu0 0
    %2624 = vmatprep.subr.bf16.mxu0 0
    %2625 = vmatpush1.bf16.msra.mxu0 0
    %2626 = vmatprep.subr.bf16.mxu0 0
    %2627 = vmatpush1.bf16.msra.mxu0 0
    %2628 = vmatprep.subr.bf16.mxu0 0
    %2629 = vmatpush1.bf16.msra.mxu0 0
    %2630 = vmatprep.subr.bf16.mxu0 0
    %2631 = vmatpush1.bf16.msra.mxu0 0
    %2632 = vmatprep.mubr.bf16.mxu0 0
    %2633 = vmatmul.mubr.bf16.gmra.mrb[0].mxu0 %v2598
    %v2634 = vpop.f32.mrb[0].mxu0
    %v2635 = vadd.f32 %v2580, %v2634
    %v2636 = vpop.f32.mrb[0].mxu0
    %v2637 = vpop.f32.mrb[0].mxu0
    %v2638 = vpop.f32.mrb[0].mxu0
    %2639 = vdwg.mxu0
    %s2640 = scalar_lea.vmem %s10, 48
    %2641 = vst [vmem:[%s2640] sm:$0xff] %v2635
    %v2642 = vld [vmem:[#allocation2 + $0x38] sm:$0xff]
    %v2643 = vld [vmem:[%s5] sm:$0xf]
    %v2644 = vld [vmem:[%s5 + $0x4] sm:$0xf]
    %v2645 = vld [vmem:[%s5 + $0x8] sm:$0xf]
    %v2646 = vld [vmem:[%s5 + $0xc] sm:$0xf]
    %v2651 = vunpack.c.l.b16 %v2643
    %v2652 = vunpack.c.l.b16 %v2644
    %v2653 = vunpack.c.l.b16 %v2645
    %v2654 = vunpack.c.l.b16 %v2646
    %v2655 = vpack.c.b16 %v2652, %v2651
    %v2656 = vpack.c.b16 %v2654, %v2653
    %2659 = vmatprep.subr.bf16.mxu0 0
    %2660 = vmatpush1.bf16.msra.mxu0 %v2655
    %2661 = vmatprep.subr.bf16.mxu0 0
    %2662 = vmatpush1.bf16.msra.mxu0 %v2656
    %2663 = vmatprep.subr.bf16.mxu0 0
    %2664 = vmatpush1.bf16.msra.mxu0 0
    %2665 = vmatprep.subr.bf16.mxu0 0
    %2666 = vmatpush1.bf16.msra.mxu0 0
    %2667 = vmatprep.subr.bf16.mxu0 0
    %2668 = vmatpush1.bf16.msra.mxu0 0
    %2669 = vmatprep.subr.bf16.mxu0 0
    %2670 = vmatpush1.bf16.msra.mxu0 0
    %2671 = vmatprep.subr.bf16.mxu0 0
    %2672 = vmatpush1.bf16.msra.mxu0 0
    %2673 = vmatprep.subr.bf16.mxu0 0
    %2674 = vmatpush1.bf16.msra.mxu0 0
    %2675 = vmatprep.subr.bf16.mxu0 0
    %2676 = vmatpush1.bf16.msra.mxu0 0
    %2677 = vmatprep.subr.bf16.mxu0 0
    %2678 = vmatpush1.bf16.msra.mxu0 0
    %2679 = vmatprep.subr.bf16.mxu0 0
    %2680 = vmatpush1.bf16.msra.mxu0 0
    %2681 = vmatprep.subr.bf16.mxu0 0
    %2682 = vmatpush1.bf16.msra.mxu0 0
    %2683 = vmatprep.subr.bf16.mxu0 0
    %2684 = vmatpush1.bf16.msra.mxu0 0
    %2685 = vmatprep.subr.bf16.mxu0 0
    %2686 = vmatpush1.bf16.msra.mxu0 0
    %2687 = vmatprep.subr.bf16.mxu0 0
    %2688 = vmatpush1.bf16.msra.mxu0 0
    %2689 = vmatprep.subr.bf16.mxu0 0
    %2690 = vmatpush1.bf16.msra.mxu0 0
    %2691 = vmatprep.mubr.bf16.mxu0 0
    %2692 = vmatmul.mubr.bf16.gmra.mrb[0].mxu0 %v2598
    %v2693 = vpop.f32.mrb[0].mxu0
    %v2694 = vadd.f32 0.0, %v2693
    %v2695 = vpop.f32.mrb[0].mxu0
    %v2696 = vpop.f32.mrb[0].mxu0
    %v2697 = vpop.f32.mrb[0].mxu0
    %2698 = vdwg.mxu0
    %v2699 = vadd.f32 %v2642, %v2694
    %v2700 = vxor.u32 %v2699, 2147483648
    %v2701 = vmul.f32 %v2700, 1.442695
    %v2702 = vpow.pop %v2701
    %v2703 = vadd.f32 %v2702, 1.0
    %v2704 = vrcp.pop %v2703
    %v2705 = vmul.f32 1.0, %v2704
    %v2706 = vtanh.pop %v2699
    %v2707 = vmul.f32 %v2705, %v2563
    %2709 = vrot.lane.b32.xlu0 %v2706, 64
    %v2710 = vpop.permute.xlu0 %2709
    %v2712 = vmul.f32 %v2705, %v2710
    %2714 = vrot.lane.b32.xlu0 %v2712, 32
    %v2715 = vpop.permute.xlu0 %2714
    %v2717 = vadd.f32 %v2707, %v2715
    %v2718 = vtanh.pop %v2717
    %2720 = vrot.lane.b32.xlu0 %v2718, 64
    %v2721 = vpop.permute.xlu0 %2720
    %v2723 = vmul.f32 %v2705, %v2721
    %v2724 = vpack.c.bf16 %v2723, %v2723
    %v2725 = vld [vmem:[%s6] sm:$0xf]
    %v2726 = vld [vmem:[%s6 + $0x4] sm:$0xf]
    %v2727 = vld [vmem:[%s6 + $0x8] sm:$0xf]
    %v2728 = vld [vmem:[%s6 + $0xc] sm:$0xf]
    %v2729 = vld [vmem:[%s7] sm:$0x1]
    %v2731 = vlaneseq
    %v2732 = vshrl.u32 %v2731, 7
    %v2733 = vsub.s32 0, %v2732
    %v2734 = vrot.slane %v2729, %v2733
    %2737 = vrot.lane.b32.xlu0 %v2724, 32
    %v2738 = vpop.permute.xlu0 %2737
    %v2743 = vunpack.c.l.b16 %v2725
    %v2744 = vunpack.c.l.b16 %v2726
    %v2745 = vunpack.c.l.b16 %v2727
    %v2746 = vunpack.c.l.b16 %v2728
    %v2747 = vpack.c.b16 %v2744, %v2743
    %v2748 = vpack.c.b16 %v2746, %v2745
    %v2752 = vsel %vm328, %v2738, 0
    %2754 = vmatprep.subr.bf16.mxu0 0
    %2755 = vmatpush1.bf16.msra.mxu0 %v2747
    %2756 = vmatprep.subr.bf16.mxu0 0
    %2757 = vmatpush1.bf16.msra.mxu0 %v2748
    %2758 = vmatprep.subr.bf16.mxu0 0
    %2759 = vmatpush1.bf16.msra.mxu0 0
    %2760 = vmatprep.subr.bf16.mxu0 0
    %2761 = vmatpush1.bf16.msra.mxu0 0
    %2762 = vmatprep.subr.bf16.mxu0 0
    %2763 = vmatpush1.bf16.msra.mxu0 0
    %2764 = vmatprep.subr.bf16.mxu0 0
    %2765 = vmatpush1.bf16.msra.mxu0 0
    %2766 = vmatprep.subr.bf16.mxu0 0
    %2767 = vmatpush1.bf16.msra.mxu0 0
    %2768 = vmatprep.subr.bf16.mxu0 0
    %2769 = vmatpush1.bf16.msra.mxu0 0
    %2770 = vmatprep.subr.bf16.mxu0 0
    %2771 = vmatpush1.bf16.msra.mxu0 0
    %2772 = vmatprep.subr.bf16.mxu0 0
    %2773 = vmatpush1.bf16.msra.mxu0 0
    %2774 = vmatprep.subr.bf16.mxu0 0
    %2775 = vmatpush1.bf16.msra.mxu0 0
    %2776 = vmatprep.subr.bf16.mxu0 0
    %2777 = vmatpush1.bf16.msra.mxu0 0
    %2778 = vmatprep.subr.bf16.mxu0 0
    %2779 = vmatpush1.bf16.msra.mxu0 0
    %2780 = vmatprep.subr.bf16.mxu0 0
    %2781 = vmatpush1.bf16.msra.mxu0 0
    %2782 = vmatprep.subr.bf16.mxu0 0
    %2783 = vmatpush1.bf16.msra.mxu0 0
    %2784 = vmatprep.subr.bf16.mxu0 0
    %2785 = vmatpush1.bf16.msra.mxu0 0
    %2786 = vmatprep.mubr.bf16.mxu0 0
    %2787 = vmatmul.mubr.bf16.gmra.mrb[0].mxu0 %v2752
    %v2788 = vpop.f32.mrb[0].mxu0
    %v2789 = vadd.f32 %v2734, %v2788
    %v2790 = vpop.f32.mrb[0].mxu0
    %v2791 = vpop.f32.mrb[0].mxu0
    %v2792 = vpop.f32.mrb[0].mxu0
    %2793 = vdwg.mxu0
    %s2794 = scalar_lea.vmem %s10, 56
    %2795 = vst [vmem:[%s2794] sm:$0xff] %v2789
    %2797 = vrot.lane.b32.xlu0 %v2723, 32
    %v2798 = vpop.permute.xlu0 %2797
    %s2800 = scalar_lea.vmem %s11, 8
    %2801 = vst.msk [vmem:[%s2800] sm:$0xff] %vm328, %v2798
    %2803 = vrot.lane.b32.xlu0 %v2717, 96
    %v2804 = vpop.permute.xlu0 %2803
    %s2806 = scalar_lea.vmem %s12, 8
    %2807 = vst.msk [vmem:[%s2806] sm:$0xff] %vm328, %v2804
    // Predicated region
    $region46: #{text_rnn_forward.1} parent=1 // pred_check
      _
    $region47: #{text_rnn_forward.1} parent=1 // pred_check_branch
      %2809 = sbr.rel (0) target = $region49
    $region48: #{text_rnn_forward.1} parent=1 // pred_region
      _
    $region49: #{text_rnn_forward.1} parent=1 // pred_fallthru
      _
    // Predicated region
    $region50: #{text_rnn_forward.1} parent=1 // pred_check
      _
    $region51: #{text_rnn_forward.1} parent=1 // pred_check_branch
      %2811 = sbr.rel (0) target = $region53
    $region52: #{text_rnn_forward.1} parent=1 // pred_region
      _
    $region53: #{text_rnn_forward.1} parent=1 // pred_fallthru
      _
    // Predicated region
    $region54: #{text_rnn_forward.1} parent=1 // pred_check
      _
    $region55: #{text_rnn_forward.1} parent=1 // pred_check_branch
      %2813 = sbr.rel (0) target = $region57
    $region56: #{text_rnn_forward.1} parent=1 // pred_region
      _
    $region57: #{text_rnn_forward.1} parent=1 // pred_fallthru
      _
    // Predicated region
    $region58: #{text_rnn_forward.1} parent=1 // pred_check
      _
    $region59: #{text_rnn_forward.1} parent=1 // pred_check_branch
      %2815 = sbr.rel (0) target = $region61
    $region60: #{text_rnn_forward.1} parent=1 // pred_region
      _
    $region61: #{text_rnn_forward.1} parent=1 // pred_fallthru
      _
    // Predicated region
    $region62: #{text_rnn_forward.1} parent=1 // pred_check
      _
    $region63: #{text_rnn_forward.1} parent=1 // pred_check_branch
      %2817 = sbr.rel (0) target = $region65
    $region64: #{text_rnn_forward.1} parent=1 // pred_region
      _
    $region65: #{text_rnn_forward.1} parent=1 // pred_fallthru
      _
    // Predicated region
    $region66: #{text_rnn_forward.1} parent=1 // pred_check
      _
    $region67: #{text_rnn_forward.1} parent=1 // pred_check_branch
      %2819 = sbr.rel (0) target = $region69
    $region68: #{text_rnn_forward.1} parent=1 // pred_region
      _
    $region69: #{text_rnn_forward.1} parent=1 // pred_fallthru
      _
    %2820 = vsyncpa [#allocation4], 1

</llo_original>
